<compile_context>
chip_gen: v7x
topology: tpu7x:2x2x1
jax: 0.10.0
libtpu: 0.0.40
codegen_flags: <defaults>
</compile_context>

<pallas_src>
import functools
import math

import jax
import jax.numpy as jnp
import numpy as np
from jax import lax
from jax.experimental import pallas as pl
from jax.experimental.pallas import tpu as pltpu

LEAKY_SLOPE = 0.01  # PyTorch F.leaky_relu default negative_slope


def _gcn_kernel(v_ref, avv_ref, s_ref, ass_ref,
                wvv_ref, wss_ref, wvs_ref, wsv_ref,
                wgv_ref, bgv_ref, wgs_ref, bgs_ref,
                v_out_ref, s_out_ref, *, approx_recip):
    tb, nv, d = v_ref.shape
    ns = s_ref.shape[1]
    cdt = wvv_ref.dtype          # MXU input dtype (bf16 fast path or f32)
    f32 = jnp.float32

    def lrelu(x):
        return jnp.where(x >= 0, x, LEAKY_SLOPE * x)

    def softmax(x, axis):        # x is f32
        m = jnp.max(x, axis=axis, keepdims=True)
        e = jnp.exp(x - m)
        den = jnp.sum(e, axis=axis, keepdims=True)
        inv = pl.reciprocal(den, approx=True) if approx_recip else 1.0 / den
        return e * inv

    def bdot(a, b, a_contract, b_contract):   # batched over axis 0, f32 accum
        return lax.dot_general(
            a, b,
            dimension_numbers=(((a_contract,), (b_contract,)), ((0,), (0,))),
            preferred_element_type=f32)

    def mm(a, w):                 # folded-batch weight matmul, f32 accum
        return jnp.dot(a.astype(cdt), w, preferred_element_type=f32)

    v = v_ref[...]        # (TB, Nv, D)   cdt
    s = s_ref[...]        # (TB, Ns, D)   cdt
    avv = avv_ref[...]    # (TB, Nv, Nv)  cdt
    ass = ass_ref[...]    # (TB, Ns, Ns)  cdt

    # Cross scores: contract the D axes directly (no s.T materialization).
    vs = bdot(v, s, 2, 2)                               # (TB, Nv, Ns) f32
    avs = softmax(vs, axis=-1).astype(cdt)              # rows: softmax over Ns
    asv_cols = softmax(vs, axis=-2).astype(cdt)         # cols: softmax over Nv (= asv^T)

    # Self aggregation (per-batch adjacency), then weight matmuls with the
    # batch folded into the MXU M dimension.
    av = bdot(avv, v, 2, 1)                             # (TB, Nv, D) f32
    as_ = bdot(ass, s, 2, 1)                            # (TB, Ns, D) f32
    v2 = lrelu(mm(av.reshape(tb * nv, d), wvv_ref[...]))    # (TB*Nv, D) f32
    s2 = lrelu(mm(as_.reshape(tb * ns, d), wss_ref[...]))   # (TB*Ns, D) f32

    # s -> v message + gated fusion (gate math in f32).
    hv_pre = bdot(avs, s2.reshape(tb, ns, d).astype(cdt), 2, 1)   # (TB, Nv, D)
    hv = mm(hv_pre.reshape(tb * nv, d), wsv_ref[...])             # (TB*Nv, D) f32
    zv = jax.nn.sigmoid(mm(v2, wgv_ref[0:d, :]) + mm(hv, wgv_ref[d:2 * d, :])
                        + bgv_ref[...].astype(f32))
    v3 = lrelu(zv * v2 + (1.0 - zv) * hv)                         # (TB*Nv, D) f32

    # v -> s message (uses the updated v).  The transposed attention
    # contraction is done by the MXU: hs_pre[b,m,:] = sum_n asv_cols[b,n,m]*v3[b,n,:]
    hs_pre = bdot(asv_cols, v3.reshape(tb, nv, d).astype(cdt), 1, 1)  # (TB, Ns, D)
    hs = mm(hs_pre.reshape(tb * ns, d), wvs_ref[...])                 # (TB*Ns, D) f32
    zs = jax.nn.sigmoid(mm(s2, wgs_ref[0:d, :]) + mm(hs, wgs_ref[d:2 * d, :])
                        + bgs_ref[...].astype(f32))
    s3 = lrelu(zs * s2 + (1.0 - zs) * hs)                             # (TB*Ns, D) f32

    v_out_ref[...] = v3.astype(v_out_ref.dtype)   # (TB*Nv, D) block
    s_out_ref[...] = s3.astype(s_out_ref.dtype)   # (TB*Ns, D) block


def _pick_block_b(batch, rows):
    """Largest batch block giving <=~512 folded MXU rows, keeping grid >= 2."""
    target = max(1, 512 // max(rows, 1))
    divisors = [t for t in range(1, batch + 1) if batch % t == 0 and t <= target]
    multi = [t for t in divisors if batch // t >= 2]
    if multi:
        return max(multi)
    return max(divisors) if divisors else 1


@functools.partial(jax.jit, static_argnames=("block_b", "compute_dtype"))
def graph_convolution(v, avv, s, ass, params, *, block_b=None,
                      compute_dtype=jnp.bfloat16):
    """Pallas forward of GraphConvolution.

    v: (B, Nv, D), avv: (B, Nv, Nv), s: (B, Ns, D), ass: (B, Ns, Ns)
    params: dict of transposed weights / biases (see init_params).
    """
    B, Nv, D = v.shape
    _, Ns, _ = s.shape
    if block_b is None:
        block_b = _pick_block_b(B, Nv)
    if B % block_b != 0:
        raise ValueError(f"batch {B} not divisible by block_b {block_b}")
    tb = block_b
    cdt = compute_dtype
    approx = np.dtype(cdt) == np.dtype(jnp.bfloat16)

    cast = lambda x: x.astype(cdt)
    inputs = (cast(v), cast(avv), cast(s), cast(ass),
              cast(params["wvv_t"]), cast(params["wss_t"]),
              cast(params["wvs_t"]), cast(params["wsv_t"]),
              cast(params["wgatev_t"]), params["bgatev"].astype(jnp.float32),
              cast(params["wgates_t"]), params["bgates"].astype(jnp.float32))

    def bspec(n, dim):
        return pl.BlockSpec((tb, n, dim), lambda b: (b, 0, 0))

    def wspec(shape):
        # Constant index_map: the weight block never changes across the grid,
        # so Pallas only DMAs it once.  (On v7x at large D one could also pin
        # it single-buffered / stage into scratch to halve its VMEM footprint.)
        return pl.BlockSpec(shape, lambda b: (0,) * len(shape))

    in_specs = [
        bspec(Nv, D), bspec(Nv, Nv), bspec(Ns, D), bspec(Ns, Ns),
        wspec((D, D)), wspec((D, D)), wspec((D, D)), wspec((D, D)),
        wspec((2 * D, D)), wspec((1, D)),
        wspec((2 * D, D)), wspec((1, D)),
    ]
    # Outputs flattened over (B, Nv) so each grid step writes one contiguous
    # (TB*Nv, D) slab; reshaped back to (B, Nv, D) outside the kernel.
    out_specs = [
        pl.BlockSpec((tb * Nv, D), lambda b: (b, 0)),
        pl.BlockSpec((tb * Ns, D), lambda b: (b, 0)),
    ]
    out_shape = [jax.ShapeDtypeStruct((B * Nv, D), jnp.float32),
                 jax.ShapeDtypeStruct((B * Ns, D), jnp.float32)]

    kernel = functools.partial(_gcn_kernel, approx_recip=approx)
    v_flat, s_flat = pl.pallas_call(
        kernel,
        grid_spec=pltpu.PrefetchScalarGridSpec(
            num_scalar_prefetch=0,
            grid=(B // tb,),
            in_specs=in_specs,
            out_specs=out_specs,
        ),
        out_shape=out_shape,
        compiler_params=pltpu.CompilerParams(
            dimension_semantics=("parallel",),
            vmem_limit_bytes=32 * 1024 * 1024,
        ),
    )(*inputs)
    return v_flat.reshape(B, Nv, D), s_flat.reshape(B, Ns, D)


def init_params(key, node_dim):
    """Deterministic synthetic parameters (shapes match the nn.Module).

    PyTorch nn.Linear stores weight as (out, in); we keep the transposed
    (in, out) form so the kernel computes x @ W^T as x @ w_t.  Gate weights
    stay fused as (2D, D): rows [0:D] multiply the first concat half (v / s),
    rows [D:2D] the message half (hv / hs).
    """
    D = node_dim
    ks = jax.random.split(key, 8)
    sd, s2d = 1.0 / math.sqrt(D), 1.0 / math.sqrt(2 * D)

    def u(k, shape, scale):
        return jax.random.uniform(k, shape, jnp.float32, -scale, scale)

    wvv = u(ks[0], (D, D), sd)
    wss = u(ks[1], (D, D), sd)
    wvs = u(ks[2], (D, D), sd)
    wsv = u(ks[3], (D, D), sd)
    wgatev = u(ks[4], (D, 2 * D), s2d)   # PyTorch layout (out, in)
    wgates = u(ks[5], (D, 2 * D), s2d)
    bgatev = u(ks[6], (1, D), s2d)
    bgates = u(ks[7], (1, D), s2d)
    return {
        "wvv_t": wvv.T, "wss_t": wss.T, "wvs_t": wvs.T, "wsv_t": wsv.T,
        "wgatev_t": wgatev.T, "wgates_t": wgates.T,   # (2D, D)
        "bgatev": bgatev, "bgates": bgates,
    }


def _reference(v, avv, s, ass, p):
    """Pure-JAX f32 reference mirroring the PyTorch forward."""
    lrelu = lambda x: jnp.where(x >= 0, x, LEAKY_SLOPE * x)
    vs = jnp.einsum("bnd,bmd->bnm", v, s)
    avs = jax.nn.softmax(vs, axis=-1)
    asv = jax.nn.softmax(jnp.swapaxes(vs, 2, 1), axis=-1)
    v2 = lrelu((avv @ v) @ p["wvv_t"])
    s2 = lrelu((ass @ s) @ p["wss_t"])
    hv = (avs @ s2) @ p["wsv_t"]
    zv = jax.nn.sigmoid(jnp.concatenate([v2, hv], -1) @ p["wgatev_t"] + p["bgatev"])
    v3 = lrelu(zv * v2 + (1 - zv) * hv)
    hs = (asv @ v3) @ p["wvs_t"]
    zs = jax.nn.sigmoid(jnp.concatenate([s2, hs], -1) @ p["wgates_t"] + p["bgates"])
    s3 = lrelu(zs * s2 + (1 - zs) * hs)
    return v3, s3


if __name__ == "__main__":
    B, Nv, Ns, D = 16, 16, 8, 32
    key = jax.random.PRNGKey(0)
    kp, kv, ks_, kavv, kass = jax.random.split(key, 5)

    params = init_params(kp, D)
    v = jax.random.normal(kv, (B, Nv, D), jnp.float32)
    s = jax.random.normal(ks_, (B, Ns, D), jnp.float32)
    # adjacency-like mixing matrices (row-normalized, like attention)
    avv = jax.nn.softmax(jax.random.normal(kavv, (B, Nv, Nv), jnp.float32), -1)
    ass = jax.nn.softmax(jax.random.normal(kass, (B, Ns, Ns), jnp.float32), -1)

    v_ref, s_ref = _reference(v, avv, s, ass, params)

    # f32 parity path (exact module semantics).
    v32, s32 = graph_convolution(v, avv, s, ass, params,
                                 block_b=8, compute_dtype=jnp.float32)
    jax.block_until_ready((v32, s32))
    assert jnp.allclose(v32, v_ref, atol=1e-4, rtol=1e-4), "f32 v mismatch"
    assert jnp.allclose(s32, s_ref, atol=1e-4, rtol=1e-4), "f32 s mismatch"

    # bf16-MXU fast path (default): bf16 matmul inputs, f32 accumulation and
    # f32 softmax / sigmoid / gating.
    vbf, sbf = graph_convolution(v, avv, s, ass, params, block_b=8)
    jax.block_until_ready((vbf, sbf))
    assert jnp.allclose(vbf, v_ref, atol=3e-2, rtol=3e-2), "bf16 v mismatch"
    assert jnp.allclose(sbf, s_ref, atol=3e-2, rtol=3e-2), "bf16 s mismatch"

    print("KERNEL_OK")
</pallas_src>

<mosaic_0001>
module attributes {stable_mosaic.version = 11 : i64} {
  func.func @_gcn_kernel(%arg0: i32, %arg1: memref<8x16x32xf32, #tpu.memory_space<vmem>>, %arg2: memref<8x16x16xf32, #tpu.memory_space<vmem>>, %arg3: memref<8x8x32xf32, #tpu.memory_space<vmem>>, %arg4: memref<8x8x8xf32, #tpu.memory_space<vmem>>, %arg5: memref<32x32xf32, #tpu.memory_space<vmem>>, %arg6: memref<32x32xf32, #tpu.memory_space<vmem>>, %arg7: memref<32x32xf32, #tpu.memory_space<vmem>>, %arg8: memref<32x32xf32, #tpu.memory_space<vmem>>, %arg9: memref<64x32xf32, #tpu.memory_space<vmem>>, %arg10: memref<1x32xf32, #tpu.memory_space<vmem>>, %arg11: memref<64x32xf32, #tpu.memory_space<vmem>>, %arg12: memref<1x32xf32, #tpu.memory_space<vmem>>, %arg13: memref<128x32xf32, #tpu.memory_space<vmem>>, %arg14: memref<64x32xf32, #tpu.memory_space<vmem>>) attributes {dimension_semantics = [#tpu.dimension_semantics<parallel>], iteration_bounds = array<i64: 2>, scalar_prefetch = 0 : i64, scratch_operands = 0 : i64, tpu.core_type = #tpu.core_type<tc>, window_params = [{transform_indices = @transform_0, window_bounds = array<i64: 8, 16, 32>}, {transform_indices = @transform_1, window_bounds = array<i64: 8, 16, 16>}, {transform_indices = @transform_2, window_bounds = array<i64: 8, 8, 32>}, {transform_indices = @transform_3, window_bounds = array<i64: 8, 8, 8>}, {pipeline_mode = #tpu.pipeline_mode<synchronous>, transform_indices = @transform_4, window_bounds = array<i64: 32, 32>}, {pipeline_mode = #tpu.pipeline_mode<synchronous>, transform_indices = @transform_5, window_bounds = array<i64: 32, 32>}, {pipeline_mode = #tpu.pipeline_mode<synchronous>, transform_indices = @transform_6, window_bounds = array<i64: 32, 32>}, {pipeline_mode = #tpu.pipeline_mode<synchronous>, transform_indices = @transform_7, window_bounds = array<i64: 32, 32>}, {pipeline_mode = #tpu.pipeline_mode<synchronous>, transform_indices = @transform_8, window_bounds = array<i64: 64, 32>}, {pipeline_mode = #tpu.pipeline_mode<synchronous>, transform_indices = @transform_9, window_bounds = array<i64: 1, 32>}, {pipeline_mode = #tpu.pipeline_mode<synchronous>, transform_indices = @transform_10, window_bounds = array<i64: 64, 32>}, {pipeline_mode = #tpu.pipeline_mode<synchronous>, transform_indices = @transform_11, window_bounds = array<i64: 1, 32>}, {transform_indices = @transform_12, window_bounds = array<i64: 128, 32>}, {transform_indices = @transform_13, window_bounds = array<i64: 64, 32>}]} {
    %c0 = arith.constant 0 : index
    %c0_0 = arith.constant 0 : index
    %c0_1 = arith.constant 0 : index
    %0 = vector.load %arg1[%c0, %c0_0, %c0_1] : memref<8x16x32xf32, #tpu.memory_space<vmem>>, vector<8x16x32xf32>
    %c0_2 = arith.constant 0 : index
    %c0_3 = arith.constant 0 : index
    %c0_4 = arith.constant 0 : index
    %1 = vector.load %arg3[%c0_2, %c0_3, %c0_4] : memref<8x8x32xf32, #tpu.memory_space<vmem>>, vector<8x8x32xf32>
    %c0_5 = arith.constant 0 : index
    %c0_6 = arith.constant 0 : index
    %c0_7 = arith.constant 0 : index
    %2 = vector.load %arg2[%c0_5, %c0_6, %c0_7] : memref<8x16x16xf32, #tpu.memory_space<vmem>>, vector<8x16x16xf32>
    %c0_8 = arith.constant 0 : index
    %c0_9 = arith.constant 0 : index
    %c0_10 = arith.constant 0 : index
    %3 = vector.load %arg4[%c0_8, %c0_9, %c0_10] : memref<8x8x8xf32, #tpu.memory_space<vmem>>, vector<8x8x8xf32>
    %cst = arith.constant dense<0.000000e+00> : vector<8x16x8xf32>
    %4 = tpu.matmul %0, %1, %cst {dimension_numbers = #tpu.dot_dimension_numbers<[2], [2], [1], [1], [0, 0, 0, 1, 1, 1], [0], [0]>} : vector<8x16x32xf32>, vector<8x8x32xf32>, vector<8x16x8xf32> -> vector<8x16x8xf32>
    %cst_11 = arith.constant dense<0xFF800000> : vector<8x16xf32>
    %5 = vector.multi_reduction <maximumf>, %4, %cst_11 [2] : vector<8x16x8xf32> to vector<8x16xf32>
    %6 = vector.shape_cast %5 : vector<8x16xf32> to vector<8x16x1xf32>
    %7 = vector.broadcast %6 : vector<8x16x1xf32> to vector<8x16x8xf32>
    %8 = arith.subf %4, %7 : vector<8x16x8xf32>
    %9 = math.exp %8 : vector<8x16x8xf32>
    %cst_12 = arith.constant dense<0.000000e+00> : vector<8x16xf32>
    %10 = vector.multi_reduction <add>, %9, %cst_12 [2] : vector<8x16x8xf32> to vector<8x16xf32>
    %11 = vector.shape_cast %10 : vector<8x16xf32> to vector<8x16x1xf32>
    %cst_13 = arith.constant 1.000000e+00 : f32
    %12 = vector.broadcast %cst_13 : f32 to vector<8x16x1xf32>
    %13 = arith.divf %12, %11 : vector<8x16x1xf32>
    %14 = vector.broadcast %13 : vector<8x16x1xf32> to vector<8x16x8xf32>
    %15 = arith.mulf %9, %14 : vector<8x16x8xf32>
    %cst_14 = arith.constant dense<0xFF800000> : vector<8x8xf32>
    %16 = vector.multi_reduction <maximumf>, %4, %cst_14 [1] : vector<8x16x8xf32> to vector<8x8xf32>
    %17 = vector.shape_cast %16 : vector<8x8xf32> to vector<8x1x8xf32>
    %18 = vector.broadcast %17 : vector<8x1x8xf32> to vector<8x16x8xf32>
    %19 = arith.subf %4, %18 : vector<8x16x8xf32>
    %20 = math.exp %19 : vector<8x16x8xf32>
    %cst_15 = arith.constant dense<0.000000e+00> : vector<8x8xf32>
    %21 = vector.multi_reduction <add>, %20, %cst_15 [1] : vector<8x16x8xf32> to vector<8x8xf32>
    %22 = vector.shape_cast %21 : vector<8x8xf32> to vector<8x1x8xf32>
    %cst_16 = arith.constant 1.000000e+00 : f32
    %23 = vector.broadcast %cst_16 : f32 to vector<8x1x8xf32>
    %24 = arith.divf %23, %22 : vector<8x1x8xf32>
    %25 = vector.broadcast %24 : vector<8x1x8xf32> to vector<8x16x8xf32>
    %26 = arith.mulf %20, %25 : vector<8x16x8xf32>
    %cst_17 = arith.constant dense<0.000000e+00> : vector<8x16x32xf32>
    %27 = tpu.matmul %2, %0, %cst_17 {dimension_numbers = #tpu.dot_dimension_numbers<[2], [1], [1], [2], [0, 0, 0, 1, 1, 2], [0], [0]>} : vector<8x16x16xf32>, vector<8x16x32xf32>, vector<8x16x32xf32> -> vector<8x16x32xf32>
    %cst_18 = arith.constant dense<0.000000e+00> : vector<8x8x32xf32>
    %28 = tpu.matmul %3, %1, %cst_18 {dimension_numbers = #tpu.dot_dimension_numbers<[2], [1], [1], [2], [0, 0, 0, 1, 1, 2], [0], [0]>} : vector<8x8x8xf32>, vector<8x8x32xf32>, vector<8x8x32xf32> -> vector<8x8x32xf32>
    %29 = vector.shape_cast %27 : vector<8x16x32xf32> to vector<128x32xf32>
    %c0_19 = arith.constant 0 : index
    %c0_20 = arith.constant 0 : index
    %30 = vector.load %arg5[%c0_19, %c0_20] : memref<32x32xf32, #tpu.memory_space<vmem>>, vector<32x32xf32>
    %cst_21 = arith.constant dense<0.000000e+00> : vector<128x32xf32>
    %31 = tpu.matmul %29, %30, %cst_21 {dimension_numbers = #tpu.dot_dimension_numbers<[1], [0], [0], [1], [0, 0, 1, 1], [], []>} : vector<128x32xf32>, vector<32x32xf32>, vector<128x32xf32> -> vector<128x32xf32>
    %cst_22 = arith.constant 0.000000e+00 : f32
    %32 = vector.broadcast %cst_22 : f32 to vector<128x32xf32>
    %33 = arith.cmpf oge, %31, %32 : vector<128x32xf32>
    %cst_23 = arith.constant 0.00999999977 : f32
    %34 = vector.broadcast %cst_23 : f32 to vector<128x32xf32>
    %35 = arith.mulf %34, %31 : vector<128x32xf32>
    %36 = arith.select %33, %31, %35 : vector<128x32xi1>, vector<128x32xf32>
    %37 = vector.shape_cast %28 : vector<8x8x32xf32> to vector<64x32xf32>
    %c0_24 = arith.constant 0 : index
    %c0_25 = arith.constant 0 : index
    %38 = vector.load %arg6[%c0_24, %c0_25] : memref<32x32xf32, #tpu.memory_space<vmem>>, vector<32x32xf32>
    %cst_26 = arith.constant dense<0.000000e+00> : vector<64x32xf32>
    %39 = tpu.matmul %37, %38, %cst_26 {dimension_numbers = #tpu.dot_dimension_numbers<[1], [0], [0], [1], [0, 0, 1, 1], [], []>} : vector<64x32xf32>, vector<32x32xf32>, vector<64x32xf32> -> vector<64x32xf32>
    %cst_27 = arith.constant 0.000000e+00 : f32
    %40 = vector.broadcast %cst_27 : f32 to vector<64x32xf32>
    %41 = arith.cmpf oge, %39, %40 : vector<64x32xf32>
    %cst_28 = arith.constant 0.00999999977 : f32
    %42 = vector.broadcast %cst_28 : f32 to vector<64x32xf32>
    %43 = arith.mulf %42, %39 : vector<64x32xf32>
    %44 = arith.select %41, %39, %43 : vector<64x32xi1>, vector<64x32xf32>
    %45 = vector.shape_cast %44 : vector<64x32xf32> to vector<8x8x32xf32>
    %cst_29 = arith.constant dense<0.000000e+00> : vector<8x16x32xf32>
    %46 = tpu.matmul %15, %45, %cst_29 {dimension_numbers = #tpu.dot_dimension_numbers<[2], [1], [1], [2], [0, 0, 0, 1, 1, 2], [0], [0]>} : vector<8x16x8xf32>, vector<8x8x32xf32>, vector<8x16x32xf32> -> vector<8x16x32xf32>
    %47 = vector.shape_cast %46 : vector<8x16x32xf32> to vector<128x32xf32>
    %c0_30 = arith.constant 0 : index
    %c0_31 = arith.constant 0 : index
    %48 = vector.load %arg8[%c0_30, %c0_31] : memref<32x32xf32, #tpu.memory_space<vmem>>, vector<32x32xf32>
    %cst_32 = arith.constant dense<0.000000e+00> : vector<128x32xf32>
    %49 = tpu.matmul %47, %48, %cst_32 {dimension_numbers = #tpu.dot_dimension_numbers<[1], [0], [0], [1], [0, 0, 1, 1], [], []>} : vector<128x32xf32>, vector<32x32xf32>, vector<128x32xf32> -> vector<128x32xf32>
    %c0_33 = arith.constant 0 : index
    %c0_34 = arith.constant 0 : index
    %50 = vector.load %arg9[%c0_33, %c0_34] : memref<64x32xf32, #tpu.memory_space<vmem>>, vector<32x32xf32>
    %cst_35 = arith.constant dense<0.000000e+00> : vector<128x32xf32>
    %51 = tpu.matmul %36, %50, %cst_35 {dimension_numbers = #tpu.dot_dimension_numbers<[1], [0], [0], [1], [0, 0, 1, 1], [], []>} : vector<128x32xf32>, vector<32x32xf32>, vector<128x32xf32> -> vector<128x32xf32>
    %c32 = arith.constant 32 : index
    %c0_36 = arith.constant 0 : index
    %52 = vector.load %arg9[%c32, %c0_36] : memref<64x32xf32, #tpu.memory_space<vmem>>, vector<32x32xf32>
    %cst_37 = arith.constant dense<0.000000e+00> : vector<128x32xf32>
    %53 = tpu.matmul %49, %52, %cst_37 {dimension_numbers = #tpu.dot_dimension_numbers<[1], [0], [0], [1], [0, 0, 1, 1], [], []>} : vector<128x32xf32>, vector<32x32xf32>, vector<128x32xf32> -> vector<128x32xf32>
    %54 = arith.addf %51, %53 : vector<128x32xf32>
    %c0_38 = arith.constant 0 : index
    %c0_39 = arith.constant 0 : index
    %55 = vector.load %arg10[%c0_38, %c0_39] : memref<1x32xf32, #tpu.memory_space<vmem>>, vector<1x32xf32>
    %56 = vector.broadcast %55 : vector<1x32xf32> to vector<128x32xf32>
    %57 = arith.addf %54, %56 : vector<128x32xf32>
    %58 = arith.negf %57 : vector<128x32xf32>
    %59 = math.exp %58 : vector<128x32xf32>
    %cst_40 = arith.constant 1.000000e+00 : f32
    %60 = vector.broadcast %cst_40 : f32 to vector<128x32xf32>
    %61 = arith.addf %60, %59 : vector<128x32xf32>
    %62 = arith.divf %60, %61 : vector<128x32xf32>
    %63 = arith.mulf %62, %36 : vector<128x32xf32>
    %cst_41 = arith.constant 1.000000e+00 : f32
    %64 = vector.broadcast %cst_41 : f32 to vector<128x32xf32>
    %65 = arith.subf %64, %62 : vector<128x32xf32>
    %66 = arith.mulf %65, %49 : vector<128x32xf32>
    %67 = arith.addf %63, %66 : vector<128x32xf32>
    %cst_42 = arith.constant 0.000000e+00 : f32
    %68 = vector.broadcast %cst_42 : f32 to vector<128x32xf32>
    %69 = arith.cmpf oge, %67, %68 : vector<128x32xf32>
    %cst_43 = arith.constant 0.00999999977 : f32
    %70 = vector.broadcast %cst_43 : f32 to vector<128x32xf32>
    %71 = arith.mulf %70, %67 : vector<128x32xf32>
    %72 = arith.select %69, %67, %71 : vector<128x32xi1>, vector<128x32xf32>
    %73 = vector.shape_cast %72 : vector<128x32xf32> to vector<8x16x32xf32>
    %cst_44 = arith.constant dense<0.000000e+00> : vector<8x8x32xf32>
    %74 = tpu.matmul %26, %73, %cst_44 {dimension_numbers = #tpu.dot_dimension_numbers<[1], [1], [2], [2], [0, 0, 0, 2, 1, 2], [0], [0]>} : vector<8x16x8xf32>, vector<8x16x32xf32>, vector<8x8x32xf32> -> vector<8x8x32xf32>
    %75 = vector.shape_cast %74 : vector<8x8x32xf32> to vector<64x32xf32>
    %c0_45 = arith.constant 0 : index
    %c0_46 = arith.constant 0 : index
    %76 = vector.load %arg7[%c0_45, %c0_46] : memref<32x32xf32, #tpu.memory_space<vmem>>, vector<32x32xf32>
    %cst_47 = arith.constant dense<0.000000e+00> : vector<64x32xf32>
    %77 = tpu.matmul %75, %76, %cst_47 {dimension_numbers = #tpu.dot_dimension_numbers<[1], [0], [0], [1], [0, 0, 1, 1], [], []>} : vector<64x32xf32>, vector<32x32xf32>, vector<64x32xf32> -> vector<64x32xf32>
    %c0_48 = arith.constant 0 : index
    %c0_49 = arith.constant 0 : index
    %78 = vector.load %arg11[%c0_48, %c0_49] : memref<64x32xf32, #tpu.memory_space<vmem>>, vector<32x32xf32>
    %cst_50 = arith.constant dense<0.000000e+00> : vector<64x32xf32>
    %79 = tpu.matmul %44, %78, %cst_50 {dimension_numbers = #tpu.dot_dimension_numbers<[1], [0], [0], [1], [0, 0, 1, 1], [], []>} : vector<64x32xf32>, vector<32x32xf32>, vector<64x32xf32> -> vector<64x32xf32>
    %c32_51 = arith.constant 32 : index
    %c0_52 = arith.constant 0 : index
    %80 = vector.load %arg11[%c32_51, %c0_52] : memref<64x32xf32, #tpu.memory_space<vmem>>, vector<32x32xf32>
    %cst_53 = arith.constant dense<0.000000e+00> : vector<64x32xf32>
    %81 = tpu.matmul %77, %80, %cst_53 {dimension_numbers = #tpu.dot_dimension_numbers<[1], [0], [0], [1], [0, 0, 1, 1], [], []>} : vector<64x32xf32>, vector<32x32xf32>, vector<64x32xf32> -> vector<64x32xf32>
    %82 = arith.addf %79, %81 : vector<64x32xf32>
    %c0_54 = arith.constant 0 : index
    %c0_55 = arith.constant 0 : index
    %83 = vector.load %arg12[%c0_54, %c0_55] : memref<1x32xf32, #tpu.memory_space<vmem>>, vector<1x32xf32>
    %84 = vector.broadcast %83 : vector<1x32xf32> to vector<64x32xf32>
    %85 = arith.addf %82, %84 : vector<64x32xf32>
    %86 = arith.negf %85 : vector<64x32xf32>
    %87 = math.exp %86 : vector<64x32xf32>
    %cst_56 = arith.constant 1.000000e+00 : f32
    %88 = vector.broadcast %cst_56 : f32 to vector<64x32xf32>
    %89 = arith.addf %88, %87 : vector<64x32xf32>
    %90 = arith.divf %88, %89 : vector<64x32xf32>
    %91 = arith.mulf %90, %44 : vector<64x32xf32>
    %cst_57 = arith.constant 1.000000e+00 : f32
    %92 = vector.broadcast %cst_57 : f32 to vector<64x32xf32>
    %93 = arith.subf %92, %90 : vector<64x32xf32>
    %94 = arith.mulf %93, %77 : vector<64x32xf32>
    %95 = arith.addf %91, %94 : vector<64x32xf32>
    %cst_58 = arith.constant 0.000000e+00 : f32
    %96 = vector.broadcast %cst_58 : f32 to vector<64x32xf32>
    %97 = arith.cmpf oge, %95, %96 : vector<64x32xf32>
    %cst_59 = arith.constant 0.00999999977 : f32
    %98 = vector.broadcast %cst_59 : f32 to vector<64x32xf32>
    %99 = arith.mulf %98, %95 : vector<64x32xf32>
    %100 = arith.select %97, %95, %99 : vector<64x32xi1>, vector<64x32xf32>
    %c0_60 = arith.constant 0 : index
    %c0_61 = arith.constant 0 : index
    %101 = vector.load %arg13[%c0_60, %c0_61] : memref<128x32xf32, #tpu.memory_space<vmem>>, vector<128x32xf32>
    tpu.vector_store %arg13[%c0_60, %c0_61], %72 {strides = array<i32>} : memref<128x32xf32, #tpu.memory_space<vmem>>, vector<128x32xf32>,
    %c0_62 = arith.constant 0 : index
    %c0_63 = arith.constant 0 : index
    %102 = vector.load %arg14[%c0_62, %c0_63] : memref<64x32xf32, #tpu.memory_space<vmem>>, vector<64x32xf32>
    tpu.vector_store %arg14[%c0_62, %c0_63], %100 {strides = array<i32>} : memref<64x32xf32, #tpu.memory_space<vmem>>, vector<64x32xf32>,
    return
  }
  func.func @transform_0(%arg0: i32) -> (i32, i32, i32) {
    %c0_i32 = arith.constant 0 : i32
    %c0_i32_0 = arith.constant 0 : i32
    %c0_i32_1 = arith.constant 0 : i32
    return %arg0, %c0_i32, %c0_i32_0 : i32, i32, i32
  }
  func.func @transform_1(%arg0: i32) -> (i32, i32, i32) {
    %c0_i32 = arith.constant 0 : i32
    %c0_i32_0 = arith.constant 0 : i32
    %c0_i32_1 = arith.constant 0 : i32
    return %arg0, %c0_i32, %c0_i32_0 : i32, i32, i32
  }
  func.func @transform_2(%arg0: i32) -> (i32, i32, i32) {
    %c0_i32 = arith.constant 0 : i32
    %c0_i32_0 = arith.constant 0 : i32
    %c0_i32_1 = arith.constant 0 : i32
    return %arg0, %c0_i32, %c0_i32_0 : i32, i32, i32
  }
  func.func @transform_3(%arg0: i32) -> (i32, i32, i32) {
    %c0_i32 = arith.constant 0 : i32
    %c0_i32_0 = arith.constant 0 : i32
    %c0_i32_1 = arith.constant 0 : i32
    return %arg0, %c0_i32, %c0_i32_0 : i32, i32, i32
  }
  func.func @transform_4(%arg0: i32) -> (i32, i32) {
    %c0_i32 = arith.constant 0 : i32
    %c0_i32_0 = arith.constant 0 : i32
    %c0_i32_1 = arith.constant 0 : i32
    return %c0_i32, %c0_i32_0 : i32, i32
  }
  func.func @transform_5(%arg0: i32) -> (i32, i32) {
    %c0_i32 = arith.constant 0 : i32
    %c0_i32_0 = arith.constant 0 : i32
    %c0_i32_1 = arith.constant 0 : i32
    return %c0_i32, %c0_i32_0 : i32, i32
  }
  func.func @transform_6(%arg0: i32) -> (i32, i32) {
    %c0_i32 = arith.constant 0 : i32
    %c0_i32_0 = arith.constant 0 : i32
    %c0_i32_1 = arith.constant 0 : i32
    return %c0_i32, %c0_i32_0 : i32, i32
  }
  func.func @transform_7(%arg0: i32) -> (i32, i32) {
    %c0_i32 = arith.constant 0 : i32
    %c0_i32_0 = arith.constant 0 : i32
    %c0_i32_1 = arith.constant 0 : i32
    return %c0_i32, %c0_i32_0 : i32, i32
  }
  func.func @transform_8(%arg0: i32) -> (i32, i32) {
    %c0_i32 = arith.constant 0 : i32
    %c0_i32_0 = arith.constant 0 : i32
    %c0_i32_1 = arith.constant 0 : i32
    return %c0_i32, %c0_i32_0 : i32, i32
  }
  func.func @transform_9(%arg0: i32) -> (i32, i32) {
    %c0_i32 = arith.constant 0 : i32
    %c0_i32_0 = arith.constant 0 : i32
    %c0_i32_1 = arith.constant 0 : i32
    return %c0_i32, %c0_i32_0 : i32, i32
  }
  func.func @transform_10(%arg0: i32) -> (i32, i32) {
    %c0_i32 = arith.constant 0 : i32
    %c0_i32_0 = arith.constant 0 : i32
    %c0_i32_1 = arith.constant 0 : i32
    return %c0_i32, %c0_i32_0 : i32, i32
  }
  func.func @transform_11(%arg0: i32) -> (i32, i32) {
    %c0_i32 = arith.constant 0 : i32
    %c0_i32_0 = arith.constant 0 : i32
    %c0_i32_1 = arith.constant 0 : i32
    return %c0_i32, %c0_i32_0 : i32, i32
  }
  func.func @transform_12(%arg0: i32) -> (i32, i32) {
    %c0_i32 = arith.constant 0 : i32
    %c0_i32_0 = arith.constant 0 : i32
    return %arg0, %c0_i32 : i32, i32
  }
  func.func @transform_13(%arg0: i32) -> (i32, i32) {
    %c0_i32 = arith.constant 0 : i32
    %c0_i32_0 = arith.constant 0 : i32
    return %arg0, %c0_i32 : i32, i32
  }
}

</mosaic_0001>

<llo_original>
// kernel: graph_convolution.1
$region0: #{graph_convolution.1}
  #allocation0 [shape = 'u32[]', space=smem, size = 0x4, offset = 0x4, fixed_abs, tag = 'smem constant byte address 0x4 - core index']
  #allocation1 [shape = 'u32[144,128]{1,0:T(1,128)}', space=vmem, size = 0x12000, scoped, tag = 'internal scratch']
  %s0 = inlined_call_operand.vmem [shape: f32[16,16,32], index: 0, kind: input, shape index: {}]
  %s1 = inlined_call_operand.hbm [shape: f32[16,16,16], index: 1, kind: input, shape index: {}]
  %s2 = inlined_call_operand.vmem [shape: f32[16,8,32], index: 2, kind: input, shape index: {}]
  %s3 = inlined_call_operand.vmem [shape: f32[16,8,8], index: 3, kind: input, shape index: {}]
  %s4 = inlined_call_operand.vmem [shape: f32[32,32], index: 4, kind: input, shape index: {}]
  %s5 = inlined_call_operand.hbm [shape: f32[32,32], index: 5, kind: input, shape index: {}]
  %s6 = inlined_call_operand.hbm [shape: f32[32,32], index: 6, kind: input, shape index: {}]
  %s7 = inlined_call_operand.hbm [shape: f32[32,32], index: 7, kind: input, shape index: {}]
  %s8 = inlined_call_operand.vmem [shape: f32[64,32], index: 8, kind: input, shape index: {}]
  %s9 = inlined_call_operand.vmem [shape: f32[1,32], index: 9, kind: input, shape index: {}]
  %s10 = inlined_call_operand.vmem [shape: f32[64,32], index: 10, kind: input, shape index: {}]
  %s11 = inlined_call_operand.vmem [shape: f32[1,32], index: 11, kind: input, shape index: {}]
  %s12 = inlined_call_operand.hbm [shape: f32[256,32], index: 12, kind: output, shape index: {0}]
  %s13 = inlined_call_operand.hbm [shape: f32[128,32], index: 13, kind: output, shape index: {1}]
  %14 = xla_tuple %s12, %s13
  %s15 = sld [smem:[#allocation0]]
  $region105: #{graph_convolution.1} parent=0
    _
  %s17 = ssub.s32 1, %s15
  %s18 = scalar_select 0, %s17, %s15
  $region1: #{graph_convolution.1} parent=0
    #allocation2 [shape = 'u8[131072]{0}', space=vmem, size = 0x20000, scoped, tag = 'input window, operand 1']
    #allocation3 [shape = 's32[2]{0}', space=sflag, size = 0x8, scoped, tag = 'scoped memory for graph_convolution.1']
    #allocation4 [shape = 's32[2]{0}', space=sflag, size = 0x8, scoped, tag = 'scoped memory for graph_convolution.1']
    #allocation5 [shape = 'u8[16384]{0}', space=vmem, size = 0x4000, scoped, tag = 'input window, operand 5, single buffered']
    #allocation6 [shape = 's32[1]{0}', space=sflag, size = 0x4, scoped, tag = 'scoped memory for graph_convolution.1']
    #allocation7 [shape = 'u8[16384]{0}', space=vmem, size = 0x4000, scoped, tag = 'input window, operand 6, single buffered']
    #allocation8 [shape = 'u8[16384]{0}', space=vmem, size = 0x4000, scoped, tag = 'input window, operand 7, single buffered']
    #allocation9 [shape = 's32[1]{0}', space=sflag, size = 0x4, scoped, tag = 'scoped memory for graph_convolution.1']
    #allocation10 [shape = 'u8[131072]{0}', space=vmem, size = 0x20000, scoped, tag = 'output window, operand 0']
    #allocation11 [shape = 'u8[65536]{0}', space=vmem, size = 0x10000, scoped, tag = 'output window, operand 1']
    #allocation12 [shape = 's32[2]{0}', space=sflag, size = 0x8, scoped, tag = 'scoped memory for graph_convolution.1']
    %19 = vsyncpa [#allocation3], 0
    %s20 = scalar_lea.sflag [#allocation3], 1
    %21 = vsyncpa %s20, 0
    %22 = vsyncpa [#allocation6], 0
    %23 = vsyncpa [#allocation9], 0
    %24 = vsyncpa [#allocation4], 0
    %s25 = scalar_lea.sflag [#allocation4], 1
    %26 = vsyncpa %s25, 0
    %27 = vsyncpa [#allocation12], 0
    %s28 = scalar_lea.sflag [#allocation12], 1
    %29 = vsyncpa %s28, 0
    loop: start=0, step=1, limit=4
    $region2: #{graph_convolution.1} parent=1 // loop_pre_header
      _
    $region3: #{graph_convolution.1} parent=1 // loop_header
      %s31 = sphi 0, %s35
      %p32 = scmp.ge.s32.totalorder %s31, 4
      %s41 = sphi 0, %s43
      %s44 = sphi 0, %s41
      %s45 = sphi 0, %s44
      %s61 = sphi 0, %s45
      %s67 = sphi 0, %s69
      %s70 = sphi 0, %s67
      %s71 = sphi 0, %s70
      %s87 = sphi 0, %s71
      %s93 = sphi 0, %s95
      %s96 = sphi 0, %s93
      %s97 = sphi 0, %s96
      %s113 = sphi 0, %s97
      %s119 = sphi 0, %s121
      %s122 = sphi 0, %s119
      %s123 = sphi 0, %s122
      %s139 = sphi 0, %s123
      %s143 = sphi 0, %s143
      %s145 = sphi 0, %s143
      %s146 = sphi 0, %s145
      %s160 = sphi 0, %s146
      %s164 = sphi 0, %s164
      %s166 = sphi 0, %s164
      %s167 = sphi 0, %s166
      %s181 = sphi 0, %s167
      %s185 = sphi 0, %s185
      %s187 = sphi 0, %s185
      %s188 = sphi 0, %s187
      %s202 = sphi 0, %s188
      %s206 = sphi 0, %s206
      %s208 = sphi 0, %s206
      %s209 = sphi 0, %s208
      %s223 = sphi 0, %s209
      %s227 = sphi 0, %s227
      %s229 = sphi 0, %s227
      %s230 = sphi 0, %s229
      %s244 = sphi 0, %s230
      %s248 = sphi 0, %s248
      %s250 = sphi 0, %s248
      %s251 = sphi 0, %s250
      %s265 = sphi 0, %s251
      %s269 = sphi 0, %s269
      %s271 = sphi 0, %s269
      %s272 = sphi 0, %s271
      %s286 = sphi 0, %s272
      %s290 = sphi 0, %s290
      %s292 = sphi 0, %s290
      %s293 = sphi 0, %s292
      %s307 = sphi 0, %s293
      %s313 = sphi 0, %s315
      %s316 = sphi 0, %s313
      %s317 = sphi 0, %s316
      %s333 = sphi 0, %s317
      %s339 = sphi 0, %s341
      %s342 = sphi 0, %s339
      %s343 = sphi 0, %s342
      %s359 = sphi 0, %s343
    $region4: #{graph_convolution.1} parent=1 // loop_header_branch
      %34 = sbr.rel (%p32) target = $region8
    $region5: #{graph_convolution.1} parent=1 // loop_body
      %s36 = ssub.s32 %s31, 1
      %s37 = ssub.s32 %s31, 2
      %s38 = sadd.s32 %s31, 1
      %s39 = ssub.s32 %s31, %s38
      %p40 = scmp.eq.s32.totalorder %s39, 0
      %s42 = sadd.s32 %s41, 1
      %s43 = scalar_select %p40, %s41, %s42
      %p46 = pneg %p40
      %p47 = scmp.eq.s32.totalorder %s31, 1
      %p48 = por %p46, %p47
      %p49 = scmp.ne.s32.totalorder %s41, %s44
      %p50 = scmp.eq.s32.totalorder %s31, 0
      %p51 = por %p49, %p50
      %p52 = scmp.ne.s32.totalorder %s41, %s44
      %p53 = scmp.eq.s32.totalorder %s36, 1
      %p54 = por %p52, %p53
      %p55 = scmp.ne.s32.totalorder %s44, %s45
      %p56 = scmp.eq.s32.totalorder %s36, 0
      %p57 = por %p55, %p56
      %p58 = scmp.ne.s32.totalorder %s44, %s45
      %p59 = scmp.eq.s32.totalorder %s37, 1
      %p60 = por %p58, %p59
      %p62 = scmp.ne.s32.totalorder %s45, %s61
      %p63 = scmp.eq.s32.totalorder %s37, 0
      %p64 = por %p62, %p63
      %s65 = ssub.s32 %s31, %s38
      %p66 = scmp.eq.s32.totalorder %s65, 0
      %s68 = sadd.s32 %s67, 1
      %s69 = scalar_select %p66, %s67, %s68
      %p72 = pneg %p66
      %p73 = scmp.eq.s32.totalorder %s31, 1
      %p74 = por %p72, %p73
      %p75 = scmp.ne.s32.totalorder %s67, %s70
      %p76 = scmp.eq.s32.totalorder %s31, 0
      %p77 = por %p75, %p76
      %p78 = scmp.ne.s32.totalorder %s67, %s70
      %p79 = scmp.eq.s32.totalorder %s36, 1
      %p80 = por %p78, %p79
      %p81 = scmp.ne.s32.totalorder %s70, %s71
      %p82 = scmp.eq.s32.totalorder %s36, 0
      %p83 = por %p81, %p82
      %p84 = scmp.ne.s32.totalorder %s70, %s71
      %p85 = scmp.eq.s32.totalorder %s37, 1
      %p86 = por %p84, %p85
      %p88 = scmp.ne.s32.totalorder %s71, %s87
      %p89 = scmp.eq.s32.totalorder %s37, 0
      %p90 = por %p88, %p89
      %s91 = ssub.s32 %s31, %s38
      %p92 = scmp.eq.s32.totalorder %s91, 0
      %s94 = sadd.s32 %s93, 1
      %s95 = scalar_select %p92, %s93, %s94
      %p98 = pneg %p92
      %p99 = scmp.eq.s32.totalorder %s31, 1
      %p100 = por %p98, %p99
      %p101 = scmp.ne.s32.totalorder %s93, %s96
      %p102 = scmp.eq.s32.totalorder %s31, 0
      %p103 = por %p101, %p102
      %p104 = scmp.ne.s32.totalorder %s93, %s96
      %p105 = scmp.eq.s32.totalorder %s36, 1
      %p106 = por %p104, %p105
      %p107 = scmp.ne.s32.totalorder %s96, %s97
      %p108 = scmp.eq.s32.totalorder %s36, 0
      %p109 = por %p107, %p108
      %p110 = scmp.ne.s32.totalorder %s96, %s97
      %p111 = scmp.eq.s32.totalorder %s37, 1
      %p112 = por %p110, %p111
      %p114 = scmp.ne.s32.totalorder %s97, %s113
      %p115 = scmp.eq.s32.totalorder %s37, 0
      %p116 = por %p114, %p115
      %s117 = ssub.s32 %s31, %s38
      %p118 = scmp.eq.s32.totalorder %s117, 0
      %s120 = sadd.s32 %s119, 1
      %s121 = scalar_select %p118, %s119, %s120
      %p124 = pneg %p118
      %p125 = scmp.eq.s32.totalorder %s31, 1
      %p126 = por %p124, %p125
      %p127 = scmp.ne.s32.totalorder %s119, %s122
      %p128 = scmp.eq.s32.totalorder %s31, 0
      %p129 = por %p127, %p128
      %p130 = scmp.ne.s32.totalorder %s119, %s122
      %p131 = scmp.eq.s32.totalorder %s36, 1
      %p132 = por %p130, %p131
      %p133 = scmp.ne.s32.totalorder %s122, %s123
      %p134 = scmp.eq.s32.totalorder %s36, 0
      %p135 = por %p133, %p134
      %p136 = scmp.ne.s32.totalorder %s122, %s123
      %p137 = scmp.eq.s32.totalorder %s37, 1
      %p138 = por %p136, %p137
      %p140 = scmp.ne.s32.totalorder %s123, %s139
      %p141 = scmp.eq.s32.totalorder %s37, 0
      %p142 = por %p140, %p141
      %s144 = sadd.s32 %s143, 1
      %p147 = scmp.eq.s32.totalorder %s31, 1
      %p148 = scmp.ne.s32.totalorder %s143, %s145
      %p149 = scmp.eq.s32.totalorder %s31, 0
      %p150 = por %p148, %p149
      %p151 = scmp.ne.s32.totalorder %s143, %s145
      %p152 = scmp.eq.s32.totalorder %s36, 1
      %p153 = por %p151, %p152
      %p154 = scmp.ne.s32.totalorder %s145, %s146
      %p155 = scmp.eq.s32.totalorder %s36, 0
      %p156 = por %p154, %p155
      %p157 = scmp.ne.s32.totalorder %s145, %s146
      %p158 = scmp.eq.s32.totalorder %s37, 1
      %p159 = por %p157, %p158
      %p161 = scmp.ne.s32.totalorder %s146, %s160
      %p162 = scmp.eq.s32.totalorder %s37, 0
      %p163 = por %p161, %p162
      %s165 = sadd.s32 %s164, 1
      %p168 = scmp.eq.s32.totalorder %s31, 1
      %p169 = scmp.ne.s32.totalorder %s164, %s166
      %p170 = scmp.eq.s32.totalorder %s31, 0
      %p171 = por %p169, %p170
      %p172 = scmp.ne.s32.totalorder %s164, %s166
      %p173 = scmp.eq.s32.totalorder %s36, 1
      %p174 = por %p172, %p173
      %p175 = scmp.ne.s32.totalorder %s166, %s167
      %p176 = scmp.eq.s32.totalorder %s36, 0
      %p177 = por %p175, %p176
      %p178 = scmp.ne.s32.totalorder %s166, %s167
      %p179 = scmp.eq.s32.totalorder %s37, 1
      %p180 = por %p178, %p179
      %p182 = scmp.ne.s32.totalorder %s167, %s181
      %p183 = scmp.eq.s32.totalorder %s37, 0
      %p184 = por %p182, %p183
      %s186 = sadd.s32 %s185, 1
      %p189 = scmp.eq.s32.totalorder %s31, 1
      %p190 = scmp.ne.s32.totalorder %s185, %s187
      %p191 = scmp.eq.s32.totalorder %s31, 0
      %p192 = por %p190, %p191
      %p193 = scmp.ne.s32.totalorder %s185, %s187
      %p194 = scmp.eq.s32.totalorder %s36, 1
      %p195 = por %p193, %p194
      %p196 = scmp.ne.s32.totalorder %s187, %s188
      %p197 = scmp.eq.s32.totalorder %s36, 0
      %p198 = por %p196, %p197
      %p199 = scmp.ne.s32.totalorder %s187, %s188
      %p200 = scmp.eq.s32.totalorder %s37, 1
      %p201 = por %p199, %p200
      %p203 = scmp.ne.s32.totalorder %s188, %s202
      %p204 = scmp.eq.s32.totalorder %s37, 0
      %p205 = por %p203, %p204
      %s207 = sadd.s32 %s206, 1
      %p210 = scmp.eq.s32.totalorder %s31, 1
      %p211 = scmp.ne.s32.totalorder %s206, %s208
      %p212 = scmp.eq.s32.totalorder %s31, 0
      %p213 = por %p211, %p212
      %p214 = scmp.ne.s32.totalorder %s206, %s208
      %p215 = scmp.eq.s32.totalorder %s36, 1
      %p216 = por %p214, %p215
      %p217 = scmp.ne.s32.totalorder %s208, %s209
      %p218 = scmp.eq.s32.totalorder %s36, 0
      %p219 = por %p217, %p218
      %p220 = scmp.ne.s32.totalorder %s208, %s209
      %p221 = scmp.eq.s32.totalorder %s37, 1
      %p222 = por %p220, %p221
      %p224 = scmp.ne.s32.totalorder %s209, %s223
      %p225 = scmp.eq.s32.totalorder %s37, 0
      %p226 = por %p224, %p225
      %s228 = sadd.s32 %s227, 1
      %p231 = scmp.eq.s32.totalorder %s31, 1
      %p232 = scmp.ne.s32.totalorder %s227, %s229
      %p233 = scmp.eq.s32.totalorder %s31, 0
      %p234 = por %p232, %p233
      %p235 = scmp.ne.s32.totalorder %s227, %s229
      %p236 = scmp.eq.s32.totalorder %s36, 1
      %p237 = por %p235, %p236
      %p238 = scmp.ne.s32.totalorder %s229, %s230
      %p239 = scmp.eq.s32.totalorder %s36, 0
      %p240 = por %p238, %p239
      %p241 = scmp.ne.s32.totalorder %s229, %s230
      %p242 = scmp.eq.s32.totalorder %s37, 1
      %p243 = por %p241, %p242
      %p245 = scmp.ne.s32.totalorder %s230, %s244
      %p246 = scmp.eq.s32.totalorder %s37, 0
      %p247 = por %p245, %p246
      %s249 = sadd.s32 %s248, 1
      %p252 = scmp.eq.s32.totalorder %s31, 1
      %p253 = scmp.ne.s32.totalorder %s248, %s250
      %p254 = scmp.eq.s32.totalorder %s31, 0
      %p255 = por %p253, %p254
      %p256 = scmp.ne.s32.totalorder %s248, %s250
      %p257 = scmp.eq.s32.totalorder %s36, 1
      %p258 = por %p256, %p257
      %p259 = scmp.ne.s32.totalorder %s250, %s251
      %p260 = scmp.eq.s32.totalorder %s36, 0
      %p261 = por %p259, %p260
      %p262 = scmp.ne.s32.totalorder %s250, %s251
      %p263 = scmp.eq.s32.totalorder %s37, 1
      %p264 = por %p262, %p263
      %p266 = scmp.ne.s32.totalorder %s251, %s265
      %p267 = scmp.eq.s32.totalorder %s37, 0
      %p268 = por %p266, %p267
      %s270 = sadd.s32 %s269, 1
      %p273 = scmp.eq.s32.totalorder %s31, 1
      %p274 = scmp.ne.s32.totalorder %s269, %s271
      %p275 = scmp.eq.s32.totalorder %s31, 0
      %p276 = por %p274, %p275
      %p277 = scmp.ne.s32.totalorder %s269, %s271
      %p278 = scmp.eq.s32.totalorder %s36, 1
      %p279 = por %p277, %p278
      %p280 = scmp.ne.s32.totalorder %s271, %s272
      %p281 = scmp.eq.s32.totalorder %s36, 0
      %p282 = por %p280, %p281
      %p283 = scmp.ne.s32.totalorder %s271, %s272
      %p284 = scmp.eq.s32.totalorder %s37, 1
      %p285 = por %p283, %p284
      %p287 = scmp.ne.s32.totalorder %s272, %s286
      %p288 = scmp.eq.s32.totalorder %s37, 0
      %p289 = por %p287, %p288
      %s291 = sadd.s32 %s290, 1
      %p294 = scmp.eq.s32.totalorder %s31, 1
      %p295 = scmp.ne.s32.totalorder %s290, %s292
      %p296 = scmp.eq.s32.totalorder %s31, 0
      %p297 = por %p295, %p296
      %p298 = scmp.ne.s32.totalorder %s290, %s292
      %p299 = scmp.eq.s32.totalorder %s36, 1
      %p300 = por %p298, %p299
      %p301 = scmp.ne.s32.totalorder %s292, %s293
      %p302 = scmp.eq.s32.totalorder %s36, 0
      %p303 = por %p301, %p302
      %p304 = scmp.ne.s32.totalorder %s292, %s293
      %p305 = scmp.eq.s32.totalorder %s37, 1
      %p306 = por %p304, %p305
      %p308 = scmp.ne.s32.totalorder %s293, %s307
      %p309 = scmp.eq.s32.totalorder %s37, 0
      %p310 = por %p308, %p309
      %s311 = ssub.s32 %s31, %s38
      %p312 = scmp.eq.s32.totalorder %s311, 0
      %s314 = sadd.s32 %s313, 1
      %s315 = scalar_select %p312, %s313, %s314
      %p318 = pneg %p312
      %p319 = scmp.eq.s32.totalorder %s31, 1
      %p320 = por %p318, %p319
      %p321 = scmp.ne.s32.totalorder %s313, %s316
      %p322 = scmp.eq.s32.totalorder %s31, 0
      %p323 = por %p321, %p322
      %p324 = scmp.ne.s32.totalorder %s313, %s316
      %p325 = scmp.eq.s32.totalorder %s36, 1
      %p326 = por %p324, %p325
      %p327 = scmp.ne.s32.totalorder %s316, %s317
      %p328 = scmp.eq.s32.totalorder %s36, 0
      %p329 = por %p327, %p328
      %p330 = scmp.ne.s32.totalorder %s316, %s317
      %p331 = scmp.eq.s32.totalorder %s37, 1
      %p332 = por %p330, %p331
      %p334 = scmp.ne.s32.totalorder %s317, %s333
      %p335 = scmp.eq.s32.totalorder %s37, 0
      %p336 = por %p334, %p335
      %s337 = ssub.s32 %s31, %s38
      %p338 = scmp.eq.s32.totalorder %s337, 0
      %s340 = sadd.s32 %s339, 1
      %s341 = scalar_select %p338, %s339, %s340
      %p344 = pneg %p338
      %p345 = scmp.eq.s32.totalorder %s31, 1
      %p346 = por %p344, %p345
      %p347 = scmp.ne.s32.totalorder %s339, %s342
      %p348 = scmp.eq.s32.totalorder %s31, 0
      %p349 = por %p347, %p348
      %p350 = scmp.ne.s32.totalorder %s339, %s342
      %p351 = scmp.eq.s32.totalorder %s36, 1
      %p352 = por %p350, %p351
      %p353 = scmp.ne.s32.totalorder %s342, %s343
      %p354 = scmp.eq.s32.totalorder %s36, 0
      %p355 = por %p353, %p354
      %p356 = scmp.ne.s32.totalorder %s342, %s343
      %p357 = scmp.eq.s32.totalorder %s37, 1
      %p358 = por %p356, %p357
      %p360 = scmp.ne.s32.totalorder %s343, %s359
      %p361 = scmp.eq.s32.totalorder %s37, 0
      %p362 = por %p360, %p361
      %p363 = scmp.le.s32.totalorder 1, %s31
      %p364 = scmp.lt.s32.totalorder %s31, 3
      %p365 = pnand %p363, %p364
      %p366 = pneg %p365
      // Predicated region
      $region9: #{graph_convolution.1} parent=5 // pred_check
        _
      $region10: #{graph_convolution.1} parent=5 // pred_check_branch
        %368 = sbr.rel (%p365) target = $region12
      $region11: #{graph_convolution.1} parent=5 // pred_region
        %s369 = ssub.s32 %s31, 1
        // Predicated region
        $region13: #{graph_convolution.1} parent=11 // pred_check
          %p370 = pneg %p156
        $region14: #{graph_convolution.1} parent=11 // pred_check_branch
          %372 = sbr.rel (%p370) target = $region16
        $region15: #{graph_convolution.1} parent=11 // pred_region
          _
        $region16: #{graph_convolution.1} parent=11 // pred_fallthru
          _
        // Predicated region
        $region17: #{graph_convolution.1} parent=11 // pred_check
          %p373 = pneg %p177
        $region18: #{graph_convolution.1} parent=11 // pred_check_branch
          %375 = sbr.rel (%p373) target = $region20
        $region19: #{graph_convolution.1} parent=11 // pred_region
          %s377 = ssub.s32 512, 512
          %378 = vsyncadd [#allocation6], %s377
          %s379 = sshll.u32 [#allocation5], 4
          %s380 = int_to_ptr.vmem [resolvable:$true] %s379
          %385 = dma.hbm_to_vmem [thread:$0]  %s5, 512, %s380, [#allocation6], 128, 128, 8
        $region20: #{graph_convolution.1} parent=11 // pred_fallthru
          _
        // Predicated region
        $region21: #{graph_convolution.1} parent=11 // pred_check
          %p386 = pneg %p198
        $region22: #{graph_convolution.1} parent=11 // pred_check_branch
          %388 = sbr.rel (%p386) target = $region24
        $region23: #{graph_convolution.1} parent=11 // pred_region
          %s390 = ssub.s32 512, 512
          %391 = vsyncadd [#allocation6], %s390
          %s392 = sshll.u32 [#allocation7], 4
          %s393 = int_to_ptr.vmem [resolvable:$true] %s392
          %398 = dma.hbm_to_vmem [thread:$0]  %s6, 512, %s393, [#allocation6], 128, 128, 8
        $region24: #{graph_convolution.1} parent=11 // pred_fallthru
          _
        // Predicated region
        $region25: #{graph_convolution.1} parent=11 // pred_check
          %p399 = pneg %p219
        $region26: #{graph_convolution.1} parent=11 // pred_check_branch
          %401 = sbr.rel (%p399) target = $region28
        $region27: #{graph_convolution.1} parent=11 // pred_region
          %s403 = ssub.s32 512, 512
          %404 = vsyncadd [#allocation9], %s403
          %s405 = sshll.u32 [#allocation8], 4
          %s406 = int_to_ptr.vmem [resolvable:$true] %s405
          %411 = dma.hbm_to_vmem [thread:$0]  %s7, 512, %s406, [#allocation9], 128, 128, 8
        $region28: #{graph_convolution.1} parent=11 // pred_fallthru
          _
        // Predicated region
        $region29: #{graph_convolution.1} parent=11 // pred_check
          %p412 = pneg %p240
        $region30: #{graph_convolution.1} parent=11 // pred_check_branch
          %414 = sbr.rel (%p412) target = $region32
        $region31: #{graph_convolution.1} parent=11 // pred_region
          _
        $region32: #{graph_convolution.1} parent=11 // pred_fallthru
          _
        // Predicated region
        $region33: #{graph_convolution.1} parent=11 // pred_check
          %p415 = pneg %p261
        $region34: #{graph_convolution.1} parent=11 // pred_check_branch
          %417 = sbr.rel (%p415) target = $region36
        $region35: #{graph_convolution.1} parent=11 // pred_region
          _
        $region36: #{graph_convolution.1} parent=11 // pred_fallthru
          _
        // Predicated region
        $region37: #{graph_convolution.1} parent=11 // pred_check
          %p418 = pneg %p282
        $region38: #{graph_convolution.1} parent=11 // pred_check_branch
          %420 = sbr.rel (%p418) target = $region40
        $region39: #{graph_convolution.1} parent=11 // pred_region
          _
        $region40: #{graph_convolution.1} parent=11 // pred_fallthru
          _
        // Predicated region
        $region41: #{graph_convolution.1} parent=11 // pred_check
          %p421 = pneg %p303
        $region42: #{graph_convolution.1} parent=11 // pred_check_branch
          %423 = sbr.rel (%p421) target = $region44
        $region43: #{graph_convolution.1} parent=11 // pred_region
          _
        $region44: #{graph_convolution.1} parent=11 // pred_fallthru
          _
      $region12: #{graph_convolution.1} parent=5 // pred_fallthru
        _
      %p424 = scmp.lt.s32.totalorder %s31, 2
      // Predicated region
      $region45: #{graph_convolution.1} parent=5 // pred_check
        %p425 = pneg %p424
      $region46: #{graph_convolution.1} parent=5 // pred_check_branch
        %427 = sbr.rel (%p425) target = $region48
      $region47: #{graph_convolution.1} parent=5 // pred_region
        // Predicated region
        $region49: #{graph_convolution.1} parent=47 // pred_check
          %p428 = pneg %p51
        $region50: #{graph_convolution.1} parent=47 // pred_check_branch
          %430 = sbr.rel (%p428) target = $region52
        $region51: #{graph_convolution.1} parent=47 // pred_region
          %s431 = smul.u32 8, %s31
          %p432 = scmp.lt.s32.totalorder %s431, 15
          %s433 = scalar_select %p432, %s431, 15
          %s434 = smul.addr %s433, 2
          %s435 = smul.addr %s434, 8
          %s436 = scalar_lea.vmem %s0, %s435
          %s437 = smul.u32 8, %s31
        $region52: #{graph_convolution.1} parent=47 // pred_fallthru
          _
        // Predicated region
        $region53: #{graph_convolution.1} parent=47 // pred_check
          %p438 = pneg %p77
        $region54: #{graph_convolution.1} parent=47 // pred_check_branch
          %440 = sbr.rel (%p438) target = $region56
        $region55: #{graph_convolution.1} parent=47 // pred_region
          %s441 = sand.u32 %s67, 1
          %s442 = scalar_lea.sflag [#allocation3], %s441
          %s443 = sand.u32 %s67, 1
          %s444 = smul.addr %s443, 128
          %s445 = scalar_lea.vmem [#allocation2], %s444
          %s446 = smul.u32 8, %s31
          %s448 = ssub.s32 2048, 2048
          %449 = vsyncadd %s442, %s448
          %s450 = smul.addr %s446, 2
          %s451 = smul.addr %s450, 128
          %s452 = scalar_lea.hbm %s1, %s451
          %s453 = sshll.u32 %s445, 4
          %s454 = int_to_ptr.vmem [resolvable:$true] %s453
          %459 = dma.hbm_to_vmem [thread:$0]  %s452, 2048, %s454, %s442, 128, 128, 8
        $region56: #{graph_convolution.1} parent=47 // pred_fallthru
          _
        // Predicated region
        $region57: #{graph_convolution.1} parent=47 // pred_check
          %p460 = pneg %p103
        $region58: #{graph_convolution.1} parent=47 // pred_check_branch
          %462 = sbr.rel (%p460) target = $region60
        $region59: #{graph_convolution.1} parent=47 // pred_region
          %s463 = smul.u32 8, %s31
          %p464 = scmp.lt.s32.totalorder %s463, 15
          %s465 = scalar_select %p464, %s463, 15
          %s466 = smul.addr %s465, 8
          %s467 = scalar_lea.vmem %s2, %s466
          %s468 = smul.u32 8, %s31
        $region60: #{graph_convolution.1} parent=47 // pred_fallthru
          _
        // Predicated region
        $region61: #{graph_convolution.1} parent=47 // pred_check
          %p469 = pneg %p129
        $region62: #{graph_convolution.1} parent=47 // pred_check_branch
          %471 = sbr.rel (%p469) target = $region64
        $region63: #{graph_convolution.1} parent=47 // pred_region
          %s472 = smul.u32 8, %s31
          %p473 = scmp.lt.s32.totalorder %s472, 15
          %s474 = scalar_select %p473, %s472, 15
          %s475 = smul.addr %s474, 8
          %s476 = scalar_lea.vmem %s3, %s475
          %s477 = smul.u32 8, %s31
        $region64: #{graph_convolution.1} parent=47 // pred_fallthru
          _
      $region48: #{graph_convolution.1} parent=5 // pred_fallthru
        _
      %p478 = scmp.le.s32.totalorder 1, %s31
      %p479 = scmp.lt.s32.totalorder %s31, 3
      %p480 = pnand %p478, %p479
      %p481 = pneg %p480
      // Predicated region
      $region65: #{graph_convolution.1} parent=5 // pred_check
        _
      $region66: #{graph_convolution.1} parent=5 // pred_check_branch
        %483 = sbr.rel (%p480) target = $region68
      $region67: #{graph_convolution.1} parent=5 // pred_region
        %s484 = ssub.s32 %s31, 1
        %s485 = sand.u32 %s70, 1
        %s486 = scalar_lea.sflag [#allocation3], %s485
        %s487 = sand.u32 %s70, 1
        %s488 = smul.addr %s487, 128
        %s489 = scalar_lea.vmem [#allocation2], %s488
        // Predicated region
        $region69: #{graph_convolution.1} parent=67 // pred_check
          %p490 = pneg %p83
        $region70: #{graph_convolution.1} parent=67 // pred_check_branch
          %492 = sbr.rel (%p490) target = $region72
        $region71: #{graph_convolution.1} parent=67 // pred_region
          %493 = dma.done %s486, 2048
        $region72: #{graph_convolution.1} parent=67 // pred_fallthru
          _
        // Predicated region
        $region73: #{graph_convolution.1} parent=67 // pred_check
          %p494 = pneg %p177
        $region74: #{graph_convolution.1} parent=67 // pred_check_branch
          %496 = sbr.rel (%p494) target = $region76
        $region75: #{graph_convolution.1} parent=67 // pred_region
          %497 = dma.done [#allocation6], 512
        $region76: #{graph_convolution.1} parent=67 // pred_fallthru
          _
        // Predicated region
        $region77: #{graph_convolution.1} parent=67 // pred_check
          %p498 = pneg %p198
        $region78: #{graph_convolution.1} parent=67 // pred_check_branch
          %500 = sbr.rel (%p498) target = $region80
        $region79: #{graph_convolution.1} parent=67 // pred_region
          %501 = dma.done [#allocation6], 512
        $region80: #{graph_convolution.1} parent=67 // pred_fallthru
          _
        // Predicated region
        $region81: #{graph_convolution.1} parent=67 // pred_check
          %p502 = pneg %p219
        $region82: #{graph_convolution.1} parent=67 // pred_check_branch
          %504 = sbr.rel (%p502) target = $region84
        $region83: #{graph_convolution.1} parent=67 // pred_region
          %505 = dma.done [#allocation9], 512
        $region84: #{graph_convolution.1} parent=67 // pred_fallthru
          _
        %s506 = smul.u32 8, %s36
        %p507 = scmp.lt.s32.totalorder %s506, 15
        %s508 = scalar_select %p507, %s506, 15
        %s509 = smul.addr %s508, 2
        %s510 = smul.addr %s509, 8
        %s511 = scalar_lea.vmem %s0, %s510
        %p512 = pneg %p57
        %p513 = pneg %p54
        %s514 = sand.u32 %s70, 1
        %s515 = scalar_lea.sflag [#allocation3], %s514
        %s516 = sand.u32 %s70, 1
        %s517 = smul.addr %s516, 128
        %s518 = scalar_lea.vmem [#allocation2], %s517
        %p519 = pneg %p83
        %p520 = pneg %p80
        %s521 = smul.u32 8, %s36
        %p522 = scmp.lt.s32.totalorder %s521, 15
        %s523 = scalar_select %p522, %s521, 15
        %s524 = smul.addr %s523, 8
        %s525 = scalar_lea.vmem %s2, %s524
        %p526 = pneg %p109
        %p527 = pneg %p106
        %s528 = smul.u32 8, %s36
        %p529 = scmp.lt.s32.totalorder %s528, 15
        %s530 = scalar_select %p529, %s528, 15
        %s531 = smul.addr %s530, 8
        %s532 = scalar_lea.vmem %s3, %s531
        %p533 = pneg %p135
        %p534 = pneg %p132
        %p535 = pneg %p156
        %p536 = pneg %p153
        %p537 = pneg %p177
        %p538 = pneg %p174
        %p539 = pneg %p198
        %p540 = pneg %p195
        %p541 = pneg %p219
        %p542 = pneg %p216
        %p543 = pneg %p240
        %p544 = pneg %p237
        %p545 = pneg %p261
        %p546 = pneg %p258
        %p547 = pneg %p282
        %p548 = pneg %p279
        %p549 = pneg %p303
        %p550 = pneg %p300
        %p551 = pneg %p329
        %p552 = pneg %p326
        %s553 = sand.u32 %s316, 1
        %s554 = scalar_lea.sflag [#allocation4], %s553
        %s555 = sand.u32 %s316, 1
        %s556 = smul.addr %s555, 128
        %s557 = scalar_lea.vmem [#allocation10], %s556
        %p558 = pneg %p355
        %p559 = pneg %p352
        %s560 = sand.u32 %s342, 1
        %s561 = scalar_lea.sflag [#allocation12], %s560
        %s562 = sand.u32 %s342, 1
        %s563 = smul.addr %s562, 64
        %s564 = scalar_lea.vmem [#allocation11], %s563
        %s565 = smul.u32 8, %s36
        %p566 = scmp.lt.s32.totalorder %s565, 15
        %s567 = scalar_select %p566, %s565, 15
        %s568 = smul.addr %s567, 2
        %s569 = smul.addr %s568, 8
        %s570 = scalar_lea.vmem %s0, %s569
        %s571 = smul.u32 8, %s36
        %s572 = smul.u32 8, %s36
        %s573 = smul.u32 8, %s36
        %p574 = scmp.lt.s32.totalorder %s573, 15
        %s575 = scalar_select %p574, %s573, 15
        %s576 = smul.addr %s575, 8
        %s577 = scalar_lea.vmem %s2, %s576
        %s578 = smul.u32 8, %s36
        %s579 = smul.u32 8, %s36
        %p580 = scmp.lt.s32.totalorder %s579, 15
        %s581 = scalar_select %p580, %s579, 15
        %s582 = smul.addr %s581, 8
        %s583 = scalar_lea.vmem %s3, %s582
        %s584 = smul.u32 8, %s36
        %s585 = smul.u32 16, %s36
        %s586 = smul.u32 8, %s36
        %v587 = vld [vmem:[%s570] sm:$0xff]
        %v588 = vld [vmem:[%s570 + $0x8] sm:$0xff]
        %v589 = vld [vmem:[%s570 + $0x10] sm:$0xff]
        %v590 = vld [vmem:[%s570 + $0x18] sm:$0xff]
        %v591 = vld [vmem:[%s570 + $0x20] sm:$0xff]
        %v592 = vld [vmem:[%s570 + $0x28] sm:$0xff]
        %v593 = vld [vmem:[%s570 + $0x30] sm:$0xff]
        %v594 = vld [vmem:[%s570 + $0x38] sm:$0xff]
        %v595 = vld [vmem:[%s570 + $0x40] sm:$0xff]
        %v596 = vld [vmem:[%s570 + $0x48] sm:$0xff]
        %v597 = vld [vmem:[%s570 + $0x50] sm:$0xff]
        %v598 = vld [vmem:[%s570 + $0x58] sm:$0xff]
        %v599 = vld [vmem:[%s570 + $0x60] sm:$0xff]
        %v600 = vld [vmem:[%s570 + $0x68] sm:$0xff]
        %v601 = vld [vmem:[%s570 + $0x70] sm:$0xff]
        %v602 = vld [vmem:[%s570 + $0x78] sm:$0xff]
        %v603 = vld [vmem:[%s577] sm:$0xff]
        %v604 = vld [vmem:[%s577 + $0x8] sm:$0xff]
        %v605 = vld [vmem:[%s577 + $0x10] sm:$0xff]
        %v606 = vld [vmem:[%s577 + $0x18] sm:$0xff]
        %v607 = vld [vmem:[%s577 + $0x20] sm:$0xff]
        %v608 = vld [vmem:[%s577 + $0x28] sm:$0xff]
        %v609 = vld [vmem:[%s577 + $0x30] sm:$0xff]
        %v610 = vld [vmem:[%s577 + $0x38] sm:$0xff]
        %v611 = vld [vmem:[%s489] sm:$0xff]
        %v612 = vld [vmem:[%s489 + $0x8] sm:$0xff]
        %v613 = vld [vmem:[%s489 + $0x10] sm:$0xff]
        %v614 = vld [vmem:[%s489 + $0x18] sm:$0xff]
        %v615 = vld [vmem:[%s489 + $0x20] sm:$0xff]
        %v616 = vld [vmem:[%s489 + $0x28] sm:$0xff]
        %v617 = vld [vmem:[%s489 + $0x30] sm:$0xff]
        %v618 = vld [vmem:[%s489 + $0x38] sm:$0xff]
        %v619 = vld [vmem:[%s489 + $0x40] sm:$0xff]
        %v620 = vld [vmem:[%s489 + $0x48] sm:$0xff]
        %v621 = vld [vmem:[%s489 + $0x50] sm:$0xff]
        %v622 = vld [vmem:[%s489 + $0x58] sm:$0xff]
        %v623 = vld [vmem:[%s489 + $0x60] sm:$0xff]
        %v624 = vld [vmem:[%s489 + $0x68] sm:$0xff]
        %v625 = vld [vmem:[%s489 + $0x70] sm:$0xff]
        %v626 = vld [vmem:[%s489 + $0x78] sm:$0xff]
        %v627 = vld [vmem:[%s583] sm:$0xff]
        %v628 = vld [vmem:[%s583 + $0x8] sm:$0xff]
        %v629 = vld [vmem:[%s583 + $0x10] sm:$0xff]
        %v630 = vld [vmem:[%s583 + $0x18] sm:$0xff]
        %v631 = vld [vmem:[%s583 + $0x20] sm:$0xff]
        %v632 = vld [vmem:[%s583 + $0x28] sm:$0xff]
        %v633 = vld [vmem:[%s583 + $0x30] sm:$0xff]
        %v634 = vld [vmem:[%s583 + $0x38] sm:$0xff]
        %vm635 = vcmask 261120
        %v637 = vsel %vm635, %v587, 0
        %v640 = vsel %vm635, %v588, 0
        %v643 = vsel %vm635, %v603, 0
        %645 = vmatprep.subr.mxu0 0.0
        %646 = vmatpush1.xpose.msra.mxu0 %v643
        %647 = vmatprep.subr.mxu0 0.0
        %648 = vmatpush1.xpose.msra.mxu0 0.0
        %649 = vmatprep.subr.mxu0 0.0
        %650 = vmatpush1.xpose.msra.mxu0 0.0
        %651 = vmatprep.subr.mxu0 0.0
        %652 = vmatpush1.xpose.msra.mxu0 0.0
        %653 = vmatprep.subr.mxu0 0.0
        %654 = vmatpush1.xpose.msra.mxu0 0.0
        %655 = vmatprep.subr.mxu0 0.0
        %656 = vmatpush1.xpose.msra.mxu0 0.0
        %657 = vmatprep.subr.mxu0 0.0
        %658 = vmatpush1.xpose.msra.mxu0 0.0
        %659 = vmatprep.subr.mxu0 0.0
        %660 = vmatpush1.xpose.msra.mxu0 0.0
        %661 = vmatprep.subr.mxu0 0.0
        %662 = vmatpush1.xpose.msra.mxu0 0.0
        %663 = vmatprep.subr.mxu0 0.0
        %664 = vmatpush1.xpose.msra.mxu0 0.0
        %665 = vmatprep.subr.mxu0 0.0
        %666 = vmatpush1.xpose.msra.mxu0 0.0
        %667 = vmatprep.subr.mxu0 0.0
        %668 = vmatpush1.xpose.msra.mxu0 0.0
        %669 = vmatprep.subr.mxu0 0.0
        %670 = vmatpush1.xpose.msra.mxu0 0.0
        %671 = vmatprep.subr.mxu0 0.0
        %672 = vmatpush1.xpose.msra.mxu0 0.0
        %673 = vmatprep.subr.mxu0 0.0
        %674 = vmatpush1.xpose.msra.mxu0 0.0
        %675 = vmatprep.subr.mxu0 0.0
        %676 = vmatpush1.xpose.msra.mxu0 0.0
        %677 = vmatprep.subr.mxu0 0.0
        %678 = vmatpush1.xpose.msra.mxu0 0.0
        %679 = vmatprep.subr.mxu0 0.0
        %680 = vmatpush1.xpose.msra.mxu0 0.0
        %681 = vmatprep.subr.mxu0 0.0
        %682 = vmatpush1.xpose.msra.mxu0 0.0
        %683 = vmatprep.subr.mxu0 0.0
        %684 = vmatpush1.xpose.msra.mxu0 0.0
        %685 = vmatprep.subr.mxu0 0.0
        %686 = vmatpush1.xpose.msra.mxu0 0.0
        %687 = vmatprep.subr.mxu0 0.0
        %688 = vmatpush1.xpose.msra.mxu0 0.0
        %689 = vmatprep.subr.mxu0 0.0
        %690 = vmatpush1.xpose.msra.mxu0 0.0
        %691 = vmatprep.subr.mxu0 0.0
        %692 = vmatpush1.xpose.msra.mxu0 0.0
        %693 = vmatprep.subr.mxu0 0.0
        %694 = vmatpush1.xpose.msra.mxu0 0.0
        %695 = vmatprep.subr.mxu0 0.0
        %696 = vmatpush1.xpose.msra.mxu0 0.0
        %697 = vmatprep.subr.mxu0 0.0
        %698 = vmatpush1.xpose.msra.mxu0 0.0
        %699 = vmatprep.subr.mxu0 0.0
        %700 = vmatpush1.xpose.msra.mxu0 0.0
        %701 = vmatprep.subr.mxu0 0.0
        %702 = vmatpush1.xpose.msra.mxu0 0.0
        %703 = vmatprep.subr.mxu0 0.0
        %704 = vmatpush1.xpose.msra.mxu0 0.0
        %705 = vmatprep.subr.mxu0 0.0
        %706 = vmatpush1.xpose.msra.mxu0 0.0
        %707 = vmatprep.subr.mxu0 0.0
        %708 = vmatpush1.xpose.msra.mxu0 0.0
        %709 = vmatprep.mubr.f32.mxu0 0.0
        %710 = vmatmul.mubr.f32.gmra.mrb[0].mxu0 %v637
        %v711 = vpop.f32.mrb[0].mxu0
        %v712 = vadd.f32 0.0, %v711
        %v713 = vpop.f32.mrb[0].mxu0
        %714 = vmatprep.mubr.f32.mxu0 0.0
        %715 = vmatmul.mubr.f32.gmra.mrb[0].mxu0 %v640
        %v716 = vpop.f32.mrb[0].mxu0
        %v717 = vadd.f32 0.0, %v716
        %v718 = vpop.f32.mrb[0].mxu0
        %719 = vdwg.mxu0
        %v721 = vsel %vm635, %v589, 0
        %v724 = vsel %vm635, %v590, 0
        %v727 = vsel %vm635, %v604, 0
        %729 = vmatprep.subr.mxu0 0.0
        %730 = vmatpush1.xpose.msra.mxu0 %v727
        %731 = vmatprep.subr.mxu0 0.0
        %732 = vmatpush1.xpose.msra.mxu0 0.0
        %733 = vmatprep.subr.mxu0 0.0
        %734 = vmatpush1.xpose.msra.mxu0 0.0
        %735 = vmatprep.subr.mxu0 0.0
        %736 = vmatpush1.xpose.msra.mxu0 0.0
        %737 = vmatprep.subr.mxu0 0.0
        %738 = vmatpush1.xpose.msra.mxu0 0.0
        %739 = vmatprep.subr.mxu0 0.0
        %740 = vmatpush1.xpose.msra.mxu0 0.0
        %741 = vmatprep.subr.mxu0 0.0
        %742 = vmatpush1.xpose.msra.mxu0 0.0
        %743 = vmatprep.subr.mxu0 0.0
        %744 = vmatpush1.xpose.msra.mxu0 0.0
        %745 = vmatprep.subr.mxu0 0.0
        %746 = vmatpush1.xpose.msra.mxu0 0.0
        %747 = vmatprep.subr.mxu0 0.0
        %748 = vmatpush1.xpose.msra.mxu0 0.0
        %749 = vmatprep.subr.mxu0 0.0
        %750 = vmatpush1.xpose.msra.mxu0 0.0
        %751 = vmatprep.subr.mxu0 0.0
        %752 = vmatpush1.xpose.msra.mxu0 0.0
        %753 = vmatprep.subr.mxu0 0.0
        %754 = vmatpush1.xpose.msra.mxu0 0.0
        %755 = vmatprep.subr.mxu0 0.0
        %756 = vmatpush1.xpose.msra.mxu0 0.0
        %757 = vmatprep.subr.mxu0 0.0
        %758 = vmatpush1.xpose.msra.mxu0 0.0
        %759 = vmatprep.subr.mxu0 0.0
        %760 = vmatpush1.xpose.msra.mxu0 0.0
        %761 = vmatprep.subr.mxu0 0.0
        %762 = vmatpush1.xpose.msra.mxu0 0.0
        %763 = vmatprep.subr.mxu0 0.0
        %764 = vmatpush1.xpose.msra.mxu0 0.0
        %765 = vmatprep.subr.mxu0 0.0
        %766 = vmatpush1.xpose.msra.mxu0 0.0
        %767 = vmatprep.subr.mxu0 0.0
        %768 = vmatpush1.xpose.msra.mxu0 0.0
        %769 = vmatprep.subr.mxu0 0.0
        %770 = vmatpush1.xpose.msra.mxu0 0.0
        %771 = vmatprep.subr.mxu0 0.0
        %772 = vmatpush1.xpose.msra.mxu0 0.0
        %773 = vmatprep.subr.mxu0 0.0
        %774 = vmatpush1.xpose.msra.mxu0 0.0
        %775 = vmatprep.subr.mxu0 0.0
        %776 = vmatpush1.xpose.msra.mxu0 0.0
        %777 = vmatprep.subr.mxu0 0.0
        %778 = vmatpush1.xpose.msra.mxu0 0.0
        %779 = vmatprep.subr.mxu0 0.0
        %780 = vmatpush1.xpose.msra.mxu0 0.0
        %781 = vmatprep.subr.mxu0 0.0
        %782 = vmatpush1.xpose.msra.mxu0 0.0
        %783 = vmatprep.subr.mxu0 0.0
        %784 = vmatpush1.xpose.msra.mxu0 0.0
        %785 = vmatprep.subr.mxu0 0.0
        %786 = vmatpush1.xpose.msra.mxu0 0.0
        %787 = vmatprep.subr.mxu0 0.0
        %788 = vmatpush1.xpose.msra.mxu0 0.0
        %789 = vmatprep.subr.mxu0 0.0
        %790 = vmatpush1.xpose.msra.mxu0 0.0
        %791 = vmatprep.subr.mxu0 0.0
        %792 = vmatpush1.xpose.msra.mxu0 0.0
        %793 = vmatprep.mubr.f32.mxu0 0.0
        %794 = vmatmul.mubr.f32.gmra.mrb[0].mxu0 %v721
        %v795 = vpop.f32.mrb[0].mxu0
        %v796 = vadd.f32 0.0, %v795
        %v797 = vpop.f32.mrb[0].mxu0
        %798 = vmatprep.mubr.f32.mxu0 0.0
        %799 = vmatmul.mubr.f32.gmra.mrb[0].mxu0 %v724
        %v800 = vpop.f32.mrb[0].mxu0
        %v801 = vadd.f32 0.0, %v800
        %v802 = vpop.f32.mrb[0].mxu0
        %803 = vdwg.mxu0
        %v805 = vsel %vm635, %v591, 0
        %v808 = vsel %vm635, %v592, 0
        %v811 = vsel %vm635, %v605, 0
        %813 = vmatprep.subr.mxu0 0.0
        %814 = vmatpush1.xpose.msra.mxu0 %v811
        %815 = vmatprep.subr.mxu0 0.0
        %816 = vmatpush1.xpose.msra.mxu0 0.0
        %817 = vmatprep.subr.mxu0 0.0
        %818 = vmatpush1.xpose.msra.mxu0 0.0
        %819 = vmatprep.subr.mxu0 0.0
        %820 = vmatpush1.xpose.msra.mxu0 0.0
        %821 = vmatprep.subr.mxu0 0.0
        %822 = vmatpush1.xpose.msra.mxu0 0.0
        %823 = vmatprep.subr.mxu0 0.0
        %824 = vmatpush1.xpose.msra.mxu0 0.0
        %825 = vmatprep.subr.mxu0 0.0
        %826 = vmatpush1.xpose.msra.mxu0 0.0
        %827 = vmatprep.subr.mxu0 0.0
        %828 = vmatpush1.xpose.msra.mxu0 0.0
        %829 = vmatprep.subr.mxu0 0.0
        %830 = vmatpush1.xpose.msra.mxu0 0.0
        %831 = vmatprep.subr.mxu0 0.0
        %832 = vmatpush1.xpose.msra.mxu0 0.0
        %833 = vmatprep.subr.mxu0 0.0
        %834 = vmatpush1.xpose.msra.mxu0 0.0
        %835 = vmatprep.subr.mxu0 0.0
        %836 = vmatpush1.xpose.msra.mxu0 0.0
        %837 = vmatprep.subr.mxu0 0.0
        %838 = vmatpush1.xpose.msra.mxu0 0.0
        %839 = vmatprep.subr.mxu0 0.0
        %840 = vmatpush1.xpose.msra.mxu0 0.0
        %841 = vmatprep.subr.mxu0 0.0
        %842 = vmatpush1.xpose.msra.mxu0 0.0
        %843 = vmatprep.subr.mxu0 0.0
        %844 = vmatpush1.xpose.msra.mxu0 0.0
        %845 = vmatprep.subr.mxu0 0.0
        %846 = vmatpush1.xpose.msra.mxu0 0.0
        %847 = vmatprep.subr.mxu0 0.0
        %848 = vmatpush1.xpose.msra.mxu0 0.0
        %849 = vmatprep.subr.mxu0 0.0
        %850 = vmatpush1.xpose.msra.mxu0 0.0
        %851 = vmatprep.subr.mxu0 0.0
        %852 = vmatpush1.xpose.msra.mxu0 0.0
        %853 = vmatprep.subr.mxu0 0.0
        %854 = vmatpush1.xpose.msra.mxu0 0.0
        %855 = vmatprep.subr.mxu0 0.0
        %856 = vmatpush1.xpose.msra.mxu0 0.0
        %857 = vmatprep.subr.mxu0 0.0
        %858 = vmatpush1.xpose.msra.mxu0 0.0
        %859 = vmatprep.subr.mxu0 0.0
        %860 = vmatpush1.xpose.msra.mxu0 0.0
        %861 = vmatprep.subr.mxu0 0.0
        %862 = vmatpush1.xpose.msra.mxu0 0.0
        %863 = vmatprep.subr.mxu0 0.0
        %864 = vmatpush1.xpose.msra.mxu0 0.0
        %865 = vmatprep.subr.mxu0 0.0
        %866 = vmatpush1.xpose.msra.mxu0 0.0
        %867 = vmatprep.subr.mxu0 0.0
        %868 = vmatpush1.xpose.msra.mxu0 0.0
        %869 = vmatprep.subr.mxu0 0.0
        %870 = vmatpush1.xpose.msra.mxu0 0.0
        %871 = vmatprep.subr.mxu0 0.0
        %872 = vmatpush1.xpose.msra.mxu0 0.0
        %873 = vmatprep.subr.mxu0 0.0
        %874 = vmatpush1.xpose.msra.mxu0 0.0
        %875 = vmatprep.subr.mxu0 0.0
        %876 = vmatpush1.xpose.msra.mxu0 0.0
        %877 = vmatprep.mubr.f32.mxu0 0.0
        %878 = vmatmul.mubr.f32.gmra.mrb[0].mxu0 %v805
        %v879 = vpop.f32.mrb[0].mxu0
        %v880 = vadd.f32 0.0, %v879
        %v881 = vpop.f32.mrb[0].mxu0
        %882 = vmatprep.mubr.f32.mxu0 0.0
        %883 = vmatmul.mubr.f32.gmra.mrb[0].mxu0 %v808
        %v884 = vpop.f32.mrb[0].mxu0
        %v885 = vadd.f32 0.0, %v884
        %v886 = vpop.f32.mrb[0].mxu0
        %887 = vdwg.mxu0
        %v889 = vsel %vm635, %v593, 0
        %v892 = vsel %vm635, %v594, 0
        %v895 = vsel %vm635, %v606, 0
        %897 = vmatprep.subr.mxu0 0.0
        %898 = vmatpush1.xpose.msra.mxu0 %v895
        %899 = vmatprep.subr.mxu0 0.0
        %900 = vmatpush1.xpose.msra.mxu0 0.0
        %901 = vmatprep.subr.mxu0 0.0
        %902 = vmatpush1.xpose.msra.mxu0 0.0
        %903 = vmatprep.subr.mxu0 0.0
        %904 = vmatpush1.xpose.msra.mxu0 0.0
        %905 = vmatprep.subr.mxu0 0.0
        %906 = vmatpush1.xpose.msra.mxu0 0.0
        %907 = vmatprep.subr.mxu0 0.0
        %908 = vmatpush1.xpose.msra.mxu0 0.0
        %909 = vmatprep.subr.mxu0 0.0
        %910 = vmatpush1.xpose.msra.mxu0 0.0
        %911 = vmatprep.subr.mxu0 0.0
        %912 = vmatpush1.xpose.msra.mxu0 0.0
        %913 = vmatprep.subr.mxu0 0.0
        %914 = vmatpush1.xpose.msra.mxu0 0.0
        %915 = vmatprep.subr.mxu0 0.0
        %916 = vmatpush1.xpose.msra.mxu0 0.0
        %917 = vmatprep.subr.mxu0 0.0
        %918 = vmatpush1.xpose.msra.mxu0 0.0
        %919 = vmatprep.subr.mxu0 0.0
        %920 = vmatpush1.xpose.msra.mxu0 0.0
        %921 = vmatprep.subr.mxu0 0.0
        %922 = vmatpush1.xpose.msra.mxu0 0.0
        %923 = vmatprep.subr.mxu0 0.0
        %924 = vmatpush1.xpose.msra.mxu0 0.0
        %925 = vmatprep.subr.mxu0 0.0
        %926 = vmatpush1.xpose.msra.mxu0 0.0
        %927 = vmatprep.subr.mxu0 0.0
        %928 = vmatpush1.xpose.msra.mxu0 0.0
        %929 = vmatprep.subr.mxu0 0.0
        %930 = vmatpush1.xpose.msra.mxu0 0.0
        %931 = vmatprep.subr.mxu0 0.0
        %932 = vmatpush1.xpose.msra.mxu0 0.0
        %933 = vmatprep.subr.mxu0 0.0
        %934 = vmatpush1.xpose.msra.mxu0 0.0
        %935 = vmatprep.subr.mxu0 0.0
        %936 = vmatpush1.xpose.msra.mxu0 0.0
        %937 = vmatprep.subr.mxu0 0.0
        %938 = vmatpush1.xpose.msra.mxu0 0.0
        %939 = vmatprep.subr.mxu0 0.0
        %940 = vmatpush1.xpose.msra.mxu0 0.0
        %941 = vmatprep.subr.mxu0 0.0
        %942 = vmatpush1.xpose.msra.mxu0 0.0
        %943 = vmatprep.subr.mxu0 0.0
        %944 = vmatpush1.xpose.msra.mxu0 0.0
        %945 = vmatprep.subr.mxu0 0.0
        %946 = vmatpush1.xpose.msra.mxu0 0.0
        %947 = vmatprep.subr.mxu0 0.0
        %948 = vmatpush1.xpose.msra.mxu0 0.0
        %949 = vmatprep.subr.mxu0 0.0
        %950 = vmatpush1.xpose.msra.mxu0 0.0
        %951 = vmatprep.subr.mxu0 0.0
        %952 = vmatpush1.xpose.msra.mxu0 0.0
        %953 = vmatprep.subr.mxu0 0.0
        %954 = vmatpush1.xpose.msra.mxu0 0.0
        %955 = vmatprep.subr.mxu0 0.0
        %956 = vmatpush1.xpose.msra.mxu0 0.0
        %957 = vmatprep.subr.mxu0 0.0
        %958 = vmatpush1.xpose.msra.mxu0 0.0
        %959 = vmatprep.subr.mxu0 0.0
        %960 = vmatpush1.xpose.msra.mxu0 0.0
        %961 = vmatprep.mubr.f32.mxu0 0.0
        %962 = vmatmul.mubr.f32.gmra.mrb[0].mxu0 %v889
        %v963 = vpop.f32.mrb[0].mxu0
        %v964 = vadd.f32 0.0, %v963
        %v965 = vpop.f32.mrb[0].mxu0
        %966 = vmatprep.mubr.f32.mxu0 0.0
        %967 = vmatmul.mubr.f32.gmra.mrb[0].mxu0 %v892
        %v968 = vpop.f32.mrb[0].mxu0
        %v969 = vadd.f32 0.0, %v968
        %v970 = vpop.f32.mrb[0].mxu0
        %971 = vdwg.mxu0
        %v973 = vsel %vm635, %v595, 0
        %v976 = vsel %vm635, %v596, 0
        %v979 = vsel %vm635, %v607, 0
        %981 = vmatprep.subr.mxu0 0.0
        %982 = vmatpush1.xpose.msra.mxu0 %v979
        %983 = vmatprep.subr.mxu0 0.0
        %984 = vmatpush1.xpose.msra.mxu0 0.0
        %985 = vmatprep.subr.mxu0 0.0
        %986 = vmatpush1.xpose.msra.mxu0 0.0
        %987 = vmatprep.subr.mxu0 0.0
        %988 = vmatpush1.xpose.msra.mxu0 0.0
        %989 = vmatprep.subr.mxu0 0.0
        %990 = vmatpush1.xpose.msra.mxu0 0.0
        %991 = vmatprep.subr.mxu0 0.0
        %992 = vmatpush1.xpose.msra.mxu0 0.0
        %993 = vmatprep.subr.mxu0 0.0
        %994 = vmatpush1.xpose.msra.mxu0 0.0
        %995 = vmatprep.subr.mxu0 0.0
        %996 = vmatpush1.xpose.msra.mxu0 0.0
        %997 = vmatprep.subr.mxu0 0.0
        %998 = vmatpush1.xpose.msra.mxu0 0.0
        %999 = vmatprep.subr.mxu0 0.0
        %1000 = vmatpush1.xpose.msra.mxu0 0.0
        %1001 = vmatprep.subr.mxu0 0.0
        %1002 = vmatpush1.xpose.msra.mxu0 0.0
        %1003 = vmatprep.subr.mxu0 0.0
        %1004 = vmatpush1.xpose.msra.mxu0 0.0
        %1005 = vmatprep.subr.mxu0 0.0
        %1006 = vmatpush1.xpose.msra.mxu0 0.0
        %1007 = vmatprep.subr.mxu0 0.0
        %1008 = vmatpush1.xpose.msra.mxu0 0.0
        %1009 = vmatprep.subr.mxu0 0.0
        %1010 = vmatpush1.xpose.msra.mxu0 0.0
        %1011 = vmatprep.subr.mxu0 0.0
        %1012 = vmatpush1.xpose.msra.mxu0 0.0
        %1013 = vmatprep.subr.mxu0 0.0
        %1014 = vmatpush1.xpose.msra.mxu0 0.0
        %1015 = vmatprep.subr.mxu0 0.0
        %1016 = vmatpush1.xpose.msra.mxu0 0.0
        %1017 = vmatprep.subr.mxu0 0.0
        %1018 = vmatpush1.xpose.msra.mxu0 0.0
        %1019 = vmatprep.subr.mxu0 0.0
        %1020 = vmatpush1.xpose.msra.mxu0 0.0
        %1021 = vmatprep.subr.mxu0 0.0
        %1022 = vmatpush1.xpose.msra.mxu0 0.0
        %1023 = vmatprep.subr.mxu0 0.0
        %1024 = vmatpush1.xpose.msra.mxu0 0.0
        %1025 = vmatprep.subr.mxu0 0.0
        %1026 = vmatpush1.xpose.msra.mxu0 0.0
        %1027 = vmatprep.subr.mxu0 0.0
        %1028 = vmatpush1.xpose.msra.mxu0 0.0
        %1029 = vmatprep.subr.mxu0 0.0
        %1030 = vmatpush1.xpose.msra.mxu0 0.0
        %1031 = vmatprep.subr.mxu0 0.0
        %1032 = vmatpush1.xpose.msra.mxu0 0.0
        %1033 = vmatprep.subr.mxu0 0.0
        %1034 = vmatpush1.xpose.msra.mxu0 0.0
        %1035 = vmatprep.subr.mxu0 0.0
        %1036 = vmatpush1.xpose.msra.mxu0 0.0
        %1037 = vmatprep.subr.mxu0 0.0
        %1038 = vmatpush1.xpose.msra.mxu0 0.0
        %1039 = vmatprep.subr.mxu0 0.0
        %1040 = vmatpush1.xpose.msra.mxu0 0.0
        %1041 = vmatprep.subr.mxu0 0.0
        %1042 = vmatpush1.xpose.msra.mxu0 0.0
        %1043 = vmatprep.subr.mxu0 0.0
        %1044 = vmatpush1.xpose.msra.mxu0 0.0
        %1045 = vmatprep.mubr.f32.mxu0 0.0
        %1046 = vmatmul.mubr.f32.gmra.mrb[0].mxu0 %v973
        %v1047 = vpop.f32.mrb[0].mxu0
        %v1048 = vadd.f32 0.0, %v1047
        %v1049 = vpop.f32.mrb[0].mxu0
        %1050 = vmatprep.mubr.f32.mxu0 0.0
        %1051 = vmatmul.mubr.f32.gmra.mrb[0].mxu0 %v976
        %v1052 = vpop.f32.mrb[0].mxu0
        %v1053 = vadd.f32 0.0, %v1052
        %v1054 = vpop.f32.mrb[0].mxu0
        %1055 = vdwg.mxu0
        %v1057 = vsel %vm635, %v597, 0
        %v1060 = vsel %vm635, %v598, 0
        %v1063 = vsel %vm635, %v608, 0
        %1065 = vmatprep.subr.mxu0 0.0
        %1066 = vmatpush1.xpose.msra.mxu0 %v1063
        %1067 = vmatprep.subr.mxu0 0.0
        %1068 = vmatpush1.xpose.msra.mxu0 0.0
        %1069 = vmatprep.subr.mxu0 0.0
        %1070 = vmatpush1.xpose.msra.mxu0 0.0
        %1071 = vmatprep.subr.mxu0 0.0
        %1072 = vmatpush1.xpose.msra.mxu0 0.0
        %1073 = vmatprep.subr.mxu0 0.0
        %1074 = vmatpush1.xpose.msra.mxu0 0.0
        %1075 = vmatprep.subr.mxu0 0.0
        %1076 = vmatpush1.xpose.msra.mxu0 0.0
        %1077 = vmatprep.subr.mxu0 0.0
        %1078 = vmatpush1.xpose.msra.mxu0 0.0
        %1079 = vmatprep.subr.mxu0 0.0
        %1080 = vmatpush1.xpose.msra.mxu0 0.0
        %1081 = vmatprep.subr.mxu0 0.0
        %1082 = vmatpush1.xpose.msra.mxu0 0.0
        %1083 = vmatprep.subr.mxu0 0.0
        %1084 = vmatpush1.xpose.msra.mxu0 0.0
        %1085 = vmatprep.subr.mxu0 0.0
        %1086 = vmatpush1.xpose.msra.mxu0 0.0
        %1087 = vmatprep.subr.mxu0 0.0
        %1088 = vmatpush1.xpose.msra.mxu0 0.0
        %1089 = vmatprep.subr.mxu0 0.0
        %1090 = vmatpush1.xpose.msra.mxu0 0.0
        %1091 = vmatprep.subr.mxu0 0.0
        %1092 = vmatpush1.xpose.msra.mxu0 0.0
        %1093 = vmatprep.subr.mxu0 0.0
        %1094 = vmatpush1.xpose.msra.mxu0 0.0
        %1095 = vmatprep.subr.mxu0 0.0
        %1096 = vmatpush1.xpose.msra.mxu0 0.0
        %1097 = vmatprep.subr.mxu0 0.0
        %1098 = vmatpush1.xpose.msra.mxu0 0.0
        %1099 = vmatprep.subr.mxu0 0.0
        %1100 = vmatpush1.xpose.msra.mxu0 0.0
        %1101 = vmatprep.subr.mxu0 0.0
        %1102 = vmatpush1.xpose.msra.mxu0 0.0
        %1103 = vmatprep.subr.mxu0 0.0
        %1104 = vmatpush1.xpose.msra.mxu0 0.0
        %1105 = vmatprep.subr.mxu0 0.0
        %1106 = vmatpush1.xpose.msra.mxu0 0.0
        %1107 = vmatprep.subr.mxu0 0.0
        %1108 = vmatpush1.xpose.msra.mxu0 0.0
        %1109 = vmatprep.subr.mxu0 0.0
        %1110 = vmatpush1.xpose.msra.mxu0 0.0
        %1111 = vmatprep.subr.mxu0 0.0
        %1112 = vmatpush1.xpose.msra.mxu0 0.0
        %1113 = vmatprep.subr.mxu0 0.0
        %1114 = vmatpush1.xpose.msra.mxu0 0.0
        %1115 = vmatprep.subr.mxu0 0.0
        %1116 = vmatpush1.xpose.msra.mxu0 0.0
        %1117 = vmatprep.subr.mxu0 0.0
        %1118 = vmatpush1.xpose.msra.mxu0 0.0
        %1119 = vmatprep.subr.mxu0 0.0
        %1120 = vmatpush1.xpose.msra.mxu0 0.0
        %1121 = vmatprep.subr.mxu0 0.0
        %1122 = vmatpush1.xpose.msra.mxu0 0.0
        %1123 = vmatprep.subr.mxu0 0.0
        %1124 = vmatpush1.xpose.msra.mxu0 0.0
        %1125 = vmatprep.subr.mxu0 0.0
        %1126 = vmatpush1.xpose.msra.mxu0 0.0
        %1127 = vmatprep.subr.mxu0 0.0
        %1128 = vmatpush1.xpose.msra.mxu0 0.0
        %1129 = vmatprep.mubr.f32.mxu0 0.0
        %1130 = vmatmul.mubr.f32.gmra.mrb[0].mxu0 %v1057
        %v1131 = vpop.f32.mrb[0].mxu0
        %v1132 = vadd.f32 0.0, %v1131
        %v1133 = vpop.f32.mrb[0].mxu0
        %1134 = vmatprep.mubr.f32.mxu0 0.0
        %1135 = vmatmul.mubr.f32.gmra.mrb[0].mxu0 %v1060
        %v1136 = vpop.f32.mrb[0].mxu0
        %v1137 = vadd.f32 0.0, %v1136
        %v1138 = vpop.f32.mrb[0].mxu0
        %1139 = vdwg.mxu0
        %v1141 = vsel %vm635, %v599, 0
        %v1144 = vsel %vm635, %v600, 0
        %v1147 = vsel %vm635, %v609, 0
        %1149 = vmatprep.subr.mxu0 0.0
        %1150 = vmatpush1.xpose.msra.mxu0 %v1147
        %1151 = vmatprep.subr.mxu0 0.0
        %1152 = vmatpush1.xpose.msra.mxu0 0.0
        %1153 = vmatprep.subr.mxu0 0.0
        %1154 = vmatpush1.xpose.msra.mxu0 0.0
        %1155 = vmatprep.subr.mxu0 0.0
        %1156 = vmatpush1.xpose.msra.mxu0 0.0
        %1157 = vmatprep.subr.mxu0 0.0
        %1158 = vmatpush1.xpose.msra.mxu0 0.0
        %1159 = vmatprep.subr.mxu0 0.0
        %1160 = vmatpush1.xpose.msra.mxu0 0.0
        %1161 = vmatprep.subr.mxu0 0.0
        %1162 = vmatpush1.xpose.msra.mxu0 0.0
        %1163 = vmatprep.subr.mxu0 0.0
        %1164 = vmatpush1.xpose.msra.mxu0 0.0
        %1165 = vmatprep.subr.mxu0 0.0
        %1166 = vmatpush1.xpose.msra.mxu0 0.0
        %1167 = vmatprep.subr.mxu0 0.0
        %1168 = vmatpush1.xpose.msra.mxu0 0.0
        %1169 = vmatprep.subr.mxu0 0.0
        %1170 = vmatpush1.xpose.msra.mxu0 0.0
        %1171 = vmatprep.subr.mxu0 0.0
        %1172 = vmatpush1.xpose.msra.mxu0 0.0
        %1173 = vmatprep.subr.mxu0 0.0
        %1174 = vmatpush1.xpose.msra.mxu0 0.0
        %1175 = vmatprep.subr.mxu0 0.0
        %1176 = vmatpush1.xpose.msra.mxu0 0.0
        %1177 = vmatprep.subr.mxu0 0.0
        %1178 = vmatpush1.xpose.msra.mxu0 0.0
        %1179 = vmatprep.subr.mxu0 0.0
        %1180 = vmatpush1.xpose.msra.mxu0 0.0
        %1181 = vmatprep.subr.mxu0 0.0
        %1182 = vmatpush1.xpose.msra.mxu0 0.0
        %1183 = vmatprep.subr.mxu0 0.0
        %1184 = vmatpush1.xpose.msra.mxu0 0.0
        %1185 = vmatprep.subr.mxu0 0.0
        %1186 = vmatpush1.xpose.msra.mxu0 0.0
        %1187 = vmatprep.subr.mxu0 0.0
        %1188 = vmatpush1.xpose.msra.mxu0 0.0
        %1189 = vmatprep.subr.mxu0 0.0
        %1190 = vmatpush1.xpose.msra.mxu0 0.0
        %1191 = vmatprep.subr.mxu0 0.0
        %1192 = vmatpush1.xpose.msra.mxu0 0.0
        %1193 = vmatprep.subr.mxu0 0.0
        %1194 = vmatpush1.xpose.msra.mxu0 0.0
        %1195 = vmatprep.subr.mxu0 0.0
        %1196 = vmatpush1.xpose.msra.mxu0 0.0
        %1197 = vmatprep.subr.mxu0 0.0
        %1198 = vmatpush1.xpose.msra.mxu0 0.0
        %1199 = vmatprep.subr.mxu0 0.0
        %1200 = vmatpush1.xpose.msra.mxu0 0.0
        %1201 = vmatprep.subr.mxu0 0.0
        %1202 = vmatpush1.xpose.msra.mxu0 0.0
        %1203 = vmatprep.subr.mxu0 0.0
        %1204 = vmatpush1.xpose.msra.mxu0 0.0
        %1205 = vmatprep.subr.mxu0 0.0
        %1206 = vmatpush1.xpose.msra.mxu0 0.0
        %1207 = vmatprep.subr.mxu0 0.0
        %1208 = vmatpush1.xpose.msra.mxu0 0.0
        %1209 = vmatprep.subr.mxu0 0.0
        %1210 = vmatpush1.xpose.msra.mxu0 0.0
        %1211 = vmatprep.subr.mxu0 0.0
        %1212 = vmatpush1.xpose.msra.mxu0 0.0
        %1213 = vmatprep.mubr.f32.mxu0 0.0
        %1214 = vmatmul.mubr.f32.gmra.mrb[0].mxu0 %v1141
        %v1215 = vpop.f32.mrb[0].mxu0
        %v1216 = vadd.f32 0.0, %v1215
        %v1217 = vpop.f32.mrb[0].mxu0
        %1218 = vmatprep.mubr.f32.mxu0 0.0
        %1219 = vmatmul.mubr.f32.gmra.mrb[0].mxu0 %v1144
        %v1220 = vpop.f32.mrb[0].mxu0
        %v1221 = vadd.f32 0.0, %v1220
        %v1222 = vpop.f32.mrb[0].mxu0
        %1223 = vdwg.mxu0
        %v1225 = vsel %vm635, %v601, 0
        %v1228 = vsel %vm635, %v602, 0
        %v1231 = vsel %vm635, %v610, 0
        %1233 = vmatprep.subr.mxu0 0.0
        %1234 = vmatpush1.xpose.msra.mxu0 %v1231
        %1235 = vmatprep.subr.mxu0 0.0
        %1236 = vmatpush1.xpose.msra.mxu0 0.0
        %1237 = vmatprep.subr.mxu0 0.0
        %1238 = vmatpush1.xpose.msra.mxu0 0.0
        %1239 = vmatprep.subr.mxu0 0.0
        %1240 = vmatpush1.xpose.msra.mxu0 0.0
        %1241 = vmatprep.subr.mxu0 0.0
        %1242 = vmatpush1.xpose.msra.mxu0 0.0
        %1243 = vmatprep.subr.mxu0 0.0
        %1244 = vmatpush1.xpose.msra.mxu0 0.0
        %1245 = vmatprep.subr.mxu0 0.0
        %1246 = vmatpush1.xpose.msra.mxu0 0.0
        %1247 = vmatprep.subr.mxu0 0.0
        %1248 = vmatpush1.xpose.msra.mxu0 0.0
        %1249 = vmatprep.subr.mxu0 0.0
        %1250 = vmatpush1.xpose.msra.mxu0 0.0
        %1251 = vmatprep.subr.mxu0 0.0
        %1252 = vmatpush1.xpose.msra.mxu0 0.0
        %1253 = vmatprep.subr.mxu0 0.0
        %1254 = vmatpush1.xpose.msra.mxu0 0.0
        %1255 = vmatprep.subr.mxu0 0.0
        %1256 = vmatpush1.xpose.msra.mxu0 0.0
        %1257 = vmatprep.subr.mxu0 0.0
        %1258 = vmatpush1.xpose.msra.mxu0 0.0
        %1259 = vmatprep.subr.mxu0 0.0
        %1260 = vmatpush1.xpose.msra.mxu0 0.0
        %1261 = vmatprep.subr.mxu0 0.0
        %1262 = vmatpush1.xpose.msra.mxu0 0.0
        %1263 = vmatprep.subr.mxu0 0.0
        %1264 = vmatpush1.xpose.msra.mxu0 0.0
        %1265 = vmatprep.subr.mxu0 0.0
        %1266 = vmatpush1.xpose.msra.mxu0 0.0
        %1267 = vmatprep.subr.mxu0 0.0
        %1268 = vmatpush1.xpose.msra.mxu0 0.0
        %1269 = vmatprep.subr.mxu0 0.0
        %1270 = vmatpush1.xpose.msra.mxu0 0.0
        %1271 = vmatprep.subr.mxu0 0.0
        %1272 = vmatpush1.xpose.msra.mxu0 0.0
        %1273 = vmatprep.subr.mxu0 0.0
        %1274 = vmatpush1.xpose.msra.mxu0 0.0
        %1275 = vmatprep.subr.mxu0 0.0
        %1276 = vmatpush1.xpose.msra.mxu0 0.0
        %1277 = vmatprep.subr.mxu0 0.0
        %1278 = vmatpush1.xpose.msra.mxu0 0.0
        %1279 = vmatprep.subr.mxu0 0.0
        %1280 = vmatpush1.xpose.msra.mxu0 0.0
        %1281 = vmatprep.subr.mxu0 0.0
        %1282 = vmatpush1.xpose.msra.mxu0 0.0
        %1283 = vmatprep.subr.mxu0 0.0
        %1284 = vmatpush1.xpose.msra.mxu0 0.0
        %1285 = vmatprep.subr.mxu0 0.0
        %1286 = vmatpush1.xpose.msra.mxu0 0.0
        %1287 = vmatprep.subr.mxu0 0.0
        %1288 = vmatpush1.xpose.msra.mxu0 0.0
        %1289 = vmatprep.subr.mxu0 0.0
        %1290 = vmatpush1.xpose.msra.mxu0 0.0
        %1291 = vmatprep.subr.mxu0 0.0
        %1292 = vmatpush1.xpose.msra.mxu0 0.0
        %1293 = vmatprep.subr.mxu0 0.0
        %1294 = vmatpush1.xpose.msra.mxu0 0.0
        %1295 = vmatprep.subr.mxu0 0.0
        %1296 = vmatpush1.xpose.msra.mxu0 0.0
        %1297 = vmatprep.mubr.f32.mxu0 0.0
        %1298 = vmatmul.mubr.f32.gmra.mrb[0].mxu0 %v1225
        %v1299 = vpop.f32.mrb[0].mxu0
        %v1300 = vadd.f32 0.0, %v1299
        %v1301 = vpop.f32.mrb[0].mxu0
        %1302 = vmatprep.mubr.f32.mxu0 0.0
        %1303 = vmatmul.mubr.f32.gmra.mrb[0].mxu0 %v1228
        %v1304 = vpop.f32.mrb[0].mxu0
        %v1305 = vadd.f32 0.0, %v1304
        %v1306 = vpop.f32.mrb[0].mxu0
        %1307 = vdwg.mxu0
        %vm1308 = vcmask 64512
        %v1309 = vsel %vm1308, %v712, -inf
        %1310 = vmax.xlane.f32.xlu0 %v1309
        %v1311 = vpop.xlane.xlu0 %1310
        %v1312 = vsel %vm1308, %v717, -inf
        %1313 = vmax.xlane.f32.xlu0 %v1312
        %v1314 = vpop.xlane.xlu0 %1313
        %v1315 = vsel %vm1308, %v796, -inf
        %1316 = vmax.xlane.f32.xlu0 %v1315
        %v1317 = vpop.xlane.xlu0 %1316
        %v1318 = vsel %vm1308, %v801, -inf
        %1319 = vmax.xlane.f32.xlu0 %v1318
        %v1320 = vpop.xlane.xlu0 %1319
        %v1321 = vsel %vm1308, %v880, -inf
        %1322 = vmax.xlane.f32.xlu0 %v1321
        %v1323 = vpop.xlane.xlu0 %1322
        %v1324 = vsel %vm1308, %v885, -inf
        %1325 = vmax.xlane.f32.xlu0 %v1324
        %v1326 = vpop.xlane.xlu0 %1325
        %v1327 = vsel %vm1308, %v964, -inf
        %1328 = vmax.xlane.f32.xlu0 %v1327
        %v1329 = vpop.xlane.xlu0 %1328
        %v1330 = vsel %vm1308, %v969, -inf
        %1331 = vmax.xlane.f32.xlu0 %v1330
        %v1332 = vpop.xlane.xlu0 %1331
        %v1333 = vsel %vm1308, %v1048, -inf
        %1334 = vmax.xlane.f32.xlu0 %v1333
        %v1335 = vpop.xlane.xlu0 %1334
        %v1336 = vsel %vm1308, %v1053, -inf
        %1337 = vmax.xlane.f32.xlu0 %v1336
        %v1338 = vpop.xlane.xlu0 %1337
        %v1339 = vsel %vm1308, %v1132, -inf
        %1340 = vmax.xlane.f32.xlu0 %v1339
        %v1341 = vpop.xlane.xlu0 %1340
        %v1342 = vsel %vm1308, %v1137, -inf
        %1343 = vmax.xlane.f32.xlu0 %v1342
        %v1344 = vpop.xlane.xlu0 %1343
        %v1345 = vsel %vm1308, %v1216, -inf
        %1346 = vmax.xlane.f32.xlu0 %v1345
        %v1347 = vpop.xlane.xlu0 %1346
        %v1348 = vsel %vm1308, %v1221, -inf
        %1349 = vmax.xlane.f32.xlu0 %v1348
        %v1350 = vpop.xlane.xlu0 %1349
        %v1351 = vsel %vm1308, %v1300, -inf
        %1352 = vmax.xlane.f32.xlu0 %v1351
        %v1353 = vpop.xlane.xlu0 %1352
        %v1354 = vsel %vm1308, %v1305, -inf
        %1355 = vmax.xlane.f32.xlu0 %v1354
        %v1356 = vpop.xlane.xlu0 %1355
        %v1357 = vsub.f32 %v712, %v1311
        %v1358 = vsub.f32 %v717, %v1314
        %v1359 = vsub.f32 %v796, %v1317
        %v1360 = vsub.f32 %v801, %v1320
        %v1361 = vsub.f32 %v880, %v1323
        %v1362 = vsub.f32 %v885, %v1326
        %v1363 = vsub.f32 %v964, %v1329
        %v1364 = vsub.f32 %v969, %v1332
        %v1365 = vsub.f32 %v1048, %v1335
        %v1366 = vsub.f32 %v1053, %v1338
        %v1367 = vsub.f32 %v1132, %v1341
        %v1368 = vsub.f32 %v1137, %v1344
        %v1369 = vsub.f32 %v1216, %v1347
        %v1370 = vsub.f32 %v1221, %v1350
        %v1371 = vsub.f32 %v1300, %v1353
        %v1372 = vsub.f32 %v1305, %v1356
        %v1373 = vmul.f32 %v1357, 1.442695
        %v1374 = vpow.pop %v1373
        %v1375 = vmul.f32 %v1358, 1.442695
        %v1376 = vpow.pop %v1375
        %v1377 = vmul.f32 %v1359, 1.442695
        %v1378 = vpow.pop %v1377
        %v1379 = vmul.f32 %v1360, 1.442695
        %v1380 = vpow.pop %v1379
        %v1381 = vmul.f32 %v1361, 1.442695
        %v1382 = vpow.pop %v1381
        %v1383 = vmul.f32 %v1362, 1.442695
        %v1384 = vpow.pop %v1383
        %v1385 = vmul.f32 %v1363, 1.442695
        %v1386 = vpow.pop %v1385
        %v1387 = vmul.f32 %v1364, 1.442695
        %v1388 = vpow.pop %v1387
        %v1389 = vmul.f32 %v1365, 1.442695
        %v1390 = vpow.pop %v1389
        %v1391 = vmul.f32 %v1366, 1.442695
        %v1392 = vpow.pop %v1391
        %v1393 = vmul.f32 %v1367, 1.442695
        %v1394 = vpow.pop %v1393
        %v1395 = vmul.f32 %v1368, 1.442695
        %v1396 = vpow.pop %v1395
        %v1397 = vmul.f32 %v1369, 1.442695
        %v1398 = vpow.pop %v1397
        %v1399 = vmul.f32 %v1370, 1.442695
        %v1400 = vpow.pop %v1399
        %v1401 = vmul.f32 %v1371, 1.442695
        %v1402 = vpow.pop %v1401
        %v1403 = vmul.f32 %v1372, 1.442695
        %v1404 = vpow.pop %v1403
        %v1405 = vsel %vm1308, %v1374, 0.0
        %1406 = vadd.xlane.f32.xlu0 %v1405
        %v1407 = vpop.xlane.xlu0 %1406
        %v1408 = vsel %vm1308, %v1376, 0.0
        %1409 = vadd.xlane.f32.xlu0 %v1408
        %v1410 = vpop.xlane.xlu0 %1409
        %v1411 = vsel %vm1308, %v1378, 0.0
        %1412 = vadd.xlane.f32.xlu0 %v1411
        %v1413 = vpop.xlane.xlu0 %1412
        %v1414 = vsel %vm1308, %v1380, 0.0
        %1415 = vadd.xlane.f32.xlu0 %v1414
        %v1416 = vpop.xlane.xlu0 %1415
        %v1417 = vsel %vm1308, %v1382, 0.0
        %1418 = vadd.xlane.f32.xlu0 %v1417
        %v1419 = vpop.xlane.xlu0 %1418
        %v1420 = vsel %vm1308, %v1384, 0.0
        %1421 = vadd.xlane.f32.xlu0 %v1420
        %v1422 = vpop.xlane.xlu0 %1421
        %v1423 = vsel %vm1308, %v1386, 0.0
        %1424 = vadd.xlane.f32.xlu0 %v1423
        %v1425 = vpop.xlane.xlu0 %1424
        %v1426 = vsel %vm1308, %v1388, 0.0
        %1427 = vadd.xlane.f32.xlu0 %v1426
        %v1428 = vpop.xlane.xlu0 %1427
        %v1429 = vsel %vm1308, %v1390, 0.0
        %1430 = vadd.xlane.f32.xlu0 %v1429
        %v1431 = vpop.xlane.xlu0 %1430
        %v1432 = vsel %vm1308, %v1392, 0.0
        %1433 = vadd.xlane.f32.xlu0 %v1432
        %v1434 = vpop.xlane.xlu0 %1433
        %v1435 = vsel %vm1308, %v1394, 0.0
        %1436 = vadd.xlane.f32.xlu0 %v1435
        %v1437 = vpop.xlane.xlu0 %1436
        %v1438 = vsel %vm1308, %v1396, 0.0
        %1439 = vadd.xlane.f32.xlu0 %v1438
        %v1440 = vpop.xlane.xlu0 %1439
        %v1441 = vsel %vm1308, %v1398, 0.0
        %1442 = vadd.xlane.f32.xlu0 %v1441
        %v1443 = vpop.xlane.xlu0 %1442
        %v1444 = vsel %vm1308, %v1400, 0.0
        %1445 = vadd.xlane.f32.xlu0 %v1444
        %v1446 = vpop.xlane.xlu0 %1445
        %v1447 = vsel %vm1308, %v1402, 0.0
        %1448 = vadd.xlane.f32.xlu0 %v1447
        %v1449 = vpop.xlane.xlu0 %1448
        %v1450 = vsel %vm1308, %v1404, 0.0
        %1451 = vadd.xlane.f32.xlu0 %v1450
        %v1452 = vpop.xlane.xlu0 %1451
        %v1453 = vrcp.pop %v1407
        %v1454 = vmul.f32 1.0, %v1453
        %v1455 = vrcp.pop %v1410
        %v1456 = vmul.f32 1.0, %v1455
        %v1457 = vrcp.pop %v1413
        %v1458 = vmul.f32 1.0, %v1457
        %v1459 = vrcp.pop %v1416
        %v1460 = vmul.f32 1.0, %v1459
        %v1461 = vrcp.pop %v1419
        %v1462 = vmul.f32 1.0, %v1461
        %v1463 = vrcp.pop %v1422
        %v1464 = vmul.f32 1.0, %v1463
        %v1465 = vrcp.pop %v1425
        %v1466 = vmul.f32 1.0, %v1465
        %v1467 = vrcp.pop %v1428
        %v1468 = vmul.f32 1.0, %v1467
        %v1469 = vrcp.pop %v1431
        %v1470 = vmul.f32 1.0, %v1469
        %v1471 = vrcp.pop %v1434
        %v1472 = vmul.f32 1.0, %v1471
        %v1473 = vrcp.pop %v1437
        %v1474 = vmul.f32 1.0, %v1473
        %v1475 = vrcp.pop %v1440
        %v1476 = vmul.f32 1.0, %v1475
        %v1477 = vrcp.pop %v1443
        %v1478 = vmul.f32 1.0, %v1477
        %v1479 = vrcp.pop %v1446
        %v1480 = vmul.f32 1.0, %v1479
        %v1481 = vrcp.pop %v1449
        %v1482 = vmul.f32 1.0, %v1481
        %v1483 = vrcp.pop %v1452
        %v1484 = vmul.f32 1.0, %v1483
        %v1485 = vmul.f32 %v1374, %v1454
        %v1486 = vmul.f32 %v1376, %v1456
        %v1487 = vmul.f32 %v1378, %v1458
        %v1488 = vmul.f32 %v1380, %v1460
        %v1489 = vmul.f32 %v1382, %v1462
        %v1490 = vmul.f32 %v1384, %v1464
        %v1491 = vmul.f32 %v1386, %v1466
        %v1492 = vmul.f32 %v1388, %v1468
        %v1493 = vmul.f32 %v1390, %v1470
        %v1494 = vmul.f32 %v1392, %v1472
        %v1495 = vmul.f32 %v1394, %v1474
        %v1496 = vmul.f32 %v1396, %v1476
        %v1497 = vmul.f32 %v1398, %v1478
        %v1498 = vmul.f32 %v1400, %v1480
        %v1499 = vmul.f32 %v1402, %v1482
        %v1500 = vmul.f32 %v1404, %v1484
        %v1501 = vmax.f32 %v1309, %v1312
        %v1502 = vrot.slane %v1501, 4
        %v1503 = vmax.f32 %v1501, %v1502
        %v1504 = vrot.slane %v1503, 2
        %v1505 = vmax.f32 %v1503, %v1504
        %v1506 = vrot.slane %v1505, 1
        %v1507 = vmax.f32 %v1505, %v1506
        %v1508 = vmax.f32 %v1315, %v1318
        %v1509 = vrot.slane %v1508, 4
        %v1510 = vmax.f32 %v1508, %v1509
        %v1511 = vrot.slane %v1510, 2
        %v1512 = vmax.f32 %v1510, %v1511
        %v1513 = vrot.slane %v1512, 1
        %v1514 = vmax.f32 %v1512, %v1513
        %v1515 = vmax.f32 %v1321, %v1324
        %v1516 = vrot.slane %v1515, 4
        %v1517 = vmax.f32 %v1515, %v1516
        %v1518 = vrot.slane %v1517, 2
        %v1519 = vmax.f32 %v1517, %v1518
        %v1520 = vrot.slane %v1519, 1
        %v1521 = vmax.f32 %v1519, %v1520
        %v1522 = vmax.f32 %v1327, %v1330
        %v1523 = vrot.slane %v1522, 4
        %v1524 = vmax.f32 %v1522, %v1523
        %v1525 = vrot.slane %v1524, 2
        %v1526 = vmax.f32 %v1524, %v1525
        %v1527 = vrot.slane %v1526, 1
        %v1528 = vmax.f32 %v1526, %v1527
        %v1529 = vmax.f32 %v1333, %v1336
        %v1530 = vrot.slane %v1529, 4
        %v1531 = vmax.f32 %v1529, %v1530
        %v1532 = vrot.slane %v1531, 2
        %v1533 = vmax.f32 %v1531, %v1532
        %v1534 = vrot.slane %v1533, 1
        %v1535 = vmax.f32 %v1533, %v1534
        %v1536 = vmax.f32 %v1339, %v1342
        %v1537 = vrot.slane %v1536, 4
        %v1538 = vmax.f32 %v1536, %v1537
        %v1539 = vrot.slane %v1538, 2
        %v1540 = vmax.f32 %v1538, %v1539
        %v1541 = vrot.slane %v1540, 1
        %v1542 = vmax.f32 %v1540, %v1541
        %v1543 = vmax.f32 %v1345, %v1348
        %v1544 = vrot.slane %v1543, 4
        %v1545 = vmax.f32 %v1543, %v1544
        %v1546 = vrot.slane %v1545, 2
        %v1547 = vmax.f32 %v1545, %v1546
        %v1548 = vrot.slane %v1547, 1
        %v1549 = vmax.f32 %v1547, %v1548
        %v1550 = vmax.f32 %v1351, %v1354
        %v1551 = vrot.slane %v1550, 4
        %v1552 = vmax.f32 %v1550, %v1551
        %v1553 = vrot.slane %v1552, 2
        %v1554 = vmax.f32 %v1552, %v1553
        %v1555 = vrot.slane %v1554, 1
        %v1556 = vmax.f32 %v1554, %v1555
        %v1557 = vsub.f32 %v712, %v1507
        %v1558 = vsub.f32 %v717, %v1507
        %v1559 = vsub.f32 %v796, %v1514
        %v1560 = vsub.f32 %v801, %v1514
        %v1561 = vsub.f32 %v880, %v1521
        %v1562 = vsub.f32 %v885, %v1521
        %v1563 = vsub.f32 %v964, %v1528
        %v1564 = vsub.f32 %v969, %v1528
        %v1565 = vsub.f32 %v1048, %v1535
        %v1566 = vsub.f32 %v1053, %v1535
        %v1567 = vsub.f32 %v1132, %v1542
        %v1568 = vsub.f32 %v1137, %v1542
        %v1569 = vsub.f32 %v1216, %v1549
        %v1570 = vsub.f32 %v1221, %v1549
        %v1571 = vsub.f32 %v1300, %v1556
        %v1572 = vsub.f32 %v1305, %v1556
        %v1573 = vmul.f32 %v1557, 1.442695
        %v1574 = vpow.pop %v1573
        %v1575 = vmul.f32 %v1558, 1.442695
        %v1576 = vpow.pop %v1575
        %v1577 = vmul.f32 %v1559, 1.442695
        %v1578 = vpow.pop %v1577
        %v1579 = vmul.f32 %v1560, 1.442695
        %v1580 = vpow.pop %v1579
        %v1581 = vmul.f32 %v1561, 1.442695
        %v1582 = vpow.pop %v1581
        %v1583 = vmul.f32 %v1562, 1.442695
        %v1584 = vpow.pop %v1583
        %v1585 = vmul.f32 %v1563, 1.442695
        %v1586 = vpow.pop %v1585
        %v1587 = vmul.f32 %v1564, 1.442695
        %v1588 = vpow.pop %v1587
        %v1589 = vmul.f32 %v1565, 1.442695
        %v1590 = vpow.pop %v1589
        %v1591 = vmul.f32 %v1566, 1.442695
        %v1592 = vpow.pop %v1591
        %v1593 = vmul.f32 %v1567, 1.442695
        %v1594 = vpow.pop %v1593
        %v1595 = vmul.f32 %v1568, 1.442695
        %v1596 = vpow.pop %v1595
        %v1597 = vmul.f32 %v1569, 1.442695
        %v1598 = vpow.pop %v1597
        %v1599 = vmul.f32 %v1570, 1.442695
        %v1600 = vpow.pop %v1599
        %v1601 = vmul.f32 %v1571, 1.442695
        %v1602 = vpow.pop %v1601
        %v1603 = vmul.f32 %v1572, 1.442695
        %v1604 = vpow.pop %v1603
        %v1605 = vsel %vm1308, %v1574, 0.0
        %v1606 = vsel %vm1308, %v1576, 0.0
        %v1607 = vadd.f32 %v1605, %v1606
        %v1608 = vrot.slane %v1607, 4
        %v1609 = vadd.f32 %v1607, %v1608
        %v1610 = vrot.slane %v1609, 2
        %v1611 = vadd.f32 %v1609, %v1610
        %v1612 = vrot.slane %v1611, 1
        %v1613 = vadd.f32 %v1611, %v1612
        %v1614 = vsel %vm1308, %v1578, 0.0
        %v1615 = vsel %vm1308, %v1580, 0.0
        %v1616 = vadd.f32 %v1614, %v1615
        %v1617 = vrot.slane %v1616, 4
        %v1618 = vadd.f32 %v1616, %v1617
        %v1619 = vrot.slane %v1618, 2
        %v1620 = vadd.f32 %v1618, %v1619
        %v1621 = vrot.slane %v1620, 1
        %v1622 = vadd.f32 %v1620, %v1621
        %v1623 = vsel %vm1308, %v1582, 0.0
        %v1624 = vsel %vm1308, %v1584, 0.0
        %v1625 = vadd.f32 %v1623, %v1624
        %v1626 = vrot.slane %v1625, 4
        %v1627 = vadd.f32 %v1625, %v1626
        %v1628 = vrot.slane %v1627, 2
        %v1629 = vadd.f32 %v1627, %v1628
        %v1630 = vrot.slane %v1629, 1
        %v1631 = vadd.f32 %v1629, %v1630
        %v1632 = vsel %vm1308, %v1586, 0.0
        %v1633 = vsel %vm1308, %v1588, 0.0
        %v1634 = vadd.f32 %v1632, %v1633
        %v1635 = vrot.slane %v1634, 4
        %v1636 = vadd.f32 %v1634, %v1635
        %v1637 = vrot.slane %v1636, 2
        %v1638 = vadd.f32 %v1636, %v1637
        %v1639 = vrot.slane %v1638, 1
        %v1640 = vadd.f32 %v1638, %v1639
        %v1641 = vsel %vm1308, %v1590, 0.0
        %v1642 = vsel %vm1308, %v1592, 0.0
        %v1643 = vadd.f32 %v1641, %v1642
        %v1644 = vrot.slane %v1643, 4
        %v1645 = vadd.f32 %v1643, %v1644
        %v1646 = vrot.slane %v1645, 2
        %v1647 = vadd.f32 %v1645, %v1646
        %v1648 = vrot.slane %v1647, 1
        %v1649 = vadd.f32 %v1647, %v1648
        %v1650 = vsel %vm1308, %v1594, 0.0
        %v1651 = vsel %vm1308, %v1596, 0.0
        %v1652 = vadd.f32 %v1650, %v1651
        %v1653 = vrot.slane %v1652, 4
        %v1654 = vadd.f32 %v1652, %v1653
        %v1655 = vrot.slane %v1654, 2
        %v1656 = vadd.f32 %v1654, %v1655
        %v1657 = vrot.slane %v1656, 1
        %v1658 = vadd.f32 %v1656, %v1657
        %v1659 = vsel %vm1308, %v1598, 0.0
        %v1660 = vsel %vm1308, %v1600, 0.0
        %v1661 = vadd.f32 %v1659, %v1660
        %v1662 = vrot.slane %v1661, 4
        %v1663 = vadd.f32 %v1661, %v1662
        %v1664 = vrot.slane %v1663, 2
        %v1665 = vadd.f32 %v1663, %v1664
        %v1666 = vrot.slane %v1665, 1
        %v1667 = vadd.f32 %v1665, %v1666
        %v1668 = vsel %vm1308, %v1602, 0.0
        %v1669 = vsel %vm1308, %v1604, 0.0
        %v1670 = vadd.f32 %v1668, %v1669
        %v1671 = vrot.slane %v1670, 4
        %v1672 = vadd.f32 %v1670, %v1671
        %v1673 = vrot.slane %v1672, 2
        %v1674 = vadd.f32 %v1672, %v1673
        %v1675 = vrot.slane %v1674, 1
        %v1676 = vadd.f32 %v1674, %v1675
        %v1677 = vrcp.pop %v1613
        %v1678 = vmul.f32 1.0, %v1677
        %v1679 = vrcp.pop %v1622
        %v1680 = vmul.f32 1.0, %v1679
        %v1681 = vrcp.pop %v1631
        %v1682 = vmul.f32 1.0, %v1681
        %v1683 = vrcp.pop %v1640
        %v1684 = vmul.f32 1.0, %v1683
        %v1685 = vrcp.pop %v1649
        %v1686 = vmul.f32 1.0, %v1685
        %v1687 = vrcp.pop %v1658
        %v1688 = vmul.f32 1.0, %v1687
        %v1689 = vrcp.pop %v1667
        %v1690 = vmul.f32 1.0, %v1689
        %v1691 = vrcp.pop %v1676
        %v1692 = vmul.f32 1.0, %v1691
        %v1693 = vmul.f32 %v1574, %v1678
        %v1694 = vmul.f32 %v1576, %v1678
        %v1695 = vmul.f32 %v1578, %v1680
        %v1696 = vmul.f32 %v1580, %v1680
        %v1697 = vmul.f32 %v1582, %v1682
        %v1698 = vmul.f32 %v1584, %v1682
        %v1699 = vmul.f32 %v1586, %v1684
        %v1700 = vmul.f32 %v1588, %v1684
        %v1701 = vmul.f32 %v1590, %v1686
        %v1702 = vmul.f32 %v1592, %v1686
        %v1703 = vmul.f32 %v1594, %v1688
        %v1704 = vmul.f32 %v1596, %v1688
        %v1705 = vmul.f32 %v1598, %v1690
        %v1706 = vmul.f32 %v1600, %v1690
        %v1707 = vmul.f32 %v1602, %v1692
        %v1708 = vmul.f32 %v1604, %v1692
        %vm1709 = vcmask 130048
        %v1711 = vsel %vm1709, %v611, 0
        %v1714 = vsel %vm1709, %v612, 0
        %1716 = vmatprep.subr.mxu0 0.0
        %1717 = vmatpush1.msra.mxu0 %v587
        %1718 = vmatprep.subr.mxu0 0.0
        %1719 = vmatpush1.msra.mxu0 %v588
        %1720 = vmatprep.subr.mxu0 0.0
        %1721 = vmatpush1.msra.mxu0 0.0
        %1722 = vmatprep.subr.mxu0 0.0
        %1723 = vmatpush1.msra.mxu0 0.0
        %1724 = vmatprep.subr.mxu0 0.0
        %1725 = vmatpush1.msra.mxu0 0.0
        %1726 = vmatprep.subr.mxu0 0.0
        %1727 = vmatpush1.msra.mxu0 0.0
        %1728 = vmatprep.subr.mxu0 0.0
        %1729 = vmatpush1.msra.mxu0 0.0
        %1730 = vmatprep.subr.mxu0 0.0
        %1731 = vmatpush1.msra.mxu0 0.0
        %1732 = vmatprep.subr.mxu0 0.0
        %1733 = vmatpush1.msra.mxu0 0.0
        %1734 = vmatprep.subr.mxu0 0.0
        %1735 = vmatpush1.msra.mxu0 0.0
        %1736 = vmatprep.subr.mxu0 0.0
        %1737 = vmatpush1.msra.mxu0 0.0
        %1738 = vmatprep.subr.mxu0 0.0
        %1739 = vmatpush1.msra.mxu0 0.0
        %1740 = vmatprep.subr.mxu0 0.0
        %1741 = vmatpush1.msra.mxu0 0.0
        %1742 = vmatprep.subr.mxu0 0.0
        %1743 = vmatpush1.msra.mxu0 0.0
        %1744 = vmatprep.subr.mxu0 0.0
        %1745 = vmatpush1.msra.mxu0 0.0
        %1746 = vmatprep.subr.mxu0 0.0
        %1747 = vmatpush1.msra.mxu0 0.0
        %1748 = vmatprep.subr.mxu0 0.0
        %1749 = vmatpush1.msra.mxu0 0.0
        %1750 = vmatprep.subr.mxu0 0.0
        %1751 = vmatpush1.msra.mxu0 0.0
        %1752 = vmatprep.subr.mxu0 0.0
        %1753 = vmatpush1.msra.mxu0 0.0
        %1754 = vmatprep.subr.mxu0 0.0
        %1755 = vmatpush1.msra.mxu0 0.0
        %1756 = vmatprep.subr.mxu0 0.0
        %1757 = vmatpush1.msra.mxu0 0.0
        %1758 = vmatprep.subr.mxu0 0.0
        %1759 = vmatpush1.msra.mxu0 0.0
        %1760 = vmatprep.subr.mxu0 0.0
        %1761 = vmatpush1.msra.mxu0 0.0
        %1762 = vmatprep.subr.mxu0 0.0
        %1763 = vmatpush1.msra.mxu0 0.0
        %1764 = vmatprep.subr.mxu0 0.0
        %1765 = vmatpush1.msra.mxu0 0.0
        %1766 = vmatprep.subr.mxu0 0.0
        %1767 = vmatpush1.msra.mxu0 0.0
        %1768 = vmatprep.subr.mxu0 0.0
        %1769 = vmatpush1.msra.mxu0 0.0
        %1770 = vmatprep.subr.mxu0 0.0
        %1771 = vmatpush1.msra.mxu0 0.0
        %1772 = vmatprep.subr.mxu0 0.0
        %1773 = vmatpush1.msra.mxu0 0.0
        %1774 = vmatprep.subr.mxu0 0.0
        %1775 = vmatpush1.msra.mxu0 0.0
        %1776 = vmatprep.subr.mxu0 0.0
        %1777 = vmatpush1.msra.mxu0 0.0
        %1778 = vmatprep.subr.mxu0 0.0
        %1779 = vmatpush1.msra.mxu0 0.0
        %1780 = vmatprep.mubr.f32.mxu0 0.0
        %1781 = vmatmul.mubr.f32.gmra.mrb[0].mxu0 %v1711
        %v1782 = vpop.f32.mrb[0].mxu0
        %v1783 = vadd.f32 0.0, %v1782
        %v1784 = vpop.f32.mrb[0].mxu0
        %1785 = vmatprep.mubr.f32.mxu0 0.0
        %1786 = vmatmul.mubr.f32.gmra.mrb[0].mxu0 %v1714
        %v1787 = vpop.f32.mrb[0].mxu0
        %v1788 = vadd.f32 0.0, %v1787
        %v1789 = vpop.f32.mrb[0].mxu0
        %1790 = vdwg.mxu0
        %v1792 = vsel %vm1709, %v613, 0
        %v1795 = vsel %vm1709, %v614, 0
        %1797 = vmatprep.subr.mxu0 0.0
        %1798 = vmatpush1.msra.mxu0 %v589
        %1799 = vmatprep.subr.mxu0 0.0
        %1800 = vmatpush1.msra.mxu0 %v590
        %1801 = vmatprep.subr.mxu0 0.0
        %1802 = vmatpush1.msra.mxu0 0.0
        %1803 = vmatprep.subr.mxu0 0.0
        %1804 = vmatpush1.msra.mxu0 0.0
        %1805 = vmatprep.subr.mxu0 0.0
        %1806 = vmatpush1.msra.mxu0 0.0
        %1807 = vmatprep.subr.mxu0 0.0
        %1808 = vmatpush1.msra.mxu0 0.0
        %1809 = vmatprep.subr.mxu0 0.0
        %1810 = vmatpush1.msra.mxu0 0.0
        %1811 = vmatprep.subr.mxu0 0.0
        %1812 = vmatpush1.msra.mxu0 0.0
        %1813 = vmatprep.subr.mxu0 0.0
        %1814 = vmatpush1.msra.mxu0 0.0
        %1815 = vmatprep.subr.mxu0 0.0
        %1816 = vmatpush1.msra.mxu0 0.0
        %1817 = vmatprep.subr.mxu0 0.0
        %1818 = vmatpush1.msra.mxu0 0.0
        %1819 = vmatprep.subr.mxu0 0.0
        %1820 = vmatpush1.msra.mxu0 0.0
        %1821 = vmatprep.subr.mxu0 0.0
        %1822 = vmatpush1.msra.mxu0 0.0
        %1823 = vmatprep.subr.mxu0 0.0
        %1824 = vmatpush1.msra.mxu0 0.0
        %1825 = vmatprep.subr.mxu0 0.0
        %1826 = vmatpush1.msra.mxu0 0.0
        %1827 = vmatprep.subr.mxu0 0.0
        %1828 = vmatpush1.msra.mxu0 0.0
        %1829 = vmatprep.subr.mxu0 0.0
        %1830 = vmatpush1.msra.mxu0 0.0
        %1831 = vmatprep.subr.mxu0 0.0
        %1832 = vmatpush1.msra.mxu0 0.0
        %1833 = vmatprep.subr.mxu0 0.0
        %1834 = vmatpush1.msra.mxu0 0.0
        %1835 = vmatprep.subr.mxu0 0.0
        %1836 = vmatpush1.msra.mxu0 0.0
        %1837 = vmatprep.subr.mxu0 0.0
        %1838 = vmatpush1.msra.mxu0 0.0
        %1839 = vmatprep.subr.mxu0 0.0
        %1840 = vmatpush1.msra.mxu0 0.0
        %1841 = vmatprep.subr.mxu0 0.0
        %1842 = vmatpush1.msra.mxu0 0.0
        %1843 = vmatprep.subr.mxu0 0.0
        %1844 = vmatpush1.msra.mxu0 0.0
        %1845 = vmatprep.subr.mxu0 0.0
        %1846 = vmatpush1.msra.mxu0 0.0
        %1847 = vmatprep.subr.mxu0 0.0
        %1848 = vmatpush1.msra.mxu0 0.0
        %1849 = vmatprep.subr.mxu0 0.0
        %1850 = vmatpush1.msra.mxu0 0.0
        %1851 = vmatprep.subr.mxu0 0.0
        %1852 = vmatpush1.msra.mxu0 0.0
        %1853 = vmatprep.subr.mxu0 0.0
        %1854 = vmatpush1.msra.mxu0 0.0
        %1855 = vmatprep.subr.mxu0 0.0
        %1856 = vmatpush1.msra.mxu0 0.0
        %1857 = vmatprep.subr.mxu0 0.0
        %1858 = vmatpush1.msra.mxu0 0.0
        %1859 = vmatprep.subr.mxu0 0.0
        %1860 = vmatpush1.msra.mxu0 0.0
        %1861 = vmatprep.mubr.f32.mxu0 0.0
        %1862 = vmatmul.mubr.f32.gmra.mrb[0].mxu0 %v1792
        %v1863 = vpop.f32.mrb[0].mxu0
        %v1864 = vadd.f32 0.0, %v1863
        %v1865 = vpop.f32.mrb[0].mxu0
        %1866 = vmatprep.mubr.f32.mxu0 0.0
        %1867 = vmatmul.mubr.f32.gmra.mrb[0].mxu0 %v1795
        %v1868 = vpop.f32.mrb[0].mxu0
        %v1869 = vadd.f32 0.0, %v1868
        %v1870 = vpop.f32.mrb[0].mxu0
        %1871 = vdwg.mxu0
        %v1873 = vsel %vm1709, %v615, 0
        %v1876 = vsel %vm1709, %v616, 0
        %1878 = vmatprep.subr.mxu0 0.0
        %1879 = vmatpush1.msra.mxu0 %v591
        %1880 = vmatprep.subr.mxu0 0.0
        %1881 = vmatpush1.msra.mxu0 %v592
        %1882 = vmatprep.subr.mxu0 0.0
        %1883 = vmatpush1.msra.mxu0 0.0
        %1884 = vmatprep.subr.mxu0 0.0
        %1885 = vmatpush1.msra.mxu0 0.0
        %1886 = vmatprep.subr.mxu0 0.0
        %1887 = vmatpush1.msra.mxu0 0.0
        %1888 = vmatprep.subr.mxu0 0.0
        %1889 = vmatpush1.msra.mxu0 0.0
        %1890 = vmatprep.subr.mxu0 0.0
        %1891 = vmatpush1.msra.mxu0 0.0
        %1892 = vmatprep.subr.mxu0 0.0
        %1893 = vmatpush1.msra.mxu0 0.0
        %1894 = vmatprep.subr.mxu0 0.0
        %1895 = vmatpush1.msra.mxu0 0.0
        %1896 = vmatprep.subr.mxu0 0.0
        %1897 = vmatpush1.msra.mxu0 0.0
        %1898 = vmatprep.subr.mxu0 0.0
        %1899 = vmatpush1.msra.mxu0 0.0
        %1900 = vmatprep.subr.mxu0 0.0
        %1901 = vmatpush1.msra.mxu0 0.0
        %1902 = vmatprep.subr.mxu0 0.0
        %1903 = vmatpush1.msra.mxu0 0.0
        %1904 = vmatprep.subr.mxu0 0.0
        %1905 = vmatpush1.msra.mxu0 0.0
        %1906 = vmatprep.subr.mxu0 0.0
        %1907 = vmatpush1.msra.mxu0 0.0
        %1908 = vmatprep.subr.mxu0 0.0
        %1909 = vmatpush1.msra.mxu0 0.0
        %1910 = vmatprep.subr.mxu0 0.0
        %1911 = vmatpush1.msra.mxu0 0.0
        %1912 = vmatprep.subr.mxu0 0.0
        %1913 = vmatpush1.msra.mxu0 0.0
        %1914 = vmatprep.subr.mxu0 0.0
        %1915 = vmatpush1.msra.mxu0 0.0
        %1916 = vmatprep.subr.mxu0 0.0
        %1917 = vmatpush1.msra.mxu0 0.0
        %1918 = vmatprep.subr.mxu0 0.0
        %1919 = vmatpush1.msra.mxu0 0.0
        %1920 = vmatprep.subr.mxu0 0.0
        %1921 = vmatpush1.msra.mxu0 0.0
        %1922 = vmatprep.subr.mxu0 0.0
        %1923 = vmatpush1.msra.mxu0 0.0
        %1924 = vmatprep.subr.mxu0 0.0
        %1925 = vmatpush1.msra.mxu0 0.0
        %1926 = vmatprep.subr.mxu0 0.0
        %1927 = vmatpush1.msra.mxu0 0.0
        %1928 = vmatprep.subr.mxu0 0.0
        %1929 = vmatpush1.msra.mxu0 0.0
        %1930 = vmatprep.subr.mxu0 0.0
        %1931 = vmatpush1.msra.mxu0 0.0
        %1932 = vmatprep.subr.mxu0 0.0
        %1933 = vmatpush1.msra.mxu0 0.0
        %1934 = vmatprep.subr.mxu0 0.0
        %1935 = vmatpush1.msra.mxu0 0.0
        %1936 = vmatprep.subr.mxu0 0.0
        %1937 = vmatpush1.msra.mxu0 0.0
        %1938 = vmatprep.subr.mxu0 0.0
        %1939 = vmatpush1.msra.mxu0 0.0
        %1940 = vmatprep.subr.mxu0 0.0
        %1941 = vmatpush1.msra.mxu0 0.0
        %1942 = vmatprep.mubr.f32.mxu0 0.0
        %1943 = vmatmul.mubr.f32.gmra.mrb[0].mxu0 %v1873
        %v1944 = vpop.f32.mrb[0].mxu0
        %v1945 = vadd.f32 0.0, %v1944
        %v1946 = vpop.f32.mrb[0].mxu0
        %1947 = vmatprep.mubr.f32.mxu0 0.0
        %1948 = vmatmul.mubr.f32.gmra.mrb[0].mxu0 %v1876
        %v1949 = vpop.f32.mrb[0].mxu0
        %v1950 = vadd.f32 0.0, %v1949
        %v1951 = vpop.f32.mrb[0].mxu0
        %1952 = vdwg.mxu0
        %v1954 = vsel %vm1709, %v617, 0
        %v1957 = vsel %vm1709, %v618, 0
        %1959 = vmatprep.subr.mxu0 0.0
        %1960 = vmatpush1.msra.mxu0 %v593
        %1961 = vmatprep.subr.mxu0 0.0
        %1962 = vmatpush1.msra.mxu0 %v594
        %1963 = vmatprep.subr.mxu0 0.0
        %1964 = vmatpush1.msra.mxu0 0.0
        %1965 = vmatprep.subr.mxu0 0.0
        %1966 = vmatpush1.msra.mxu0 0.0
        %1967 = vmatprep.subr.mxu0 0.0
        %1968 = vmatpush1.msra.mxu0 0.0
        %1969 = vmatprep.subr.mxu0 0.0
        %1970 = vmatpush1.msra.mxu0 0.0
        %1971 = vmatprep.subr.mxu0 0.0
        %1972 = vmatpush1.msra.mxu0 0.0
        %1973 = vmatprep.subr.mxu0 0.0
        %1974 = vmatpush1.msra.mxu0 0.0
        %1975 = vmatprep.subr.mxu0 0.0
        %1976 = vmatpush1.msra.mxu0 0.0
        %1977 = vmatprep.subr.mxu0 0.0
        %1978 = vmatpush1.msra.mxu0 0.0
        %1979 = vmatprep.subr.mxu0 0.0
        %1980 = vmatpush1.msra.mxu0 0.0
        %1981 = vmatprep.subr.mxu0 0.0
        %1982 = vmatpush1.msra.mxu0 0.0
        %1983 = vmatprep.subr.mxu0 0.0
        %1984 = vmatpush1.msra.mxu0 0.0
        %1985 = vmatprep.subr.mxu0 0.0
        %1986 = vmatpush1.msra.mxu0 0.0
        %1987 = vmatprep.subr.mxu0 0.0
        %1988 = vmatpush1.msra.mxu0 0.0
        %1989 = vmatprep.subr.mxu0 0.0
        %1990 = vmatpush1.msra.mxu0 0.0
        %1991 = vmatprep.subr.mxu0 0.0
        %1992 = vmatpush1.msra.mxu0 0.0
        %1993 = vmatprep.subr.mxu0 0.0
        %1994 = vmatpush1.msra.mxu0 0.0
        %1995 = vmatprep.subr.mxu0 0.0
        %1996 = vmatpush1.msra.mxu0 0.0
        %1997 = vmatprep.subr.mxu0 0.0
        %1998 = vmatpush1.msra.mxu0 0.0
        %1999 = vmatprep.subr.mxu0 0.0
        %2000 = vmatpush1.msra.mxu0 0.0
        %2001 = vmatprep.subr.mxu0 0.0
        %2002 = vmatpush1.msra.mxu0 0.0
        %2003 = vmatprep.subr.mxu0 0.0
        %2004 = vmatpush1.msra.mxu0 0.0
        %2005 = vmatprep.subr.mxu0 0.0
        %2006 = vmatpush1.msra.mxu0 0.0
        %2007 = vmatprep.subr.mxu0 0.0
        %2008 = vmatpush1.msra.mxu0 0.0
        %2009 = vmatprep.subr.mxu0 0.0
        %2010 = vmatpush1.msra.mxu0 0.0
        %2011 = vmatprep.subr.mxu0 0.0
        %2012 = vmatpush1.msra.mxu0 0.0
        %2013 = vmatprep.subr.mxu0 0.0
        %2014 = vmatpush1.msra.mxu0 0.0
        %2015 = vmatprep.subr.mxu0 0.0
        %2016 = vmatpush1.msra.mxu0 0.0
        %2017 = vmatprep.subr.mxu0 0.0
        %2018 = vmatpush1.msra.mxu0 0.0
        %2019 = vmatprep.subr.mxu0 0.0
        %2020 = vmatpush1.msra.mxu0 0.0
        %2021 = vmatprep.subr.mxu0 0.0
        %2022 = vmatpush1.msra.mxu0 0.0
        %2023 = vmatprep.mubr.f32.mxu0 0.0
        %2024 = vmatmul.mubr.f32.gmra.mrb[0].mxu0 %v1954
        %v2025 = vpop.f32.mrb[0].mxu0
        %v2026 = vadd.f32 0.0, %v2025
        %v2027 = vpop.f32.mrb[0].mxu0
        %2028 = vmatprep.mubr.f32.mxu0 0.0
        %2029 = vmatmul.mubr.f32.gmra.mrb[0].mxu0 %v1957
        %v2030 = vpop.f32.mrb[0].mxu0
        %v2031 = vadd.f32 0.0, %v2030
        %v2032 = vpop.f32.mrb[0].mxu0
        %2033 = vdwg.mxu0
        %v2035 = vsel %vm1709, %v619, 0
        %v2038 = vsel %vm1709, %v620, 0
        %2040 = vmatprep.subr.mxu0 0.0
        %2041 = vmatpush1.msra.mxu0 %v595
        %2042 = vmatprep.subr.mxu0 0.0
        %2043 = vmatpush1.msra.mxu0 %v596
        %2044 = vmatprep.subr.mxu0 0.0
        %2045 = vmatpush1.msra.mxu0 0.0
        %2046 = vmatprep.subr.mxu0 0.0
        %2047 = vmatpush1.msra.mxu0 0.0
        %2048 = vmatprep.subr.mxu0 0.0
        %2049 = vmatpush1.msra.mxu0 0.0
        %2050 = vmatprep.subr.mxu0 0.0
        %2051 = vmatpush1.msra.mxu0 0.0
        %2052 = vmatprep.subr.mxu0 0.0
        %2053 = vmatpush1.msra.mxu0 0.0
        %2054 = vmatprep.subr.mxu0 0.0
        %2055 = vmatpush1.msra.mxu0 0.0
        %2056 = vmatprep.subr.mxu0 0.0
        %2057 = vmatpush1.msra.mxu0 0.0
        %2058 = vmatprep.subr.mxu0 0.0
        %2059 = vmatpush1.msra.mxu0 0.0
        %2060 = vmatprep.subr.mxu0 0.0
        %2061 = vmatpush1.msra.mxu0 0.0
        %2062 = vmatprep.subr.mxu0 0.0
        %2063 = vmatpush1.msra.mxu0 0.0
        %2064 = vmatprep.subr.mxu0 0.0
        %2065 = vmatpush1.msra.mxu0 0.0
        %2066 = vmatprep.subr.mxu0 0.0
        %2067 = vmatpush1.msra.mxu0 0.0
        %2068 = vmatprep.subr.mxu0 0.0
        %2069 = vmatpush1.msra.mxu0 0.0
        %2070 = vmatprep.subr.mxu0 0.0
        %2071 = vmatpush1.msra.mxu0 0.0
        %2072 = vmatprep.subr.mxu0 0.0
        %2073 = vmatpush1.msra.mxu0 0.0
        %2074 = vmatprep.subr.mxu0 0.0
        %2075 = vmatpush1.msra.mxu0 0.0
        %2076 = vmatprep.subr.mxu0 0.0
        %2077 = vmatpush1.msra.mxu0 0.0
        %2078 = vmatprep.subr.mxu0 0.0
        %2079 = vmatpush1.msra.mxu0 0.0
        %2080 = vmatprep.subr.mxu0 0.0
        %2081 = vmatpush1.msra.mxu0 0.0
        %2082 = vmatprep.subr.mxu0 0.0
        %2083 = vmatpush1.msra.mxu0 0.0
        %2084 = vmatprep.subr.mxu0 0.0
        %2085 = vmatpush1.msra.mxu0 0.0
        %2086 = vmatprep.subr.mxu0 0.0
        %2087 = vmatpush1.msra.mxu0 0.0
        %2088 = vmatprep.subr.mxu0 0.0
        %2089 = vmatpush1.msra.mxu0 0.0
        %2090 = vmatprep.subr.mxu0 0.0
        %2091 = vmatpush1.msra.mxu0 0.0
        %2092 = vmatprep.subr.mxu0 0.0
        %2093 = vmatpush1.msra.mxu0 0.0
        %2094 = vmatprep.subr.mxu0 0.0
        %2095 = vmatpush1.msra.mxu0 0.0
        %2096 = vmatprep.subr.mxu0 0.0
        %2097 = vmatpush1.msra.mxu0 0.0
        %2098 = vmatprep.subr.mxu0 0.0
        %2099 = vmatpush1.msra.mxu0 0.0
        %2100 = vmatprep.subr.mxu0 0.0
        %2101 = vmatpush1.msra.mxu0 0.0
        %2102 = vmatprep.subr.mxu0 0.0
        %2103 = vmatpush1.msra.mxu0 0.0
        %2104 = vmatprep.mubr.f32.mxu0 0.0
        %2105 = vmatmul.mubr.f32.gmra.mrb[0].mxu0 %v2035
        %v2106 = vpop.f32.mrb[0].mxu0
        %v2107 = vadd.f32 0.0, %v2106
        %v2108 = vpop.f32.mrb[0].mxu0
        %2109 = vmatprep.mubr.f32.mxu0 0.0
        %2110 = vmatmul.mubr.f32.gmra.mrb[0].mxu0 %v2038
        %v2111 = vpop.f32.mrb[0].mxu0
        %v2112 = vadd.f32 0.0, %v2111
        %v2113 = vpop.f32.mrb[0].mxu0
        %2114 = vdwg.mxu0
        %v2116 = vsel %vm1709, %v621, 0
        %v2119 = vsel %vm1709, %v622, 0
        %2121 = vmatprep.subr.mxu0 0.0
        %2122 = vmatpush1.msra.mxu0 %v597
        %2123 = vmatprep.subr.mxu0 0.0
        %2124 = vmatpush1.msra.mxu0 %v598
        %2125 = vmatprep.subr.mxu0 0.0
        %2126 = vmatpush1.msra.mxu0 0.0
        %2127 = vmatprep.subr.mxu0 0.0
        %2128 = vmatpush1.msra.mxu0 0.0
        %2129 = vmatprep.subr.mxu0 0.0
        %2130 = vmatpush1.msra.mxu0 0.0
        %2131 = vmatprep.subr.mxu0 0.0
        %2132 = vmatpush1.msra.mxu0 0.0
        %2133 = vmatprep.subr.mxu0 0.0
        %2134 = vmatpush1.msra.mxu0 0.0
        %2135 = vmatprep.subr.mxu0 0.0
        %2136 = vmatpush1.msra.mxu0 0.0
        %2137 = vmatprep.subr.mxu0 0.0
        %2138 = vmatpush1.msra.mxu0 0.0
        %2139 = vmatprep.subr.mxu0 0.0
        %2140 = vmatpush1.msra.mxu0 0.0
        %2141 = vmatprep.subr.mxu0 0.0
        %2142 = vmatpush1.msra.mxu0 0.0
        %2143 = vmatprep.subr.mxu0 0.0
        %2144 = vmatpush1.msra.mxu0 0.0
        %2145 = vmatprep.subr.mxu0 0.0
        %2146 = vmatpush1.msra.mxu0 0.0
        %2147 = vmatprep.subr.mxu0 0.0
        %2148 = vmatpush1.msra.mxu0 0.0
        %2149 = vmatprep.subr.mxu0 0.0
        %2150 = vmatpush1.msra.mxu0 0.0
        %2151 = vmatprep.subr.mxu0 0.0
        %2152 = vmatpush1.msra.mxu0 0.0
        %2153 = vmatprep.subr.mxu0 0.0
        %2154 = vmatpush1.msra.mxu0 0.0
        %2155 = vmatprep.subr.mxu0 0.0
        %2156 = vmatpush1.msra.mxu0 0.0
        %2157 = vmatprep.subr.mxu0 0.0
        %2158 = vmatpush1.msra.mxu0 0.0
        %2159 = vmatprep.subr.mxu0 0.0
        %2160 = vmatpush1.msra.mxu0 0.0
        %2161 = vmatprep.subr.mxu0 0.0
        %2162 = vmatpush1.msra.mxu0 0.0
        %2163 = vmatprep.subr.mxu0 0.0
        %2164 = vmatpush1.msra.mxu0 0.0
        %2165 = vmatprep.subr.mxu0 0.0
        %2166 = vmatpush1.msra.mxu0 0.0
        %2167 = vmatprep.subr.mxu0 0.0
        %2168 = vmatpush1.msra.mxu0 0.0
        %2169 = vmatprep.subr.mxu0 0.0
        %2170 = vmatpush1.msra.mxu0 0.0
        %2171 = vmatprep.subr.mxu0 0.0
        %2172 = vmatpush1.msra.mxu0 0.0
        %2173 = vmatprep.subr.mxu0 0.0
        %2174 = vmatpush1.msra.mxu0 0.0
        %2175 = vmatprep.subr.mxu0 0.0
        %2176 = vmatpush1.msra.mxu0 0.0
        %2177 = vmatprep.subr.mxu0 0.0
        %2178 = vmatpush1.msra.mxu0 0.0
        %2179 = vmatprep.subr.mxu0 0.0
        %2180 = vmatpush1.msra.mxu0 0.0
        %2181 = vmatprep.subr.mxu0 0.0
        %2182 = vmatpush1.msra.mxu0 0.0
        %2183 = vmatprep.subr.mxu0 0.0
        %2184 = vmatpush1.msra.mxu0 0.0
        %2185 = vmatprep.mubr.f32.mxu0 0.0
        %2186 = vmatmul.mubr.f32.gmra.mrb[0].mxu0 %v2116
        %v2187 = vpop.f32.mrb[0].mxu0
        %v2188 = vadd.f32 0.0, %v2187
        %v2189 = vpop.f32.mrb[0].mxu0
        %2190 = vmatprep.mubr.f32.mxu0 0.0
        %2191 = vmatmul.mubr.f32.gmra.mrb[0].mxu0 %v2119
        %v2192 = vpop.f32.mrb[0].mxu0
        %v2193 = vadd.f32 0.0, %v2192
        %v2194 = vpop.f32.mrb[0].mxu0
        %2195 = vdwg.mxu0
        %v2197 = vsel %vm1709, %v623, 0
        %v2200 = vsel %vm1709, %v624, 0
        %2202 = vmatprep.subr.mxu0 0.0
        %2203 = vmatpush1.msra.mxu0 %v599
        %2204 = vmatprep.subr.mxu0 0.0
        %2205 = vmatpush1.msra.mxu0 %v600
        %2206 = vmatprep.subr.mxu0 0.0
        %2207 = vmatpush1.msra.mxu0 0.0
        %2208 = vmatprep.subr.mxu0 0.0
        %2209 = vmatpush1.msra.mxu0 0.0
        %2210 = vmatprep.subr.mxu0 0.0
        %2211 = vmatpush1.msra.mxu0 0.0
        %2212 = vmatprep.subr.mxu0 0.0
        %2213 = vmatpush1.msra.mxu0 0.0
        %2214 = vmatprep.subr.mxu0 0.0
        %2215 = vmatpush1.msra.mxu0 0.0
        %2216 = vmatprep.subr.mxu0 0.0
        %2217 = vmatpush1.msra.mxu0 0.0
        %2218 = vmatprep.subr.mxu0 0.0
        %2219 = vmatpush1.msra.mxu0 0.0
        %2220 = vmatprep.subr.mxu0 0.0
        %2221 = vmatpush1.msra.mxu0 0.0
        %2222 = vmatprep.subr.mxu0 0.0
        %2223 = vmatpush1.msra.mxu0 0.0
        %2224 = vmatprep.subr.mxu0 0.0
        %2225 = vmatpush1.msra.mxu0 0.0
        %2226 = vmatprep.subr.mxu0 0.0
        %2227 = vmatpush1.msra.mxu0 0.0
        %2228 = vmatprep.subr.mxu0 0.0
        %2229 = vmatpush1.msra.mxu0 0.0
        %2230 = vmatprep.subr.mxu0 0.0
        %2231 = vmatpush1.msra.mxu0 0.0
        %2232 = vmatprep.subr.mxu0 0.0
        %2233 = vmatpush1.msra.mxu0 0.0
        %2234 = vmatprep.subr.mxu0 0.0
        %2235 = vmatpush1.msra.mxu0 0.0
        %2236 = vmatprep.subr.mxu0 0.0
        %2237 = vmatpush1.msra.mxu0 0.0
        %2238 = vmatprep.subr.mxu0 0.0
        %2239 = vmatpush1.msra.mxu0 0.0
        %2240 = vmatprep.subr.mxu0 0.0
        %2241 = vmatpush1.msra.mxu0 0.0
        %2242 = vmatprep.subr.mxu0 0.0
        %2243 = vmatpush1.msra.mxu0 0.0
        %2244 = vmatprep.subr.mxu0 0.0
        %2245 = vmatpush1.msra.mxu0 0.0
        %2246 = vmatprep.subr.mxu0 0.0
        %2247 = vmatpush1.msra.mxu0 0.0
        %2248 = vmatprep.subr.mxu0 0.0
        %2249 = vmatpush1.msra.mxu0 0.0
        %2250 = vmatprep.subr.mxu0 0.0
        %2251 = vmatpush1.msra.mxu0 0.0
        %2252 = vmatprep.subr.mxu0 0.0
        %2253 = vmatpush1.msra.mxu0 0.0
        %2254 = vmatprep.subr.mxu0 0.0
        %2255 = vmatpush1.msra.mxu0 0.0
        %2256 = vmatprep.subr.mxu0 0.0
        %2257 = vmatpush1.msra.mxu0 0.0
        %2258 = vmatprep.subr.mxu0 0.0
        %2259 = vmatpush1.msra.mxu0 0.0
        %2260 = vmatprep.subr.mxu0 0.0
        %2261 = vmatpush1.msra.mxu0 0.0
        %2262 = vmatprep.subr.mxu0 0.0
        %2263 = vmatpush1.msra.mxu0 0.0
        %2264 = vmatprep.subr.mxu0 0.0
        %2265 = vmatpush1.msra.mxu0 0.0
        %2266 = vmatprep.mubr.f32.mxu0 0.0
        %2267 = vmatmul.mubr.f32.gmra.mrb[0].mxu0 %v2197
        %v2268 = vpop.f32.mrb[0].mxu0
        %v2269 = vadd.f32 0.0, %v2268
        %v2270 = vpop.f32.mrb[0].mxu0
        %2271 = vmatprep.mubr.f32.mxu0 0.0
        %2272 = vmatmul.mubr.f32.gmra.mrb[0].mxu0 %v2200
        %v2273 = vpop.f32.mrb[0].mxu0
        %v2274 = vadd.f32 0.0, %v2273
        %v2275 = vpop.f32.mrb[0].mxu0
        %2276 = vdwg.mxu0
        %v2278 = vsel %vm1709, %v625, 0
        %v2281 = vsel %vm1709, %v626, 0
        %2283 = vmatprep.subr.mxu0 0.0
        %2284 = vmatpush1.msra.mxu0 %v601
        %2285 = vmatprep.subr.mxu0 0.0
        %2286 = vmatpush1.msra.mxu0 %v602
        %2287 = vmatprep.subr.mxu0 0.0
        %2288 = vmatpush1.msra.mxu0 0.0
        %2289 = vmatprep.subr.mxu0 0.0
        %2290 = vmatpush1.msra.mxu0 0.0
        %2291 = vmatprep.subr.mxu0 0.0
        %2292 = vmatpush1.msra.mxu0 0.0
        %2293 = vmatprep.subr.mxu0 0.0
        %2294 = vmatpush1.msra.mxu0 0.0
        %2295 = vmatprep.subr.mxu0 0.0
        %2296 = vmatpush1.msra.mxu0 0.0
        %2297 = vmatprep.subr.mxu0 0.0
        %2298 = vmatpush1.msra.mxu0 0.0
        %2299 = vmatprep.subr.mxu0 0.0
        %2300 = vmatpush1.msra.mxu0 0.0
        %2301 = vmatprep.subr.mxu0 0.0
        %2302 = vmatpush1.msra.mxu0 0.0
        %2303 = vmatprep.subr.mxu0 0.0
        %2304 = vmatpush1.msra.mxu0 0.0
        %2305 = vmatprep.subr.mxu0 0.0
        %2306 = vmatpush1.msra.mxu0 0.0
        %2307 = vmatprep.subr.mxu0 0.0
        %2308 = vmatpush1.msra.mxu0 0.0
        %2309 = vmatprep.subr.mxu0 0.0
        %2310 = vmatpush1.msra.mxu0 0.0
        %2311 = vmatprep.subr.mxu0 0.0
        %2312 = vmatpush1.msra.mxu0 0.0
        %2313 = vmatprep.subr.mxu0 0.0
        %2314 = vmatpush1.msra.mxu0 0.0
        %2315 = vmatprep.subr.mxu0 0.0
        %2316 = vmatpush1.msra.mxu0 0.0
        %2317 = vmatprep.subr.mxu0 0.0
        %2318 = vmatpush1.msra.mxu0 0.0
        %2319 = vmatprep.subr.mxu0 0.0
        %2320 = vmatpush1.msra.mxu0 0.0
        %2321 = vmatprep.subr.mxu0 0.0
        %2322 = vmatpush1.msra.mxu0 0.0
        %2323 = vmatprep.subr.mxu0 0.0
        %2324 = vmatpush1.msra.mxu0 0.0
        %2325 = vmatprep.subr.mxu0 0.0
        %2326 = vmatpush1.msra.mxu0 0.0
        %2327 = vmatprep.subr.mxu0 0.0
        %2328 = vmatpush1.msra.mxu0 0.0
        %2329 = vmatprep.subr.mxu0 0.0
        %2330 = vmatpush1.msra.mxu0 0.0
        %2331 = vmatprep.subr.mxu0 0.0
        %2332 = vmatpush1.msra.mxu0 0.0
        %2333 = vmatprep.subr.mxu0 0.0
        %2334 = vmatpush1.msra.mxu0 0.0
        %2335 = vmatprep.subr.mxu0 0.0
        %2336 = vmatpush1.msra.mxu0 0.0
        %2337 = vmatprep.subr.mxu0 0.0
        %2338 = vmatpush1.msra.mxu0 0.0
        %2339 = vmatprep.subr.mxu0 0.0
        %2340 = vmatpush1.msra.mxu0 0.0
        %2341 = vmatprep.subr.mxu0 0.0
        %2342 = vmatpush1.msra.mxu0 0.0
        %2343 = vmatprep.subr.mxu0 0.0
        %2344 = vmatpush1.msra.mxu0 0.0
        %2345 = vmatprep.subr.mxu0 0.0
        %2346 = vmatpush1.msra.mxu0 0.0
        %2347 = vmatprep.mubr.f32.mxu0 0.0
        %2348 = vmatmul.mubr.f32.gmra.mrb[0].mxu0 %v2278
        %v2349 = vpop.f32.mrb[0].mxu0
        %v2350 = vadd.f32 0.0, %v2349
        %v2351 = vpop.f32.mrb[0].mxu0
        %2352 = vmatprep.mubr.f32.mxu0 0.0
        %2353 = vmatmul.mubr.f32.gmra.mrb[0].mxu0 %v2281
        %v2354 = vpop.f32.mrb[0].mxu0
        %v2355 = vadd.f32 0.0, %v2354
        %v2356 = vpop.f32.mrb[0].mxu0
        %2357 = vdwg.mxu0
        %v2359 = vsel %vm1308, %v627, 0
        %2361 = vmatprep.subr.mxu0 0.0
        %2362 = vmatpush1.msra.mxu0 %v603
        %2363 = vmatprep.subr.mxu0 0.0
        %2364 = vmatpush1.msra.mxu0 0.0
        %2365 = vmatprep.subr.mxu0 0.0
        %2366 = vmatpush1.msra.mxu0 0.0
        %2367 = vmatprep.subr.mxu0 0.0
        %2368 = vmatpush1.msra.mxu0 0.0
        %2369 = vmatprep.subr.mxu0 0.0
        %2370 = vmatpush1.msra.mxu0 0.0
        %2371 = vmatprep.subr.mxu0 0.0
        %2372 = vmatpush1.msra.mxu0 0.0
        %2373 = vmatprep.subr.mxu0 0.0
        %2374 = vmatpush1.msra.mxu0 0.0
        %2375 = vmatprep.subr.mxu0 0.0
        %2376 = vmatpush1.msra.mxu0 0.0
        %2377 = vmatprep.subr.mxu0 0.0
        %2378 = vmatpush1.msra.mxu0 0.0
        %2379 = vmatprep.subr.mxu0 0.0
        %2380 = vmatpush1.msra.mxu0 0.0
        %2381 = vmatprep.subr.mxu0 0.0
        %2382 = vmatpush1.msra.mxu0 0.0
        %2383 = vmatprep.subr.mxu0 0.0
        %2384 = vmatpush1.msra.mxu0 0.0
        %2385 = vmatprep.subr.mxu0 0.0
        %2386 = vmatpush1.msra.mxu0 0.0
        %2387 = vmatprep.subr.mxu0 0.0
        %2388 = vmatpush1.msra.mxu0 0.0
        %2389 = vmatprep.subr.mxu0 0.0
        %2390 = vmatpush1.msra.mxu0 0.0
        %2391 = vmatprep.subr.mxu0 0.0
        %2392 = vmatpush1.msra.mxu0 0.0
        %2393 = vmatprep.subr.mxu0 0.0
        %2394 = vmatpush1.msra.mxu0 0.0
        %2395 = vmatprep.subr.mxu0 0.0
        %2396 = vmatpush1.msra.mxu0 0.0
        %2397 = vmatprep.subr.mxu0 0.0
        %2398 = vmatpush1.msra.mxu0 0.0
        %2399 = vmatprep.subr.mxu0 0.0
        %2400 = vmatpush1.msra.mxu0 0.0
        %2401 = vmatprep.subr.mxu0 0.0
        %2402 = vmatpush1.msra.mxu0 0.0
        %2403 = vmatprep.subr.mxu0 0.0
        %2404 = vmatpush1.msra.mxu0 0.0
        %2405 = vmatprep.subr.mxu0 0.0
        %2406 = vmatpush1.msra.mxu0 0.0
        %2407 = vmatprep.subr.mxu0 0.0
        %2408 = vmatpush1.msra.mxu0 0.0
        %2409 = vmatprep.subr.mxu0 0.0
        %2410 = vmatpush1.msra.mxu0 0.0
        %2411 = vmatprep.subr.mxu0 0.0
        %2412 = vmatpush1.msra.mxu0 0.0
        %2413 = vmatprep.subr.mxu0 0.0
        %2414 = vmatpush1.msra.mxu0 0.0
        %2415 = vmatprep.subr.mxu0 0.0
        %2416 = vmatpush1.msra.mxu0 0.0
        %2417 = vmatprep.subr.mxu0 0.0
        %2418 = vmatpush1.msra.mxu0 0.0
        %2419 = vmatprep.subr.mxu0 0.0
        %2420 = vmatpush1.msra.mxu0 0.0
        %2421 = vmatprep.subr.mxu0 0.0
        %2422 = vmatpush1.msra.mxu0 0.0
        %2423 = vmatprep.subr.mxu0 0.0
        %2424 = vmatpush1.msra.mxu0 0.0
        %2425 = vmatprep.mubr.f32.mxu0 0.0
        %2426 = vmatmul.mubr.f32.gmra.mrb[0].mxu0 %v2359
        %v2427 = vpop.f32.mrb[0].mxu0
        %v2428 = vadd.f32 0.0, %v2427
        %v2429 = vpop.f32.mrb[0].mxu0
        %2430 = vdwg.mxu0
        %v2432 = vsel %vm1308, %v628, 0
        %2434 = vmatprep.subr.mxu0 0.0
        %2435 = vmatpush1.msra.mxu0 %v604
        %2436 = vmatprep.subr.mxu0 0.0
        %2437 = vmatpush1.msra.mxu0 0.0
        %2438 = vmatprep.subr.mxu0 0.0
        %2439 = vmatpush1.msra.mxu0 0.0
        %2440 = vmatprep.subr.mxu0 0.0
        %2441 = vmatpush1.msra.mxu0 0.0
        %2442 = vmatprep.subr.mxu0 0.0
        %2443 = vmatpush1.msra.mxu0 0.0
        %2444 = vmatprep.subr.mxu0 0.0
        %2445 = vmatpush1.msra.mxu0 0.0
        %2446 = vmatprep.subr.mxu0 0.0
        %2447 = vmatpush1.msra.mxu0 0.0
        %2448 = vmatprep.subr.mxu0 0.0
        %2449 = vmatpush1.msra.mxu0 0.0
        %2450 = vmatprep.subr.mxu0 0.0
        %2451 = vmatpush1.msra.mxu0 0.0
        %2452 = vmatprep.subr.mxu0 0.0
        %2453 = vmatpush1.msra.mxu0 0.0
        %2454 = vmatprep.subr.mxu0 0.0
        %2455 = vmatpush1.msra.mxu0 0.0
        %2456 = vmatprep.subr.mxu0 0.0
        %2457 = vmatpush1.msra.mxu0 0.0
        %2458 = vmatprep.subr.mxu0 0.0
        %2459 = vmatpush1.msra.mxu0 0.0
        %2460 = vmatprep.subr.mxu0 0.0
        %2461 = vmatpush1.msra.mxu0 0.0
        %2462 = vmatprep.subr.mxu0 0.0
        %2463 = vmatpush1.msra.mxu0 0.0
        %2464 = vmatprep.subr.mxu0 0.0
        %2465 = vmatpush1.msra.mxu0 0.0
        %2466 = vmatprep.subr.mxu0 0.0
        %2467 = vmatpush1.msra.mxu0 0.0
        %2468 = vmatprep.subr.mxu0 0.0
        %2469 = vmatpush1.msra.mxu0 0.0
        %2470 = vmatprep.subr.mxu0 0.0
        %2471 = vmatpush1.msra.mxu0 0.0
        %2472 = vmatprep.subr.mxu0 0.0
        %2473 = vmatpush1.msra.mxu0 0.0
        %2474 = vmatprep.subr.mxu0 0.0
        %2475 = vmatpush1.msra.mxu0 0.0
        %2476 = vmatprep.subr.mxu0 0.0
        %2477 = vmatpush1.msra.mxu0 0.0
        %2478 = vmatprep.subr.mxu0 0.0
        %2479 = vmatpush1.msra.mxu0 0.0
        %2480 = vmatprep.subr.mxu0 0.0
        %2481 = vmatpush1.msra.mxu0 0.0
        %2482 = vmatprep.subr.mxu0 0.0
        %2483 = vmatpush1.msra.mxu0 0.0
        %2484 = vmatprep.subr.mxu0 0.0
        %2485 = vmatpush1.msra.mxu0 0.0
        %2486 = vmatprep.subr.mxu0 0.0
        %2487 = vmatpush1.msra.mxu0 0.0
        %2488 = vmatprep.subr.mxu0 0.0
        %2489 = vmatpush1.msra.mxu0 0.0
        %2490 = vmatprep.subr.mxu0 0.0
        %2491 = vmatpush1.msra.mxu0 0.0
        %2492 = vmatprep.subr.mxu0 0.0
        %2493 = vmatpush1.msra.mxu0 0.0
        %2494 = vmatprep.subr.mxu0 0.0
        %2495 = vmatpush1.msra.mxu0 0.0
        %2496 = vmatprep.subr.mxu0 0.0
        %2497 = vmatpush1.msra.mxu0 0.0
        %2498 = vmatprep.mubr.f32.mxu0 0.0
        %2499 = vmatmul.mubr.f32.gmra.mrb[0].mxu0 %v2432
        %v2500 = vpop.f32.mrb[0].mxu0
        %v2501 = vadd.f32 0.0, %v2500
        %v2502 = vpop.f32.mrb[0].mxu0
        %2503 = vdwg.mxu0
        %v2505 = vsel %vm1308, %v629, 0
        %2507 = vmatprep.subr.mxu0 0.0
        %2508 = vmatpush1.msra.mxu0 %v605
        %2509 = vmatprep.subr.mxu0 0.0
        %2510 = vmatpush1.msra.mxu0 0.0
        %2511 = vmatprep.subr.mxu0 0.0
        %2512 = vmatpush1.msra.mxu0 0.0
        %2513 = vmatprep.subr.mxu0 0.0
        %2514 = vmatpush1.msra.mxu0 0.0
        %2515 = vmatprep.subr.mxu0 0.0
        %2516 = vmatpush1.msra.mxu0 0.0
        %2517 = vmatprep.subr.mxu0 0.0
        %2518 = vmatpush1.msra.mxu0 0.0
        %2519 = vmatprep.subr.mxu0 0.0
        %2520 = vmatpush1.msra.mxu0 0.0
        %2521 = vmatprep.subr.mxu0 0.0
        %2522 = vmatpush1.msra.mxu0 0.0
        %2523 = vmatprep.subr.mxu0 0.0
        %2524 = vmatpush1.msra.mxu0 0.0
        %2525 = vmatprep.subr.mxu0 0.0
        %2526 = vmatpush1.msra.mxu0 0.0
        %2527 = vmatprep.subr.mxu0 0.0
        %2528 = vmatpush1.msra.mxu0 0.0
        %2529 = vmatprep.subr.mxu0 0.0
        %2530 = vmatpush1.msra.mxu0 0.0
        %2531 = vmatprep.subr.mxu0 0.0
        %2532 = vmatpush1.msra.mxu0 0.0
        %2533 = vmatprep.subr.mxu0 0.0
        %2534 = vmatpush1.msra.mxu0 0.0
        %2535 = vmatprep.subr.mxu0 0.0
        %2536 = vmatpush1.msra.mxu0 0.0
        %2537 = vmatprep.subr.mxu0 0.0
        %2538 = vmatpush1.msra.mxu0 0.0
        %2539 = vmatprep.subr.mxu0 0.0
        %2540 = vmatpush1.msra.mxu0 0.0
        %2541 = vmatprep.subr.mxu0 0.0
        %2542 = vmatpush1.msra.mxu0 0.0
        %2543 = vmatprep.subr.mxu0 0.0
        %2544 = vmatpush1.msra.mxu0 0.0
        %2545 = vmatprep.subr.mxu0 0.0
        %2546 = vmatpush1.msra.mxu0 0.0
        %2547 = vmatprep.subr.mxu0 0.0
        %2548 = vmatpush1.msra.mxu0 0.0
        %2549 = vmatprep.subr.mxu0 0.0
        %2550 = vmatpush1.msra.mxu0 0.0
        %2551 = vmatprep.subr.mxu0 0.0
        %2552 = vmatpush1.msra.mxu0 0.0
        %2553 = vmatprep.subr.mxu0 0.0
        %2554 = vmatpush1.msra.mxu0 0.0
        %2555 = vmatprep.subr.mxu0 0.0
        %2556 = vmatpush1.msra.mxu0 0.0
        %2557 = vmatprep.subr.mxu0 0.0
        %2558 = vmatpush1.msra.mxu0 0.0
        %2559 = vmatprep.subr.mxu0 0.0
        %2560 = vmatpush1.msra.mxu0 0.0
        %2561 = vmatprep.subr.mxu0 0.0
        %2562 = vmatpush1.msra.mxu0 0.0
        %2563 = vmatprep.subr.mxu0 0.0
        %2564 = vmatpush1.msra.mxu0 0.0
        %2565 = vmatprep.subr.mxu0 0.0
        %2566 = vmatpush1.msra.mxu0 0.0
        %2567 = vmatprep.subr.mxu0 0.0
        %2568 = vmatpush1.msra.mxu0 0.0
        %2569 = vmatprep.subr.mxu0 0.0
        %2570 = vmatpush1.msra.mxu0 0.0
        %2571 = vmatprep.mubr.f32.mxu0 0.0
        %2572 = vmatmul.mubr.f32.gmra.mrb[0].mxu0 %v2505
        %v2573 = vpop.f32.mrb[0].mxu0
        %v2574 = vadd.f32 0.0, %v2573
        %v2575 = vpop.f32.mrb[0].mxu0
        %2576 = vdwg.mxu0
        %v2578 = vsel %vm1308, %v630, 0
        %2580 = vmatprep.subr.mxu0 0.0
        %2581 = vmatpush1.msra.mxu0 %v606
        %2582 = vmatprep.subr.mxu0 0.0
        %2583 = vmatpush1.msra.mxu0 0.0
        %2584 = vmatprep.subr.mxu0 0.0
        %2585 = vmatpush1.msra.mxu0 0.0
        %2586 = vmatprep.subr.mxu0 0.0
        %2587 = vmatpush1.msra.mxu0 0.0
        %2588 = vmatprep.subr.mxu0 0.0
        %2589 = vmatpush1.msra.mxu0 0.0
        %2590 = vmatprep.subr.mxu0 0.0
        %2591 = vmatpush1.msra.mxu0 0.0
        %2592 = vmatprep.subr.mxu0 0.0
        %2593 = vmatpush1.msra.mxu0 0.0
        %2594 = vmatprep.subr.mxu0 0.0
        %2595 = vmatpush1.msra.mxu0 0.0
        %2596 = vmatprep.subr.mxu0 0.0
        %2597 = vmatpush1.msra.mxu0 0.0
        %2598 = vmatprep.subr.mxu0 0.0
        %2599 = vmatpush1.msra.mxu0 0.0
        %2600 = vmatprep.subr.mxu0 0.0
        %2601 = vmatpush1.msra.mxu0 0.0
        %2602 = vmatprep.subr.mxu0 0.0
        %2603 = vmatpush1.msra.mxu0 0.0
        %2604 = vmatprep.subr.mxu0 0.0
        %2605 = vmatpush1.msra.mxu0 0.0
        %2606 = vmatprep.subr.mxu0 0.0
        %2607 = vmatpush1.msra.mxu0 0.0
        %2608 = vmatprep.subr.mxu0 0.0
        %2609 = vmatpush1.msra.mxu0 0.0
        %2610 = vmatprep.subr.mxu0 0.0
        %2611 = vmatpush1.msra.mxu0 0.0
        %2612 = vmatprep.subr.mxu0 0.0
        %2613 = vmatpush1.msra.mxu0 0.0
        %2614 = vmatprep.subr.mxu0 0.0
        %2615 = vmatpush1.msra.mxu0 0.0
        %2616 = vmatprep.subr.mxu0 0.0
        %2617 = vmatpush1.msra.mxu0 0.0
        %2618 = vmatprep.subr.mxu0 0.0
        %2619 = vmatpush1.msra.mxu0 0.0
        %2620 = vmatprep.subr.mxu0 0.0
        %2621 = vmatpush1.msra.mxu0 0.0
        %2622 = vmatprep.subr.mxu0 0.0
        %2623 = vmatpush1.msra.mxu0 0.0
        %2624 = vmatprep.subr.mxu0 0.0
        %2625 = vmatpush1.msra.mxu0 0.0
        %2626 = vmatprep.subr.mxu0 0.0
        %2627 = vmatpush1.msra.mxu0 0.0
        %2628 = vmatprep.subr.mxu0 0.0
        %2629 = vmatpush1.msra.mxu0 0.0
        %2630 = vmatprep.subr.mxu0 0.0
        %2631 = vmatpush1.msra.mxu0 0.0
        %2632 = vmatprep.subr.mxu0 0.0
        %2633 = vmatpush1.msra.mxu0 0.0
        %2634 = vmatprep.subr.mxu0 0.0
        %2635 = vmatpush1.msra.mxu0 0.0
        %2636 = vmatprep.subr.mxu0 0.0
        %2637 = vmatpush1.msra.mxu0 0.0
        %2638 = vmatprep.subr.mxu0 0.0
        %2639 = vmatpush1.msra.mxu0 0.0
        %2640 = vmatprep.subr.mxu0 0.0
        %2641 = vmatpush1.msra.mxu0 0.0
        %2642 = vmatprep.subr.mxu0 0.0
        %2643 = vmatpush1.msra.mxu0 0.0
        %2644 = vmatprep.mubr.f32.mxu0 0.0
        %2645 = vmatmul.mubr.f32.gmra.mrb[0].mxu0 %v2578
        %v2646 = vpop.f32.mrb[0].mxu0
        %v2647 = vadd.f32 0.0, %v2646
        %v2648 = vpop.f32.mrb[0].mxu0
        %2649 = vdwg.mxu0
        %v2651 = vsel %vm1308, %v631, 0
        %2653 = vmatprep.subr.mxu0 0.0
        %2654 = vmatpush1.msra.mxu0 %v607
        %2655 = vmatprep.subr.mxu0 0.0
        %2656 = vmatpush1.msra.mxu0 0.0
        %2657 = vmatprep.subr.mxu0 0.0
        %2658 = vmatpush1.msra.mxu0 0.0
        %2659 = vmatprep.subr.mxu0 0.0
        %2660 = vmatpush1.msra.mxu0 0.0
        %2661 = vmatprep.subr.mxu0 0.0
        %2662 = vmatpush1.msra.mxu0 0.0
        %2663 = vmatprep.subr.mxu0 0.0
        %2664 = vmatpush1.msra.mxu0 0.0
        %2665 = vmatprep.subr.mxu0 0.0
        %2666 = vmatpush1.msra.mxu0 0.0
        %2667 = vmatprep.subr.mxu0 0.0
        %2668 = vmatpush1.msra.mxu0 0.0
        %2669 = vmatprep.subr.mxu0 0.0
        %2670 = vmatpush1.msra.mxu0 0.0
        %2671 = vmatprep.subr.mxu0 0.0
        %2672 = vmatpush1.msra.mxu0 0.0
        %2673 = vmatprep.subr.mxu0 0.0
        %2674 = vmatpush1.msra.mxu0 0.0
        %2675 = vmatprep.subr.mxu0 0.0
        %2676 = vmatpush1.msra.mxu0 0.0
        %2677 = vmatprep.subr.mxu0 0.0
        %2678 = vmatpush1.msra.mxu0 0.0
        %2679 = vmatprep.subr.mxu0 0.0
        %2680 = vmatpush1.msra.mxu0 0.0
        %2681 = vmatprep.subr.mxu0 0.0
        %2682 = vmatpush1.msra.mxu0 0.0
        %2683 = vmatprep.subr.mxu0 0.0
        %2684 = vmatpush1.msra.mxu0 0.0
        %2685 = vmatprep.subr.mxu0 0.0
        %2686 = vmatpush1.msra.mxu0 0.0
        %2687 = vmatprep.subr.mxu0 0.0
        %2688 = vmatpush1.msra.mxu0 0.0
        %2689 = vmatprep.subr.mxu0 0.0
        %2690 = vmatpush1.msra.mxu0 0.0
        %2691 = vmatprep.subr.mxu0 0.0
        %2692 = vmatpush1.msra.mxu0 0.0
        %2693 = vmatprep.subr.mxu0 0.0
        %2694 = vmatpush1.msra.mxu0 0.0
        %2695 = vmatprep.subr.mxu0 0.0
        %2696 = vmatpush1.msra.mxu0 0.0
        %2697 = vmatprep.subr.mxu0 0.0
        %2698 = vmatpush1.msra.mxu0 0.0
        %2699 = vmatprep.subr.mxu0 0.0
        %2700 = vmatpush1.msra.mxu0 0.0
        %2701 = vmatprep.subr.mxu0 0.0
        %2702 = vmatpush1.msra.mxu0 0.0
        %2703 = vmatprep.subr.mxu0 0.0
        %2704 = vmatpush1.msra.mxu0 0.0
        %2705 = vmatprep.subr.mxu0 0.0
        %2706 = vmatpush1.msra.mxu0 0.0
        %2707 = vmatprep.subr.mxu0 0.0
        %2708 = vmatpush1.msra.mxu0 0.0
        %2709 = vmatprep.subr.mxu0 0.0
        %2710 = vmatpush1.msra.mxu0 0.0
        %2711 = vmatprep.subr.mxu0 0.0
        %2712 = vmatpush1.msra.mxu0 0.0
        %2713 = vmatprep.subr.mxu0 0.0
        %2714 = vmatpush1.msra.mxu0 0.0
        %2715 = vmatprep.subr.mxu0 0.0
        %2716 = vmatpush1.msra.mxu0 0.0
        %2717 = vmatprep.mubr.f32.mxu0 0.0
        %2718 = vmatmul.mubr.f32.gmra.mrb[0].mxu0 %v2651
        %v2719 = vpop.f32.mrb[0].mxu0
        %v2720 = vadd.f32 0.0, %v2719
        %v2721 = vpop.f32.mrb[0].mxu0
        %2722 = vdwg.mxu0
        %v2724 = vsel %vm1308, %v632, 0
        %2726 = vmatprep.subr.mxu0 0.0
        %2727 = vmatpush1.msra.mxu0 %v608
        %2728 = vmatprep.subr.mxu0 0.0
        %2729 = vmatpush1.msra.mxu0 0.0
        %2730 = vmatprep.subr.mxu0 0.0
        %2731 = vmatpush1.msra.mxu0 0.0
        %2732 = vmatprep.subr.mxu0 0.0
        %2733 = vmatpush1.msra.mxu0 0.0
        %2734 = vmatprep.subr.mxu0 0.0
        %2735 = vmatpush1.msra.mxu0 0.0
        %2736 = vmatprep.subr.mxu0 0.0
        %2737 = vmatpush1.msra.mxu0 0.0
        %2738 = vmatprep.subr.mxu0 0.0
        %2739 = vmatpush1.msra.mxu0 0.0
        %2740 = vmatprep.subr.mxu0 0.0
        %2741 = vmatpush1.msra.mxu0 0.0
        %2742 = vmatprep.subr.mxu0 0.0
        %2743 = vmatpush1.msra.mxu0 0.0
        %2744 = vmatprep.subr.mxu0 0.0
        %2745 = vmatpush1.msra.mxu0 0.0
        %2746 = vmatprep.subr.mxu0 0.0
        %2747 = vmatpush1.msra.mxu0 0.0
        %2748 = vmatprep.subr.mxu0 0.0
        %2749 = vmatpush1.msra.mxu0 0.0
        %2750 = vmatprep.subr.mxu0 0.0
        %2751 = vmatpush1.msra.mxu0 0.0
        %2752 = vmatprep.subr.mxu0 0.0
        %2753 = vmatpush1.msra.mxu0 0.0
        %2754 = vmatprep.subr.mxu0 0.0
        %2755 = vmatpush1.msra.mxu0 0.0
        %2756 = vmatprep.subr.mxu0 0.0
        %2757 = vmatpush1.msra.mxu0 0.0
        %2758 = vmatprep.subr.mxu0 0.0
        %2759 = vmatpush1.msra.mxu0 0.0
        %2760 = vmatprep.subr.mxu0 0.0
        %2761 = vmatpush1.msra.mxu0 0.0
        %2762 = vmatprep.subr.mxu0 0.0
        %2763 = vmatpush1.msra.mxu0 0.0
        %2764 = vmatprep.subr.mxu0 0.0
        %2765 = vmatpush1.msra.mxu0 0.0
        %2766 = vmatprep.subr.mxu0 0.0
        %2767 = vmatpush1.msra.mxu0 0.0
        %2768 = vmatprep.subr.mxu0 0.0
        %2769 = vmatpush1.msra.mxu0 0.0
        %2770 = vmatprep.subr.mxu0 0.0
        %2771 = vmatpush1.msra.mxu0 0.0
        %2772 = vmatprep.subr.mxu0 0.0
        %2773 = vmatpush1.msra.mxu0 0.0
        %2774 = vmatprep.subr.mxu0 0.0
        %2775 = vmatpush1.msra.mxu0 0.0
        %2776 = vmatprep.subr.mxu0 0.0
        %2777 = vmatpush1.msra.mxu0 0.0
        %2778 = vmatprep.subr.mxu0 0.0
        %2779 = vmatpush1.msra.mxu0 0.0
        %2780 = vmatprep.subr.mxu0 0.0
        %2781 = vmatpush1.msra.mxu0 0.0
        %2782 = vmatprep.subr.mxu0 0.0
        %2783 = vmatpush1.msra.mxu0 0.0
        %2784 = vmatprep.subr.mxu0 0.0
        %2785 = vmatpush1.msra.mxu0 0.0
        %2786 = vmatprep.subr.mxu0 0.0
        %2787 = vmatpush1.msra.mxu0 0.0
        %2788 = vmatprep.subr.mxu0 0.0
        %2789 = vmatpush1.msra.mxu0 0.0
        %2790 = vmatprep.mubr.f32.mxu0 0.0
        %2791 = vmatmul.mubr.f32.gmra.mrb[0].mxu0 %v2724
        %v2792 = vpop.f32.mrb[0].mxu0
        %v2793 = vadd.f32 0.0, %v2792
        %v2794 = vpop.f32.mrb[0].mxu0
        %2795 = vdwg.mxu0
        %v2797 = vsel %vm1308, %v633, 0
        %2799 = vmatprep.subr.mxu0 0.0
        %2800 = vmatpush1.msra.mxu0 %v609
        %2801 = vmatprep.subr.mxu0 0.0
        %2802 = vmatpush1.msra.mxu0 0.0
        %2803 = vmatprep.subr.mxu0 0.0
        %2804 = vmatpush1.msra.mxu0 0.0
        %2805 = vmatprep.subr.mxu0 0.0
        %2806 = vmatpush1.msra.mxu0 0.0
        %2807 = vmatprep.subr.mxu0 0.0
        %2808 = vmatpush1.msra.mxu0 0.0
        %2809 = vmatprep.subr.mxu0 0.0
        %2810 = vmatpush1.msra.mxu0 0.0
        %2811 = vmatprep.subr.mxu0 0.0
        %2812 = vmatpush1.msra.mxu0 0.0
        %2813 = vmatprep.subr.mxu0 0.0
        %2814 = vmatpush1.msra.mxu0 0.0
        %2815 = vmatprep.subr.mxu0 0.0
        %2816 = vmatpush1.msra.mxu0 0.0
        %2817 = vmatprep.subr.mxu0 0.0
        %2818 = vmatpush1.msra.mxu0 0.0
        %2819 = vmatprep.subr.mxu0 0.0
        %2820 = vmatpush1.msra.mxu0 0.0
        %2821 = vmatprep.subr.mxu0 0.0
        %2822 = vmatpush1.msra.mxu0 0.0
        %2823 = vmatprep.subr.mxu0 0.0
        %2824 = vmatpush1.msra.mxu0 0.0
        %2825 = vmatprep.subr.mxu0 0.0
        %2826 = vmatpush1.msra.mxu0 0.0
        %2827 = vmatprep.subr.mxu0 0.0
        %2828 = vmatpush1.msra.mxu0 0.0
        %2829 = vmatprep.subr.mxu0 0.0
        %2830 = vmatpush1.msra.mxu0 0.0
        %2831 = vmatprep.subr.mxu0 0.0
        %2832 = vmatpush1.msra.mxu0 0.0
        %2833 = vmatprep.subr.mxu0 0.0
        %2834 = vmatpush1.msra.mxu0 0.0
        %2835 = vmatprep.subr.mxu0 0.0
        %2836 = vmatpush1.msra.mxu0 0.0
        %2837 = vmatprep.subr.mxu0 0.0
        %2838 = vmatpush1.msra.mxu0 0.0
        %2839 = vmatprep.subr.mxu0 0.0
        %2840 = vmatpush1.msra.mxu0 0.0
        %2841 = vmatprep.subr.mxu0 0.0
        %2842 = vmatpush1.msra.mxu0 0.0
        %2843 = vmatprep.subr.mxu0 0.0
        %2844 = vmatpush1.msra.mxu0 0.0
        %2845 = vmatprep.subr.mxu0 0.0
        %2846 = vmatpush1.msra.mxu0 0.0
        %2847 = vmatprep.subr.mxu0 0.0
        %2848 = vmatpush1.msra.mxu0 0.0
        %2849 = vmatprep.subr.mxu0 0.0
        %2850 = vmatpush1.msra.mxu0 0.0
        %2851 = vmatprep.subr.mxu0 0.0
        %2852 = vmatpush1.msra.mxu0 0.0
        %2853 = vmatprep.subr.mxu0 0.0
        %2854 = vmatpush1.msra.mxu0 0.0
        %2855 = vmatprep.subr.mxu0 0.0
        %2856 = vmatpush1.msra.mxu0 0.0
        %2857 = vmatprep.subr.mxu0 0.0
        %2858 = vmatpush1.msra.mxu0 0.0
        %2859 = vmatprep.subr.mxu0 0.0
        %2860 = vmatpush1.msra.mxu0 0.0
        %2861 = vmatprep.subr.mxu0 0.0
        %2862 = vmatpush1.msra.mxu0 0.0
        %2863 = vmatprep.mubr.f32.mxu0 0.0
        %2864 = vmatmul.mubr.f32.gmra.mrb[0].mxu0 %v2797
        %v2865 = vpop.f32.mrb[0].mxu0
        %v2866 = vadd.f32 0.0, %v2865
        %v2867 = vpop.f32.mrb[0].mxu0
        %2868 = vdwg.mxu0
        %v2870 = vsel %vm1308, %v634, 0
        %2872 = vmatprep.subr.mxu0 0.0
        %2873 = vmatpush1.msra.mxu0 %v610
        %2874 = vmatprep.subr.mxu0 0.0
        %2875 = vmatpush1.msra.mxu0 0.0
        %2876 = vmatprep.subr.mxu0 0.0
        %2877 = vmatpush1.msra.mxu0 0.0
        %2878 = vmatprep.subr.mxu0 0.0
        %2879 = vmatpush1.msra.mxu0 0.0
        %2880 = vmatprep.subr.mxu0 0.0
        %2881 = vmatpush1.msra.mxu0 0.0
        %2882 = vmatprep.subr.mxu0 0.0
        %2883 = vmatpush1.msra.mxu0 0.0
        %2884 = vmatprep.subr.mxu0 0.0
        %2885 = vmatpush1.msra.mxu0 0.0
        %2886 = vmatprep.subr.mxu0 0.0
        %2887 = vmatpush1.msra.mxu0 0.0
        %2888 = vmatprep.subr.mxu0 0.0
        %2889 = vmatpush1.msra.mxu0 0.0
        %2890 = vmatprep.subr.mxu0 0.0
        %2891 = vmatpush1.msra.mxu0 0.0
        %2892 = vmatprep.subr.mxu0 0.0
        %2893 = vmatpush1.msra.mxu0 0.0
        %2894 = vmatprep.subr.mxu0 0.0
        %2895 = vmatpush1.msra.mxu0 0.0
        %2896 = vmatprep.subr.mxu0 0.0
        %2897 = vmatpush1.msra.mxu0 0.0
        %2898 = vmatprep.subr.mxu0 0.0
        %2899 = vmatpush1.msra.mxu0 0.0
        %2900 = vmatprep.subr.mxu0 0.0
        %2901 = vmatpush1.msra.mxu0 0.0
        %2902 = vmatprep.subr.mxu0 0.0
        %2903 = vmatpush1.msra.mxu0 0.0
        %2904 = vmatprep.subr.mxu0 0.0
        %2905 = vmatpush1.msra.mxu0 0.0
        %2906 = vmatprep.subr.mxu0 0.0
        %2907 = vmatpush1.msra.mxu0 0.0
        %2908 = vmatprep.subr.mxu0 0.0
        %2909 = vmatpush1.msra.mxu0 0.0
        %2910 = vmatprep.subr.mxu0 0.0
        %2911 = vmatpush1.msra.mxu0 0.0
        %2912 = vmatprep.subr.mxu0 0.0
        %2913 = vmatpush1.msra.mxu0 0.0
        %2914 = vmatprep.subr.mxu0 0.0
        %2915 = vmatpush1.msra.mxu0 0.0
        %2916 = vmatprep.subr.mxu0 0.0
        %2917 = vmatpush1.msra.mxu0 0.0
        %2918 = vmatprep.subr.mxu0 0.0
        %2919 = vmatpush1.msra.mxu0 0.0
        %2920 = vmatprep.subr.mxu0 0.0
        %2921 = vmatpush1.msra.mxu0 0.0
        %2922 = vmatprep.subr.mxu0 0.0
        %2923 = vmatpush1.msra.mxu0 0.0
        %2924 = vmatprep.subr.mxu0 0.0
        %2925 = vmatpush1.msra.mxu0 0.0
        %2926 = vmatprep.subr.mxu0 0.0
        %2927 = vmatpush1.msra.mxu0 0.0
        %2928 = vmatprep.subr.mxu0 0.0
        %2929 = vmatpush1.msra.mxu0 0.0
        %2930 = vmatprep.subr.mxu0 0.0
        %2931 = vmatpush1.msra.mxu0 0.0
        %2932 = vmatprep.subr.mxu0 0.0
        %2933 = vmatpush1.msra.mxu0 0.0
        %2934 = vmatprep.subr.mxu0 0.0
        %2935 = vmatpush1.msra.mxu0 0.0
        %2936 = vmatprep.mubr.f32.mxu0 0.0
        %2937 = vmatmul.mubr.f32.gmra.mrb[0].mxu0 %v2870
        %v2938 = vpop.f32.mrb[0].mxu0
        %v2939 = vadd.f32 0.0, %v2938
        %v2940 = vpop.f32.mrb[0].mxu0
        %2941 = vdwg.mxu0
        %v2942 = vld [vmem:[%s4] sm:$0xff]
        %v2943 = vld [vmem:[%s4 + $0x8] sm:$0xff]
        %v2944 = vld [vmem:[%s4 + $0x10] sm:$0xff]
        %v2945 = vld [vmem:[%s4 + $0x18] sm:$0xff]
        %v2947 = vsel %vm635, %v1783, 0
        %v2950 = vsel %vm635, %v1788, 0
        %v2953 = vsel %vm635, %v1864, 0
        %v2956 = vsel %vm635, %v1869, 0
        %v2959 = vsel %vm635, %v1945, 0
        %v2962 = vsel %vm635, %v1950, 0
        %v2965 = vsel %vm635, %v2026, 0
        %v2968 = vsel %vm635, %v2031, 0
        %v2971 = vsel %vm635, %v2107, 0
        %v2974 = vsel %vm635, %v2112, 0
        %v2977 = vsel %vm635, %v2188, 0
        %v2980 = vsel %vm635, %v2193, 0
        %v2983 = vsel %vm635, %v2269, 0
        %v2986 = vsel %vm635, %v2274, 0
        %v2989 = vsel %vm635, %v2350, 0
        %v2992 = vsel %vm635, %v2355, 0
        %2994 = vmatprep.subr.mxu0 0.0
        %2995 = vmatpush1.msra.mxu0 %v2942
        %2996 = vmatprep.subr.mxu0 0.0
        %2997 = vmatpush1.msra.mxu0 %v2943
        %2998 = vmatprep.subr.mxu0 0.0
        %2999 = vmatpush1.msra.mxu0 %v2944
        %3000 = vmatprep.subr.mxu0 0.0
        %3001 = vmatpush1.msra.mxu0 %v2945
        %3002 = vmatprep.subr.mxu0 0.0
        %3003 = vmatpush1.msra.mxu0 0.0
        %3004 = vmatprep.subr.mxu0 0.0
        %3005 = vmatpush1.msra.mxu0 0.0
        %3006 = vmatprep.subr.mxu0 0.0
        %3007 = vmatpush1.msra.mxu0 0.0
        %3008 = vmatprep.subr.mxu0 0.0
        %3009 = vmatpush1.msra.mxu0 0.0
        %3010 = vmatprep.subr.mxu0 0.0
        %3011 = vmatpush1.msra.mxu0 0.0
        %3012 = vmatprep.subr.mxu0 0.0
        %3013 = vmatpush1.msra.mxu0 0.0
        %3014 = vmatprep.subr.mxu0 0.0
        %3015 = vmatpush1.msra.mxu0 0.0
        %3016 = vmatprep.subr.mxu0 0.0
        %3017 = vmatpush1.msra.mxu0 0.0
        %3018 = vmatprep.subr.mxu0 0.0
        %3019 = vmatpush1.msra.mxu0 0.0
        %3020 = vmatprep.subr.mxu0 0.0
        %3021 = vmatpush1.msra.mxu0 0.0
        %3022 = vmatprep.subr.mxu0 0.0
        %3023 = vmatpush1.msra.mxu0 0.0
        %3024 = vmatprep.subr.mxu0 0.0
        %3025 = vmatpush1.msra.mxu0 0.0
        %3026 = vmatprep.subr.mxu0 0.0
        %3027 = vmatpush1.msra.mxu0 0.0
        %3028 = vmatprep.subr.mxu0 0.0
        %3029 = vmatpush1.msra.mxu0 0.0
        %3030 = vmatprep.subr.mxu0 0.0
        %3031 = vmatpush1.msra.mxu0 0.0
        %3032 = vmatprep.subr.mxu0 0.0
        %3033 = vmatpush1.msra.mxu0 0.0
        %3034 = vmatprep.subr.mxu0 0.0
        %3035 = vmatpush1.msra.mxu0 0.0
        %3036 = vmatprep.subr.mxu0 0.0
        %3037 = vmatpush1.msra.mxu0 0.0
        %3038 = vmatprep.subr.mxu0 0.0
        %3039 = vmatpush1.msra.mxu0 0.0
        %3040 = vmatprep.subr.mxu0 0.0
        %3041 = vmatpush1.msra.mxu0 0.0
        %3042 = vmatprep.subr.mxu0 0.0
        %3043 = vmatpush1.msra.mxu0 0.0
        %3044 = vmatprep.subr.mxu0 0.0
        %3045 = vmatpush1.msra.mxu0 0.0
        %3046 = vmatprep.subr.mxu0 0.0
        %3047 = vmatpush1.msra.mxu0 0.0
        %3048 = vmatprep.subr.mxu0 0.0
        %3049 = vmatpush1.msra.mxu0 0.0
        %3050 = vmatprep.subr.mxu0 0.0
        %3051 = vmatpush1.msra.mxu0 0.0
        %3052 = vmatprep.subr.mxu0 0.0
        %3053 = vmatpush1.msra.mxu0 0.0
        %3054 = vmatprep.subr.mxu0 0.0
        %3055 = vmatpush1.msra.mxu0 0.0
        %3056 = vmatprep.subr.mxu0 0.0
        %3057 = vmatpush1.msra.mxu0 0.0
        %3058 = vmatprep.mubr.f32.mxu0 0.0
        %3059 = vmatmul.mubr.f32.gmra.mrb[0].mxu0 %v2947
        %v3060 = vpop.f32.mrb[0].mxu0
        %v3061 = vadd.f32 0.0, %v3060
        %v3062 = vpop.f32.mrb[0].mxu0
        %3063 = vmatprep.mubr.f32.mxu0 0.0
        %3064 = vmatmul.mubr.f32.gmra.mrb[0].mxu0 %v2950
        %v3065 = vpop.f32.mrb[0].mxu0
        %v3066 = vadd.f32 0.0, %v3065
        %v3067 = vpop.f32.mrb[0].mxu0
        %3068 = vmatprep.mubr.f32.mxu0 0.0
        %3069 = vmatmul.mubr.f32.gmra.mrb[0].mxu0 %v2953
        %v3070 = vpop.f32.mrb[0].mxu0
        %v3071 = vadd.f32 0.0, %v3070
        %v3072 = vpop.f32.mrb[0].mxu0
        %3073 = vmatprep.mubr.f32.mxu0 0.0
        %3074 = vmatmul.mubr.f32.gmra.mrb[0].mxu0 %v2956
        %v3075 = vpop.f32.mrb[0].mxu0
        %v3076 = vadd.f32 0.0, %v3075
        %v3077 = vpop.f32.mrb[0].mxu0
        %3078 = vmatprep.mubr.f32.mxu0 0.0
        %3079 = vmatmul.mubr.f32.gmra.mrb[0].mxu0 %v2959
        %v3080 = vpop.f32.mrb[0].mxu0
        %v3081 = vadd.f32 0.0, %v3080
        %v3082 = vpop.f32.mrb[0].mxu0
        %3083 = vmatprep.mubr.f32.mxu0 0.0
        %3084 = vmatmul.mubr.f32.gmra.mrb[0].mxu0 %v2962
        %v3085 = vpop.f32.mrb[0].mxu0
        %v3086 = vadd.f32 0.0, %v3085
        %v3087 = vpop.f32.mrb[0].mxu0
        %3088 = vmatprep.mubr.f32.mxu0 0.0
        %3089 = vmatmul.mubr.f32.gmra.mrb[0].mxu0 %v2965
        %v3090 = vpop.f32.mrb[0].mxu0
        %v3091 = vadd.f32 0.0, %v3090
        %v3092 = vpop.f32.mrb[0].mxu0
        %3093 = vmatprep.mubr.f32.mxu0 0.0
        %3094 = vmatmul.mubr.f32.gmra.mrb[0].mxu0 %v2968
        %v3095 = vpop.f32.mrb[0].mxu0
        %v3096 = vadd.f32 0.0, %v3095
        %v3097 = vpop.f32.mrb[0].mxu0
        %3098 = vmatprep.mubr.f32.mxu0 0.0
        %3099 = vmatmul.mubr.f32.gmra.mrb[0].mxu0 %v2971
        %v3100 = vpop.f32.mrb[0].mxu0
        %v3101 = vadd.f32 0.0, %v3100
        %v3102 = vpop.f32.mrb[0].mxu0
        %3103 = vmatprep.mubr.f32.mxu0 0.0
        %3104 = vmatmul.mubr.f32.gmra.mrb[0].mxu0 %v2974
        %v3105 = vpop.f32.mrb[0].mxu0
        %v3106 = vadd.f32 0.0, %v3105
        %v3107 = vpop.f32.mrb[0].mxu0
        %3108 = vmatprep.mubr.f32.mxu0 0.0
        %3109 = vmatmul.mubr.f32.gmra.mrb[0].mxu0 %v2977
        %v3110 = vpop.f32.mrb[0].mxu0
        %v3111 = vadd.f32 0.0, %v3110
        %v3112 = vpop.f32.mrb[0].mxu0
        %3113 = vmatprep.mubr.f32.mxu0 0.0
        %3114 = vmatmul.mubr.f32.gmra.mrb[0].mxu0 %v2980
        %v3115 = vpop.f32.mrb[0].mxu0
        %v3116 = vadd.f32 0.0, %v3115
        %v3117 = vpop.f32.mrb[0].mxu0
        %3118 = vmatprep.mubr.f32.mxu0 0.0
        %3119 = vmatmul.mubr.f32.gmra.mrb[0].mxu0 %v2983
        %v3120 = vpop.f32.mrb[0].mxu0
        %v3121 = vadd.f32 0.0, %v3120
        %v3122 = vpop.f32.mrb[0].mxu0
        %3123 = vmatprep.mubr.f32.mxu0 0.0
        %3124 = vmatmul.mubr.f32.gmra.mrb[0].mxu0 %v2986
        %v3125 = vpop.f32.mrb[0].mxu0
        %v3126 = vadd.f32 0.0, %v3125
        %v3127 = vpop.f32.mrb[0].mxu0
        %3128 = vmatprep.mubr.f32.mxu0 0.0
        %3129 = vmatmul.mubr.f32.gmra.mrb[0].mxu0 %v2989
        %v3130 = vpop.f32.mrb[0].mxu0
        %v3131 = vadd.f32 0.0, %v3130
        %v3132 = vpop.f32.mrb[0].mxu0
        %3133 = vmatprep.mubr.f32.mxu0 0.0
        %3134 = vmatmul.mubr.f32.gmra.mrb[0].mxu0 %v2992
        %v3135 = vpop.f32.mrb[0].mxu0
        %v3136 = vadd.f32 0.0, %v3135
        %v3137 = vpop.f32.mrb[0].mxu0
        %3138 = vdwg.mxu0
        %vm3139 = vcmp.ge.f32.partialorder %v3061, 0.0
        %vm3140 = vcmp.ge.f32.partialorder %v3066, 0.0
        %vm3141 = vcmp.ge.f32.partialorder %v3071, 0.0
        %vm3142 = vcmp.ge.f32.partialorder %v3076, 0.0
        %vm3143 = vcmp.ge.f32.partialorder %v3081, 0.0
        %vm3144 = vcmp.ge.f32.partialorder %v3086, 0.0
        %vm3145 = vcmp.ge.f32.partialorder %v3091, 0.0
        %vm3146 = vcmp.ge.f32.partialorder %v3096, 0.0
        %vm3147 = vcmp.ge.f32.partialorder %v3101, 0.0
        %vm3148 = vcmp.ge.f32.partialorder %v3106, 0.0
        %vm3149 = vcmp.ge.f32.partialorder %v3111, 0.0
        %vm3150 = vcmp.ge.f32.partialorder %v3116, 0.0
        %vm3151 = vcmp.ge.f32.partialorder %v3121, 0.0
        %vm3152 = vcmp.ge.f32.partialorder %v3126, 0.0
        %vm3153 = vcmp.ge.f32.partialorder %v3131, 0.0
        %vm3154 = vcmp.ge.f32.partialorder %v3136, 0.0
        %v3155 = vmul.f32 %v3061, 0.01
        %v3156 = vmul.f32 %v3066, 0.01
        %v3157 = vmul.f32 %v3071, 0.01
        %v3158 = vmul.f32 %v3076, 0.01
        %v3159 = vmul.f32 %v3081, 0.01
        %v3160 = vmul.f32 %v3086, 0.01
        %v3161 = vmul.f32 %v3091, 0.01
        %v3162 = vmul.f32 %v3096, 0.01
        %v3163 = vmul.f32 %v3101, 0.01
        %v3164 = vmul.f32 %v3106, 0.01
        %v3165 = vmul.f32 %v3111, 0.01
        %v3166 = vmul.f32 %v3116, 0.01
        %v3167 = vmul.f32 %v3121, 0.01
        %v3168 = vmul.f32 %v3126, 0.01
        %v3169 = vmul.f32 %v3131, 0.01
        %v3170 = vmul.f32 %v3136, 0.01
        %v3171 = vsel %vm3139, %v3061, %v3155
        %v3172 = vsel %vm3140, %v3066, %v3156
        %v3173 = vsel %vm3141, %v3071, %v3157
        %v3174 = vsel %vm3142, %v3076, %v3158
        %v3175 = vsel %vm3143, %v3081, %v3159
        %v3176 = vsel %vm3144, %v3086, %v3160
        %v3177 = vsel %vm3145, %v3091, %v3161
        %v3178 = vsel %vm3146, %v3096, %v3162
        %v3179 = vsel %vm3147, %v3101, %v3163
        %v3180 = vsel %vm3148, %v3106, %v3164
        %v3181 = vsel %vm3149, %v3111, %v3165
        %v3182 = vsel %vm3150, %v3116, %v3166
        %v3183 = vsel %vm3151, %v3121, %v3167
        %v3184 = vsel %vm3152, %v3126, %v3168
        %v3185 = vsel %vm3153, %v3131, %v3169
        %v3186 = vsel %vm3154, %v3136, %v3170
        %v3187 = vld [vmem:[#allocation5] sm:$0xff]
        %v3188 = vld [vmem:[#allocation5 + $0x8] sm:$0xff]
        %v3189 = vld [vmem:[#allocation5 + $0x10] sm:$0xff]
        %v3190 = vld [vmem:[#allocation5 + $0x18] sm:$0xff]
        %v3192 = vsel %vm635, %v2428, 0
        %v3195 = vsel %vm635, %v2501, 0
        %v3198 = vsel %vm635, %v2574, 0
        %v3201 = vsel %vm635, %v2647, 0
        %v3204 = vsel %vm635, %v2720, 0
        %v3207 = vsel %vm635, %v2793, 0
        %v3210 = vsel %vm635, %v2866, 0
        %v3213 = vsel %vm635, %v2939, 0
        %3215 = vmatprep.subr.mxu0 0.0
        %3216 = vmatpush1.msra.mxu0 %v3187
        %3217 = vmatprep.subr.mxu0 0.0
        %3218 = vmatpush1.msra.mxu0 %v3188
        %3219 = vmatprep.subr.mxu0 0.0
        %3220 = vmatpush1.msra.mxu0 %v3189
        %3221 = vmatprep.subr.mxu0 0.0
        %3222 = vmatpush1.msra.mxu0 %v3190
        %3223 = vmatprep.subr.mxu0 0.0
        %3224 = vmatpush1.msra.mxu0 0.0
        %3225 = vmatprep.subr.mxu0 0.0
        %3226 = vmatpush1.msra.mxu0 0.0
        %3227 = vmatprep.subr.mxu0 0.0
        %3228 = vmatpush1.msra.mxu0 0.0
        %3229 = vmatprep.subr.mxu0 0.0
        %3230 = vmatpush1.msra.mxu0 0.0
        %3231 = vmatprep.subr.mxu0 0.0
        %3232 = vmatpush1.msra.mxu0 0.0
        %3233 = vmatprep.subr.mxu0 0.0
        %3234 = vmatpush1.msra.mxu0 0.0
        %3235 = vmatprep.subr.mxu0 0.0
        %3236 = vmatpush1.msra.mxu0 0.0
        %3237 = vmatprep.subr.mxu0 0.0
        %3238 = vmatpush1.msra.mxu0 0.0
        %3239 = vmatprep.subr.mxu0 0.0
        %3240 = vmatpush1.msra.mxu0 0.0
        %3241 = vmatprep.subr.mxu0 0.0
        %3242 = vmatpush1.msra.mxu0 0.0
        %3243 = vmatprep.subr.mxu0 0.0
        %3244 = vmatpush1.msra.mxu0 0.0
        %3245 = vmatprep.subr.mxu0 0.0
        %3246 = vmatpush1.msra.mxu0 0.0
        %3247 = vmatprep.subr.mxu0 0.0
        %3248 = vmatpush1.msra.mxu0 0.0
        %3249 = vmatprep.subr.mxu0 0.0
        %3250 = vmatpush1.msra.mxu0 0.0
        %3251 = vmatprep.subr.mxu0 0.0
        %3252 = vmatpush1.msra.mxu0 0.0
        %3253 = vmatprep.subr.mxu0 0.0
        %3254 = vmatpush1.msra.mxu0 0.0
        %3255 = vmatprep.subr.mxu0 0.0
        %3256 = vmatpush1.msra.mxu0 0.0
        %3257 = vmatprep.subr.mxu0 0.0
        %3258 = vmatpush1.msra.mxu0 0.0
        %3259 = vmatprep.subr.mxu0 0.0
        %3260 = vmatpush1.msra.mxu0 0.0
        %3261 = vmatprep.subr.mxu0 0.0
        %3262 = vmatpush1.msra.mxu0 0.0
        %3263 = vmatprep.subr.mxu0 0.0
        %3264 = vmatpush1.msra.mxu0 0.0
        %3265 = vmatprep.subr.mxu0 0.0
        %3266 = vmatpush1.msra.mxu0 0.0
        %3267 = vmatprep.subr.mxu0 0.0
        %3268 = vmatpush1.msra.mxu0 0.0
        %3269 = vmatprep.subr.mxu0 0.0
        %3270 = vmatpush1.msra.mxu0 0.0
        %3271 = vmatprep.subr.mxu0 0.0
        %3272 = vmatpush1.msra.mxu0 0.0
        %3273 = vmatprep.subr.mxu0 0.0
        %3274 = vmatpush1.msra.mxu0 0.0
        %3275 = vmatprep.subr.mxu0 0.0
        %3276 = vmatpush1.msra.mxu0 0.0
        %3277 = vmatprep.subr.mxu0 0.0
        %3278 = vmatpush1.msra.mxu0 0.0
        %3279 = vmatprep.mubr.f32.mxu0 0.0
        %3280 = vmatmul.mubr.f32.gmra.mrb[0].mxu0 %v3192
        %v3281 = vpop.f32.mrb[0].mxu0
        %v3282 = vadd.f32 0.0, %v3281
        %v3283 = vpop.f32.mrb[0].mxu0
        %3284 = vmatprep.mubr.f32.mxu0 0.0
        %3285 = vmatmul.mubr.f32.gmra.mrb[0].mxu0 %v3195
        %v3286 = vpop.f32.mrb[0].mxu0
        %v3287 = vadd.f32 0.0, %v3286
        %v3288 = vpop.f32.mrb[0].mxu0
        %3289 = vmatprep.mubr.f32.mxu0 0.0
        %3290 = vmatmul.mubr.f32.gmra.mrb[0].mxu0 %v3198
        %v3291 = vpop.f32.mrb[0].mxu0
        %v3292 = vadd.f32 0.0, %v3291
        %v3293 = vpop.f32.mrb[0].mxu0
        %3294 = vmatprep.mubr.f32.mxu0 0.0
        %3295 = vmatmul.mubr.f32.gmra.mrb[0].mxu0 %v3201
        %v3296 = vpop.f32.mrb[0].mxu0
        %v3297 = vadd.f32 0.0, %v3296
        %v3298 = vpop.f32.mrb[0].mxu0
        %3299 = vmatprep.mubr.f32.mxu0 0.0
        %3300 = vmatmul.mubr.f32.gmra.mrb[0].mxu0 %v3204
        %v3301 = vpop.f32.mrb[0].mxu0
        %v3302 = vadd.f32 0.0, %v3301
        %v3303 = vpop.f32.mrb[0].mxu0
        %3304 = vmatprep.mubr.f32.mxu0 0.0
        %3305 = vmatmul.mubr.f32.gmra.mrb[0].mxu0 %v3207
        %v3306 = vpop.f32.mrb[0].mxu0
        %v3307 = vadd.f32 0.0, %v3306
        %v3308 = vpop.f32.mrb[0].mxu0
        %3309 = vmatprep.mubr.f32.mxu0 0.0
        %3310 = vmatmul.mubr.f32.gmra.mrb[0].mxu0 %v3210
        %v3311 = vpop.f32.mrb[0].mxu0
        %v3312 = vadd.f32 0.0, %v3311
        %v3313 = vpop.f32.mrb[0].mxu0
        %3314 = vmatprep.mubr.f32.mxu0 0.0
        %3315 = vmatmul.mubr.f32.gmra.mrb[0].mxu0 %v3213
        %v3316 = vpop.f32.mrb[0].mxu0
        %v3317 = vadd.f32 0.0, %v3316
        %v3318 = vpop.f32.mrb[0].mxu0
        %3319 = vdwg.mxu0
        %vm3320 = vcmp.ge.f32.partialorder %v3282, 0.0
        %vm3321 = vcmp.ge.f32.partialorder %v3287, 0.0
        %vm3322 = vcmp.ge.f32.partialorder %v3292, 0.0
        %vm3323 = vcmp.ge.f32.partialorder %v3297, 0.0
        %vm3324 = vcmp.ge.f32.partialorder %v3302, 0.0
        %vm3325 = vcmp.ge.f32.partialorder %v3307, 0.0
        %vm3326 = vcmp.ge.f32.partialorder %v3312, 0.0
        %vm3327 = vcmp.ge.f32.partialorder %v3317, 0.0
        %v3328 = vmul.f32 %v3282, 0.01
        %v3329 = vmul.f32 %v3287, 0.01
        %v3330 = vmul.f32 %v3292, 0.01
        %v3331 = vmul.f32 %v3297, 0.01
        %v3332 = vmul.f32 %v3302, 0.01
        %v3333 = vmul.f32 %v3307, 0.01
        %v3334 = vmul.f32 %v3312, 0.01
        %v3335 = vmul.f32 %v3317, 0.01
        %v3336 = vsel %vm3320, %v3282, %v3328
        %v3337 = vsel %vm3321, %v3287, %v3329
        %v3338 = vsel %vm3322, %v3292, %v3330
        %v3339 = vsel %vm3323, %v3297, %v3331
        %v3340 = vsel %vm3324, %v3302, %v3332
        %v3341 = vsel %vm3325, %v3307, %v3333
        %v3342 = vsel %vm3326, %v3312, %v3334
        %v3343 = vsel %vm3327, %v3317, %v3335
        %v3345 = vsel %vm1308, %v1485, 0
        %v3348 = vsel %vm1308, %v1486, 0
        %3350 = vmatprep.subr.mxu0 0.0
        %3351 = vmatpush1.msra.mxu0 %v3336
        %3352 = vmatprep.subr.mxu0 0.0
        %3353 = vmatpush1.msra.mxu0 0.0
        %3354 = vmatprep.subr.mxu0 0.0
        %3355 = vmatpush1.msra.mxu0 0.0
        %3356 = vmatprep.subr.mxu0 0.0
        %3357 = vmatpush1.msra.mxu0 0.0
        %3358 = vmatprep.subr.mxu0 0.0
        %3359 = vmatpush1.msra.mxu0 0.0
        %3360 = vmatprep.subr.mxu0 0.0
        %3361 = vmatpush1.msra.mxu0 0.0
        %3362 = vmatprep.subr.mxu0 0.0
        %3363 = vmatpush1.msra.mxu0 0.0
        %3364 = vmatprep.subr.mxu0 0.0
        %3365 = vmatpush1.msra.mxu0 0.0
        %3366 = vmatprep.subr.mxu0 0.0
        %3367 = vmatpush1.msra.mxu0 0.0
        %3368 = vmatprep.subr.mxu0 0.0
        %3369 = vmatpush1.msra.mxu0 0.0
        %3370 = vmatprep.subr.mxu0 0.0
        %3371 = vmatpush1.msra.mxu0 0.0
        %3372 = vmatprep.subr.mxu0 0.0
        %3373 = vmatpush1.msra.mxu0 0.0
        %3374 = vmatprep.subr.mxu0 0.0
        %3375 = vmatpush1.msra.mxu0 0.0
        %3376 = vmatprep.subr.mxu0 0.0
        %3377 = vmatpush1.msra.mxu0 0.0
        %3378 = vmatprep.subr.mxu0 0.0
        %3379 = vmatpush1.msra.mxu0 0.0
        %3380 = vmatprep.subr.mxu0 0.0
        %3381 = vmatpush1.msra.mxu0 0.0
        %3382 = vmatprep.subr.mxu0 0.0
        %3383 = vmatpush1.msra.mxu0 0.0
        %3384 = vmatprep.subr.mxu0 0.0
        %3385 = vmatpush1.msra.mxu0 0.0
        %3386 = vmatprep.subr.mxu0 0.0
        %3387 = vmatpush1.msra.mxu0 0.0
        %3388 = vmatprep.subr.mxu0 0.0
        %3389 = vmatpush1.msra.mxu0 0.0
        %3390 = vmatprep.subr.mxu0 0.0
        %3391 = vmatpush1.msra.mxu0 0.0
        %3392 = vmatprep.subr.mxu0 0.0
        %3393 = vmatpush1.msra.mxu0 0.0
        %3394 = vmatprep.subr.mxu0 0.0
        %3395 = vmatpush1.msra.mxu0 0.0
        %3396 = vmatprep.subr.mxu0 0.0
        %3397 = vmatpush1.msra.mxu0 0.0
        %3398 = vmatprep.subr.mxu0 0.0
        %3399 = vmatpush1.msra.mxu0 0.0
        %3400 = vmatprep.subr.mxu0 0.0
        %3401 = vmatpush1.msra.mxu0 0.0
        %3402 = vmatprep.subr.mxu0 0.0
        %3403 = vmatpush1.msra.mxu0 0.0
        %3404 = vmatprep.subr.mxu0 0.0
        %3405 = vmatpush1.msra.mxu0 0.0
        %3406 = vmatprep.subr.mxu0 0.0
        %3407 = vmatpush1.msra.mxu0 0.0
        %3408 = vmatprep.subr.mxu0 0.0
        %3409 = vmatpush1.msra.mxu0 0.0
        %3410 = vmatprep.subr.mxu0 0.0
        %3411 = vmatpush1.msra.mxu0 0.0
        %3412 = vmatprep.subr.mxu0 0.0
        %3413 = vmatpush1.msra.mxu0 0.0
        %3414 = vmatprep.mubr.f32.mxu0 0.0
        %3415 = vmatmul.mubr.f32.gmra.mrb[0].mxu0 %v3345
        %v3416 = vpop.f32.mrb[0].mxu0
        %v3417 = vadd.f32 0.0, %v3416
        %v3418 = vpop.f32.mrb[0].mxu0
        %3419 = vmatprep.mubr.f32.mxu0 0.0
        %3420 = vmatmul.mubr.f32.gmra.mrb[0].mxu0 %v3348
        %v3421 = vpop.f32.mrb[0].mxu0
        %v3422 = vadd.f32 0.0, %v3421
        %v3423 = vpop.f32.mrb[0].mxu0
        %3424 = vdwg.mxu0
        %v3426 = vsel %vm1308, %v1487, 0
        %v3429 = vsel %vm1308, %v1488, 0
        %3431 = vmatprep.subr.mxu0 0.0
        %3432 = vmatpush1.msra.mxu0 %v3337
        %3433 = vmatprep.subr.mxu0 0.0
        %3434 = vmatpush1.msra.mxu0 0.0
        %3435 = vmatprep.subr.mxu0 0.0
        %3436 = vmatpush1.msra.mxu0 0.0
        %3437 = vmatprep.subr.mxu0 0.0
        %3438 = vmatpush1.msra.mxu0 0.0
        %3439 = vmatprep.subr.mxu0 0.0
        %3440 = vmatpush1.msra.mxu0 0.0
        %3441 = vmatprep.subr.mxu0 0.0
        %3442 = vmatpush1.msra.mxu0 0.0
        %3443 = vmatprep.subr.mxu0 0.0
        %3444 = vmatpush1.msra.mxu0 0.0
        %3445 = vmatprep.subr.mxu0 0.0
        %3446 = vmatpush1.msra.mxu0 0.0
        %3447 = vmatprep.subr.mxu0 0.0
        %3448 = vmatpush1.msra.mxu0 0.0
        %3449 = vmatprep.subr.mxu0 0.0
        %3450 = vmatpush1.msra.mxu0 0.0
        %3451 = vmatprep.subr.mxu0 0.0
        %3452 = vmatpush1.msra.mxu0 0.0
        %3453 = vmatprep.subr.mxu0 0.0
        %3454 = vmatpush1.msra.mxu0 0.0
        %3455 = vmatprep.subr.mxu0 0.0
        %3456 = vmatpush1.msra.mxu0 0.0
        %3457 = vmatprep.subr.mxu0 0.0
        %3458 = vmatpush1.msra.mxu0 0.0
        %3459 = vmatprep.subr.mxu0 0.0
        %3460 = vmatpush1.msra.mxu0 0.0
        %3461 = vmatprep.subr.mxu0 0.0
        %3462 = vmatpush1.msra.mxu0 0.0
        %3463 = vmatprep.subr.mxu0 0.0
        %3464 = vmatpush1.msra.mxu0 0.0
        %3465 = vmatprep.subr.mxu0 0.0
        %3466 = vmatpush1.msra.mxu0 0.0
        %3467 = vmatprep.subr.mxu0 0.0
        %3468 = vmatpush1.msra.mxu0 0.0
        %3469 = vmatprep.subr.mxu0 0.0
        %3470 = vmatpush1.msra.mxu0 0.0
        %3471 = vmatprep.subr.mxu0 0.0
        %3472 = vmatpush1.msra.mxu0 0.0
        %3473 = vmatprep.subr.mxu0 0.0
        %3474 = vmatpush1.msra.mxu0 0.0
        %3475 = vmatprep.subr.mxu0 0.0
        %3476 = vmatpush1.msra.mxu0 0.0
        %3477 = vmatprep.subr.mxu0 0.0
        %3478 = vmatpush1.msra.mxu0 0.0
        %3479 = vmatprep.subr.mxu0 0.0
        %3480 = vmatpush1.msra.mxu0 0.0
        %3481 = vmatprep.subr.mxu0 0.0
        %3482 = vmatpush1.msra.mxu0 0.0
        %3483 = vmatprep.subr.mxu0 0.0
        %3484 = vmatpush1.msra.mxu0 0.0
        %3485 = vmatprep.subr.mxu0 0.0
        %3486 = vmatpush1.msra.mxu0 0.0
        %3487 = vmatprep.subr.mxu0 0.0
        %3488 = vmatpush1.msra.mxu0 0.0
        %3489 = vmatprep.subr.mxu0 0.0
        %3490 = vmatpush1.msra.mxu0 0.0
        %3491 = vmatprep.subr.mxu0 0.0
        %3492 = vmatpush1.msra.mxu0 0.0
        %3493 = vmatprep.subr.mxu0 0.0
        %3494 = vmatpush1.msra.mxu0 0.0
        %3495 = vmatprep.mubr.f32.mxu0 0.0
        %3496 = vmatmul.mubr.f32.gmra.mrb[0].mxu0 %v3426
        %v3497 = vpop.f32.mrb[0].mxu0
        %v3498 = vadd.f32 0.0, %v3497
        %v3499 = vpop.f32.mrb[0].mxu0
        %3500 = vmatprep.mubr.f32.mxu0 0.0
        %3501 = vmatmul.mubr.f32.gmra.mrb[0].mxu0 %v3429
        %v3502 = vpop.f32.mrb[0].mxu0
        %v3503 = vadd.f32 0.0, %v3502
        %v3504 = vpop.f32.mrb[0].mxu0
        %3505 = vdwg.mxu0
        %v3507 = vsel %vm1308, %v1489, 0
        %v3510 = vsel %vm1308, %v1490, 0
        %3512 = vmatprep.subr.mxu0 0.0
        %3513 = vmatpush1.msra.mxu0 %v3338
        %3514 = vmatprep.subr.mxu0 0.0
        %3515 = vmatpush1.msra.mxu0 0.0
        %3516 = vmatprep.subr.mxu0 0.0
        %3517 = vmatpush1.msra.mxu0 0.0
        %3518 = vmatprep.subr.mxu0 0.0
        %3519 = vmatpush1.msra.mxu0 0.0
        %3520 = vmatprep.subr.mxu0 0.0
        %3521 = vmatpush1.msra.mxu0 0.0
        %3522 = vmatprep.subr.mxu0 0.0
        %3523 = vmatpush1.msra.mxu0 0.0
        %3524 = vmatprep.subr.mxu0 0.0
        %3525 = vmatpush1.msra.mxu0 0.0
        %3526 = vmatprep.subr.mxu0 0.0
        %3527 = vmatpush1.msra.mxu0 0.0
        %3528 = vmatprep.subr.mxu0 0.0
        %3529 = vmatpush1.msra.mxu0 0.0
        %3530 = vmatprep.subr.mxu0 0.0
        %3531 = vmatpush1.msra.mxu0 0.0
        %3532 = vmatprep.subr.mxu0 0.0
        %3533 = vmatpush1.msra.mxu0 0.0
        %3534 = vmatprep.subr.mxu0 0.0
        %3535 = vmatpush1.msra.mxu0 0.0
        %3536 = vmatprep.subr.mxu0 0.0
        %3537 = vmatpush1.msra.mxu0 0.0
        %3538 = vmatprep.subr.mxu0 0.0
        %3539 = vmatpush1.msra.mxu0 0.0
        %3540 = vmatprep.subr.mxu0 0.0
        %3541 = vmatpush1.msra.mxu0 0.0
        %3542 = vmatprep.subr.mxu0 0.0
        %3543 = vmatpush1.msra.mxu0 0.0
        %3544 = vmatprep.subr.mxu0 0.0
        %3545 = vmatpush1.msra.mxu0 0.0
        %3546 = vmatprep.subr.mxu0 0.0
        %3547 = vmatpush1.msra.mxu0 0.0
        %3548 = vmatprep.subr.mxu0 0.0
        %3549 = vmatpush1.msra.mxu0 0.0
        %3550 = vmatprep.subr.mxu0 0.0
        %3551 = vmatpush1.msra.mxu0 0.0
        %3552 = vmatprep.subr.mxu0 0.0
        %3553 = vmatpush1.msra.mxu0 0.0
        %3554 = vmatprep.subr.mxu0 0.0
        %3555 = vmatpush1.msra.mxu0 0.0
        %3556 = vmatprep.subr.mxu0 0.0
        %3557 = vmatpush1.msra.mxu0 0.0
        %3558 = vmatprep.subr.mxu0 0.0
        %3559 = vmatpush1.msra.mxu0 0.0
        %3560 = vmatprep.subr.mxu0 0.0
        %3561 = vmatpush1.msra.mxu0 0.0
        %3562 = vmatprep.subr.mxu0 0.0
        %3563 = vmatpush1.msra.mxu0 0.0
        %3564 = vmatprep.subr.mxu0 0.0
        %3565 = vmatpush1.msra.mxu0 0.0
        %3566 = vmatprep.subr.mxu0 0.0
        %3567 = vmatpush1.msra.mxu0 0.0
        %3568 = vmatprep.subr.mxu0 0.0
        %3569 = vmatpush1.msra.mxu0 0.0
        %3570 = vmatprep.subr.mxu0 0.0
        %3571 = vmatpush1.msra.mxu0 0.0
        %3572 = vmatprep.subr.mxu0 0.0
        %3573 = vmatpush1.msra.mxu0 0.0
        %3574 = vmatprep.subr.mxu0 0.0
        %3575 = vmatpush1.msra.mxu0 0.0
        %3576 = vmatprep.mubr.f32.mxu0 0.0
        %3577 = vmatmul.mubr.f32.gmra.mrb[0].mxu0 %v3507
        %v3578 = vpop.f32.mrb[0].mxu0
        %v3579 = vadd.f32 0.0, %v3578
        %v3580 = vpop.f32.mrb[0].mxu0
        %3581 = vmatprep.mubr.f32.mxu0 0.0
        %3582 = vmatmul.mubr.f32.gmra.mrb[0].mxu0 %v3510
        %v3583 = vpop.f32.mrb[0].mxu0
        %v3584 = vadd.f32 0.0, %v3583
        %v3585 = vpop.f32.mrb[0].mxu0
        %3586 = vdwg.mxu0
        %v3588 = vsel %vm1308, %v1491, 0
        %v3591 = vsel %vm1308, %v1492, 0
        %3593 = vmatprep.subr.mxu0 0.0
        %3594 = vmatpush1.msra.mxu0 %v3339
        %3595 = vmatprep.subr.mxu0 0.0
        %3596 = vmatpush1.msra.mxu0 0.0
        %3597 = vmatprep.subr.mxu0 0.0
        %3598 = vmatpush1.msra.mxu0 0.0
        %3599 = vmatprep.subr.mxu0 0.0
        %3600 = vmatpush1.msra.mxu0 0.0
        %3601 = vmatprep.subr.mxu0 0.0
        %3602 = vmatpush1.msra.mxu0 0.0
        %3603 = vmatprep.subr.mxu0 0.0
        %3604 = vmatpush1.msra.mxu0 0.0
        %3605 = vmatprep.subr.mxu0 0.0
        %3606 = vmatpush1.msra.mxu0 0.0
        %3607 = vmatprep.subr.mxu0 0.0
        %3608 = vmatpush1.msra.mxu0 0.0
        %3609 = vmatprep.subr.mxu0 0.0
        %3610 = vmatpush1.msra.mxu0 0.0
        %3611 = vmatprep.subr.mxu0 0.0
        %3612 = vmatpush1.msra.mxu0 0.0
        %3613 = vmatprep.subr.mxu0 0.0
        %3614 = vmatpush1.msra.mxu0 0.0
        %3615 = vmatprep.subr.mxu0 0.0
        %3616 = vmatpush1.msra.mxu0 0.0
        %3617 = vmatprep.subr.mxu0 0.0
        %3618 = vmatpush1.msra.mxu0 0.0
        %3619 = vmatprep.subr.mxu0 0.0
        %3620 = vmatpush1.msra.mxu0 0.0
        %3621 = vmatprep.subr.mxu0 0.0
        %3622 = vmatpush1.msra.mxu0 0.0
        %3623 = vmatprep.subr.mxu0 0.0
        %3624 = vmatpush1.msra.mxu0 0.0
        %3625 = vmatprep.subr.mxu0 0.0
        %3626 = vmatpush1.msra.mxu0 0.0
        %3627 = vmatprep.subr.mxu0 0.0
        %3628 = vmatpush1.msra.mxu0 0.0
        %3629 = vmatprep.subr.mxu0 0.0
        %3630 = vmatpush1.msra.mxu0 0.0
        %3631 = vmatprep.subr.mxu0 0.0
        %3632 = vmatpush1.msra.mxu0 0.0
        %3633 = vmatprep.subr.mxu0 0.0
        %3634 = vmatpush1.msra.mxu0 0.0
        %3635 = vmatprep.subr.mxu0 0.0
        %3636 = vmatpush1.msra.mxu0 0.0
        %3637 = vmatprep.subr.mxu0 0.0
        %3638 = vmatpush1.msra.mxu0 0.0
        %3639 = vmatprep.subr.mxu0 0.0
        %3640 = vmatpush1.msra.mxu0 0.0
        %3641 = vmatprep.subr.mxu0 0.0
        %3642 = vmatpush1.msra.mxu0 0.0
        %3643 = vmatprep.subr.mxu0 0.0
        %3644 = vmatpush1.msra.mxu0 0.0
        %3645 = vmatprep.subr.mxu0 0.0
        %3646 = vmatpush1.msra.mxu0 0.0
        %3647 = vmatprep.subr.mxu0 0.0
        %3648 = vmatpush1.msra.mxu0 0.0
        %3649 = vmatprep.subr.mxu0 0.0
        %3650 = vmatpush1.msra.mxu0 0.0
        %3651 = vmatprep.subr.mxu0 0.0
        %3652 = vmatpush1.msra.mxu0 0.0
        %3653 = vmatprep.subr.mxu0 0.0
        %3654 = vmatpush1.msra.mxu0 0.0
        %3655 = vmatprep.subr.mxu0 0.0
        %3656 = vmatpush1.msra.mxu0 0.0
        %3657 = vmatprep.mubr.f32.mxu0 0.0
        %3658 = vmatmul.mubr.f32.gmra.mrb[0].mxu0 %v3588
        %v3659 = vpop.f32.mrb[0].mxu0
        %v3660 = vadd.f32 0.0, %v3659
        %v3661 = vpop.f32.mrb[0].mxu0
        %3662 = vmatprep.mubr.f32.mxu0 0.0
        %3663 = vmatmul.mubr.f32.gmra.mrb[0].mxu0 %v3591
        %v3664 = vpop.f32.mrb[0].mxu0
        %v3665 = vadd.f32 0.0, %v3664
        %v3666 = vpop.f32.mrb[0].mxu0
        %3667 = vdwg.mxu0
        %v3669 = vsel %vm1308, %v1493, 0
        %v3672 = vsel %vm1308, %v1494, 0
        %3674 = vmatprep.subr.mxu0 0.0
        %3675 = vmatpush1.msra.mxu0 %v3340
        %3676 = vmatprep.subr.mxu0 0.0
        %3677 = vmatpush1.msra.mxu0 0.0
        %3678 = vmatprep.subr.mxu0 0.0
        %3679 = vmatpush1.msra.mxu0 0.0
        %3680 = vmatprep.subr.mxu0 0.0
        %3681 = vmatpush1.msra.mxu0 0.0
        %3682 = vmatprep.subr.mxu0 0.0
        %3683 = vmatpush1.msra.mxu0 0.0
        %3684 = vmatprep.subr.mxu0 0.0
        %3685 = vmatpush1.msra.mxu0 0.0
        %3686 = vmatprep.subr.mxu0 0.0
        %3687 = vmatpush1.msra.mxu0 0.0
        %3688 = vmatprep.subr.mxu0 0.0
        %3689 = vmatpush1.msra.mxu0 0.0
        %3690 = vmatprep.subr.mxu0 0.0
        %3691 = vmatpush1.msra.mxu0 0.0
        %3692 = vmatprep.subr.mxu0 0.0
        %3693 = vmatpush1.msra.mxu0 0.0
        %3694 = vmatprep.subr.mxu0 0.0
        %3695 = vmatpush1.msra.mxu0 0.0
        %3696 = vmatprep.subr.mxu0 0.0
        %3697 = vmatpush1.msra.mxu0 0.0
        %3698 = vmatprep.subr.mxu0 0.0
        %3699 = vmatpush1.msra.mxu0 0.0
        %3700 = vmatprep.subr.mxu0 0.0
        %3701 = vmatpush1.msra.mxu0 0.0
        %3702 = vmatprep.subr.mxu0 0.0
        %3703 = vmatpush1.msra.mxu0 0.0
        %3704 = vmatprep.subr.mxu0 0.0
        %3705 = vmatpush1.msra.mxu0 0.0
        %3706 = vmatprep.subr.mxu0 0.0
        %3707 = vmatpush1.msra.mxu0 0.0
        %3708 = vmatprep.subr.mxu0 0.0
        %3709 = vmatpush1.msra.mxu0 0.0
        %3710 = vmatprep.subr.mxu0 0.0
        %3711 = vmatpush1.msra.mxu0 0.0
        %3712 = vmatprep.subr.mxu0 0.0
        %3713 = vmatpush1.msra.mxu0 0.0
        %3714 = vmatprep.subr.mxu0 0.0
        %3715 = vmatpush1.msra.mxu0 0.0
        %3716 = vmatprep.subr.mxu0 0.0
        %3717 = vmatpush1.msra.mxu0 0.0
        %3718 = vmatprep.subr.mxu0 0.0
        %3719 = vmatpush1.msra.mxu0 0.0
        %3720 = vmatprep.subr.mxu0 0.0
        %3721 = vmatpush1.msra.mxu0 0.0
        %3722 = vmatprep.subr.mxu0 0.0
        %3723 = vmatpush1.msra.mxu0 0.0
        %3724 = vmatprep.subr.mxu0 0.0
        %3725 = vmatpush1.msra.mxu0 0.0
        %3726 = vmatprep.subr.mxu0 0.0
        %3727 = vmatpush1.msra.mxu0 0.0
        %3728 = vmatprep.subr.mxu0 0.0
        %3729 = vmatpush1.msra.mxu0 0.0
        %3730 = vmatprep.subr.mxu0 0.0
        %3731 = vmatpush1.msra.mxu0 0.0
        %3732 = vmatprep.subr.mxu0 0.0
        %3733 = vmatpush1.msra.mxu0 0.0
        %3734 = vmatprep.subr.mxu0 0.0
        %3735 = vmatpush1.msra.mxu0 0.0
        %3736 = vmatprep.subr.mxu0 0.0
        %3737 = vmatpush1.msra.mxu0 0.0
        %3738 = vmatprep.mubr.f32.mxu0 0.0
        %3739 = vmatmul.mubr.f32.gmra.mrb[0].mxu0 %v3669
        %v3740 = vpop.f32.mrb[0].mxu0
        %v3741 = vadd.f32 0.0, %v3740
        %v3742 = vpop.f32.mrb[0].mxu0
        %3743 = vmatprep.mubr.f32.mxu0 0.0
        %3744 = vmatmul.mubr.f32.gmra.mrb[0].mxu0 %v3672
        %v3745 = vpop.f32.mrb[0].mxu0
        %v3746 = vadd.f32 0.0, %v3745
        %v3747 = vpop.f32.mrb[0].mxu0
        %3748 = vdwg.mxu0
        %v3750 = vsel %vm1308, %v1495, 0
        %v3753 = vsel %vm1308, %v1496, 0
        %3755 = vmatprep.subr.mxu0 0.0
        %3756 = vmatpush1.msra.mxu0 %v3341
        %3757 = vmatprep.subr.mxu0 0.0
        %3758 = vmatpush1.msra.mxu0 0.0
        %3759 = vmatprep.subr.mxu0 0.0
        %3760 = vmatpush1.msra.mxu0 0.0
        %3761 = vmatprep.subr.mxu0 0.0
        %3762 = vmatpush1.msra.mxu0 0.0
        %3763 = vmatprep.subr.mxu0 0.0
        %3764 = vmatpush1.msra.mxu0 0.0
        %3765 = vmatprep.subr.mxu0 0.0
        %3766 = vmatpush1.msra.mxu0 0.0
        %3767 = vmatprep.subr.mxu0 0.0
        %3768 = vmatpush1.msra.mxu0 0.0
        %3769 = vmatprep.subr.mxu0 0.0
        %3770 = vmatpush1.msra.mxu0 0.0
        %3771 = vmatprep.subr.mxu0 0.0
        %3772 = vmatpush1.msra.mxu0 0.0
        %3773 = vmatprep.subr.mxu0 0.0
        %3774 = vmatpush1.msra.mxu0 0.0
        %3775 = vmatprep.subr.mxu0 0.0
        %3776 = vmatpush1.msra.mxu0 0.0
        %3777 = vmatprep.subr.mxu0 0.0
        %3778 = vmatpush1.msra.mxu0 0.0
        %3779 = vmatprep.subr.mxu0 0.0
        %3780 = vmatpush1.msra.mxu0 0.0
        %3781 = vmatprep.subr.mxu0 0.0
        %3782 = vmatpush1.msra.mxu0 0.0
        %3783 = vmatprep.subr.mxu0 0.0
        %3784 = vmatpush1.msra.mxu0 0.0
        %3785 = vmatprep.subr.mxu0 0.0
        %3786 = vmatpush1.msra.mxu0 0.0
        %3787 = vmatprep.subr.mxu0 0.0
        %3788 = vmatpush1.msra.mxu0 0.0
        %3789 = vmatprep.subr.mxu0 0.0
        %3790 = vmatpush1.msra.mxu0 0.0
        %3791 = vmatprep.subr.mxu0 0.0
        %3792 = vmatpush1.msra.mxu0 0.0
        %3793 = vmatprep.subr.mxu0 0.0
        %3794 = vmatpush1.msra.mxu0 0.0
        %3795 = vmatprep.subr.mxu0 0.0
        %3796 = vmatpush1.msra.mxu0 0.0
        %3797 = vmatprep.subr.mxu0 0.0
        %3798 = vmatpush1.msra.mxu0 0.0
        %3799 = vmatprep.subr.mxu0 0.0
        %3800 = vmatpush1.msra.mxu0 0.0
        %3801 = vmatprep.subr.mxu0 0.0
        %3802 = vmatpush1.msra.mxu0 0.0
        %3803 = vmatprep.subr.mxu0 0.0
        %3804 = vmatpush1.msra.mxu0 0.0
        %3805 = vmatprep.subr.mxu0 0.0
        %3806 = vmatpush1.msra.mxu0 0.0
        %3807 = vmatprep.subr.mxu0 0.0
        %3808 = vmatpush1.msra.mxu0 0.0
        %3809 = vmatprep.subr.mxu0 0.0
        %3810 = vmatpush1.msra.mxu0 0.0
        %3811 = vmatprep.subr.mxu0 0.0
        %3812 = vmatpush1.msra.mxu0 0.0
        %3813 = vmatprep.subr.mxu0 0.0
        %3814 = vmatpush1.msra.mxu0 0.0
        %3815 = vmatprep.subr.mxu0 0.0
        %3816 = vmatpush1.msra.mxu0 0.0
        %3817 = vmatprep.subr.mxu0 0.0
        %3818 = vmatpush1.msra.mxu0 0.0
        %3819 = vmatprep.mubr.f32.mxu0 0.0
        %3820 = vmatmul.mubr.f32.gmra.mrb[0].mxu0 %v3750
        %v3821 = vpop.f32.mrb[0].mxu0
        %v3822 = vadd.f32 0.0, %v3821
        %v3823 = vpop.f32.mrb[0].mxu0
        %3824 = vmatprep.mubr.f32.mxu0 0.0
        %3825 = vmatmul.mubr.f32.gmra.mrb[0].mxu0 %v3753
        %v3826 = vpop.f32.mrb[0].mxu0
        %v3827 = vadd.f32 0.0, %v3826
        %v3828 = vpop.f32.mrb[0].mxu0
        %3829 = vdwg.mxu0
        %v3831 = vsel %vm1308, %v1497, 0
        %v3834 = vsel %vm1308, %v1498, 0
        %3836 = vmatprep.subr.mxu0 0.0
        %3837 = vmatpush1.msra.mxu0 %v3342
        %3838 = vmatprep.subr.mxu0 0.0
        %3839 = vmatpush1.msra.mxu0 0.0
        %3840 = vmatprep.subr.mxu0 0.0
        %3841 = vmatpush1.msra.mxu0 0.0
        %3842 = vmatprep.subr.mxu0 0.0
        %3843 = vmatpush1.msra.mxu0 0.0
        %3844 = vmatprep.subr.mxu0 0.0
        %3845 = vmatpush1.msra.mxu0 0.0
        %3846 = vmatprep.subr.mxu0 0.0
        %3847 = vmatpush1.msra.mxu0 0.0
        %3848 = vmatprep.subr.mxu0 0.0
        %3849 = vmatpush1.msra.mxu0 0.0
        %3850 = vmatprep.subr.mxu0 0.0
        %3851 = vmatpush1.msra.mxu0 0.0
        %3852 = vmatprep.subr.mxu0 0.0
        %3853 = vmatpush1.msra.mxu0 0.0
        %3854 = vmatprep.subr.mxu0 0.0
        %3855 = vmatpush1.msra.mxu0 0.0
        %3856 = vmatprep.subr.mxu0 0.0
        %3857 = vmatpush1.msra.mxu0 0.0
        %3858 = vmatprep.subr.mxu0 0.0
        %3859 = vmatpush1.msra.mxu0 0.0
        %3860 = vmatprep.subr.mxu0 0.0
        %3861 = vmatpush1.msra.mxu0 0.0
        %3862 = vmatprep.subr.mxu0 0.0
        %3863 = vmatpush1.msra.mxu0 0.0
        %3864 = vmatprep.subr.mxu0 0.0
        %3865 = vmatpush1.msra.mxu0 0.0
        %3866 = vmatprep.subr.mxu0 0.0
        %3867 = vmatpush1.msra.mxu0 0.0
        %3868 = vmatprep.subr.mxu0 0.0
        %3869 = vmatpush1.msra.mxu0 0.0
        %3870 = vmatprep.subr.mxu0 0.0
        %3871 = vmatpush1.msra.mxu0 0.0
        %3872 = vmatprep.subr.mxu0 0.0
        %3873 = vmatpush1.msra.mxu0 0.0
        %3874 = vmatprep.subr.mxu0 0.0
        %3875 = vmatpush1.msra.mxu0 0.0
        %3876 = vmatprep.subr.mxu0 0.0
        %3877 = vmatpush1.msra.mxu0 0.0
        %3878 = vmatprep.subr.mxu0 0.0
        %3879 = vmatpush1.msra.mxu0 0.0
        %3880 = vmatprep.subr.mxu0 0.0
        %3881 = vmatpush1.msra.mxu0 0.0
        %3882 = vmatprep.subr.mxu0 0.0
        %3883 = vmatpush1.msra.mxu0 0.0
        %3884 = vmatprep.subr.mxu0 0.0
        %3885 = vmatpush1.msra.mxu0 0.0
        %3886 = vmatprep.subr.mxu0 0.0
        %3887 = vmatpush1.msra.mxu0 0.0
        %3888 = vmatprep.subr.mxu0 0.0
        %3889 = vmatpush1.msra.mxu0 0.0
        %3890 = vmatprep.subr.mxu0 0.0
        %3891 = vmatpush1.msra.mxu0 0.0
        %3892 = vmatprep.subr.mxu0 0.0
        %3893 = vmatpush1.msra.mxu0 0.0
        %3894 = vmatprep.subr.mxu0 0.0
        %3895 = vmatpush1.msra.mxu0 0.0
        %3896 = vmatprep.subr.mxu0 0.0
        %3897 = vmatpush1.msra.mxu0 0.0
        %3898 = vmatprep.subr.mxu0 0.0
        %3899 = vmatpush1.msra.mxu0 0.0
        %3900 = vmatprep.mubr.f32.mxu0 0.0
        %3901 = vmatmul.mubr.f32.gmra.mrb[0].mxu0 %v3831
        %v3902 = vpop.f32.mrb[0].mxu0
        %v3903 = vadd.f32 0.0, %v3902
        %v3904 = vpop.f32.mrb[0].mxu0
        %3905 = vmatprep.mubr.f32.mxu0 0.0
        %3906 = vmatmul.mubr.f32.gmra.mrb[0].mxu0 %v3834
        %v3907 = vpop.f32.mrb[0].mxu0
        %v3908 = vadd.f32 0.0, %v3907
        %v3909 = vpop.f32.mrb[0].mxu0
        %3910 = vdwg.mxu0
        %v3912 = vsel %vm1308, %v1499, 0
        %v3915 = vsel %vm1308, %v1500, 0
        %3917 = vmatprep.subr.mxu0 0.0
        %3918 = vmatpush1.msra.mxu0 %v3343
        %3919 = vmatprep.subr.mxu0 0.0
        %3920 = vmatpush1.msra.mxu0 0.0
        %3921 = vmatprep.subr.mxu0 0.0
        %3922 = vmatpush1.msra.mxu0 0.0
        %3923 = vmatprep.subr.mxu0 0.0
        %3924 = vmatpush1.msra.mxu0 0.0
        %3925 = vmatprep.subr.mxu0 0.0
        %3926 = vmatpush1.msra.mxu0 0.0
        %3927 = vmatprep.subr.mxu0 0.0
        %3928 = vmatpush1.msra.mxu0 0.0
        %3929 = vmatprep.subr.mxu0 0.0
        %3930 = vmatpush1.msra.mxu0 0.0
        %3931 = vmatprep.subr.mxu0 0.0
        %3932 = vmatpush1.msra.mxu0 0.0
        %3933 = vmatprep.subr.mxu0 0.0
        %3934 = vmatpush1.msra.mxu0 0.0
        %3935 = vmatprep.subr.mxu0 0.0
        %3936 = vmatpush1.msra.mxu0 0.0
        %3937 = vmatprep.subr.mxu0 0.0
        %3938 = vmatpush1.msra.mxu0 0.0
        %3939 = vmatprep.subr.mxu0 0.0
        %3940 = vmatpush1.msra.mxu0 0.0
        %3941 = vmatprep.subr.mxu0 0.0
        %3942 = vmatpush1.msra.mxu0 0.0
        %3943 = vmatprep.subr.mxu0 0.0
        %3944 = vmatpush1.msra.mxu0 0.0
        %3945 = vmatprep.subr.mxu0 0.0
        %3946 = vmatpush1.msra.mxu0 0.0
        %3947 = vmatprep.subr.mxu0 0.0
        %3948 = vmatpush1.msra.mxu0 0.0
        %3949 = vmatprep.subr.mxu0 0.0
        %3950 = vmatpush1.msra.mxu0 0.0
        %3951 = vmatprep.subr.mxu0 0.0
        %3952 = vmatpush1.msra.mxu0 0.0
        %3953 = vmatprep.subr.mxu0 0.0
        %3954 = vmatpush1.msra.mxu0 0.0
        %3955 = vmatprep.subr.mxu0 0.0
        %3956 = vmatpush1.msra.mxu0 0.0
        %3957 = vmatprep.subr.mxu0 0.0
        %3958 = vmatpush1.msra.mxu0 0.0
        %3959 = vmatprep.subr.mxu0 0.0
        %3960 = vmatpush1.msra.mxu0 0.0
        %3961 = vmatprep.subr.mxu0 0.0
        %3962 = vmatpush1.msra.mxu0 0.0
        %3963 = vmatprep.subr.mxu0 0.0
        %3964 = vmatpush1.msra.mxu0 0.0
        %3965 = vmatprep.subr.mxu0 0.0
        %3966 = vmatpush1.msra.mxu0 0.0
        %3967 = vmatprep.subr.mxu0 0.0
        %3968 = vmatpush1.msra.mxu0 0.0
        %3969 = vmatprep.subr.mxu0 0.0
        %3970 = vmatpush1.msra.mxu0 0.0
        %3971 = vmatprep.subr.mxu0 0.0
        %3972 = vmatpush1.msra.mxu0 0.0
        %3973 = vmatprep.subr.mxu0 0.0
        %3974 = vmatpush1.msra.mxu0 0.0
        %3975 = vmatprep.subr.mxu0 0.0
        %3976 = vmatpush1.msra.mxu0 0.0
        %3977 = vmatprep.subr.mxu0 0.0
        %3978 = vmatpush1.msra.mxu0 0.0
        %3979 = vmatprep.subr.mxu0 0.0
        %3980 = vmatpush1.msra.mxu0 0.0
        %3981 = vmatprep.mubr.f32.mxu0 0.0
        %3982 = vmatmul.mubr.f32.gmra.mrb[0].mxu0 %v3912
        %v3983 = vpop.f32.mrb[0].mxu0
        %v3984 = vadd.f32 0.0, %v3983
        %v3985 = vpop.f32.mrb[0].mxu0
        %3986 = vmatprep.mubr.f32.mxu0 0.0
        %3987 = vmatmul.mubr.f32.gmra.mrb[0].mxu0 %v3915
        %v3988 = vpop.f32.mrb[0].mxu0
        %v3989 = vadd.f32 0.0, %v3988
        %v3990 = vpop.f32.mrb[0].mxu0
        %3991 = vdwg.mxu0
        %v3992 = vld [vmem:[#allocation8] sm:$0xff]
        %v3993 = vld [vmem:[#allocation8 + $0x8] sm:$0xff]
        %v3994 = vld [vmem:[#allocation8 + $0x10] sm:$0xff]
        %v3995 = vld [vmem:[#allocation8 + $0x18] sm:$0xff]
        %v3997 = vsel %vm635, %v3417, 0
        %v4000 = vsel %vm635, %v3422, 0
        %v4003 = vsel %vm635, %v3498, 0
        %v4006 = vsel %vm635, %v3503, 0
        %v4009 = vsel %vm635, %v3579, 0
        %v4012 = vsel %vm635, %v3584, 0
        %v4015 = vsel %vm635, %v3660, 0
        %v4018 = vsel %vm635, %v3665, 0
        %v4021 = vsel %vm635, %v3741, 0
        %v4024 = vsel %vm635, %v3746, 0
        %v4027 = vsel %vm635, %v3822, 0
        %v4030 = vsel %vm635, %v3827, 0
        %v4033 = vsel %vm635, %v3903, 0
        %v4036 = vsel %vm635, %v3908, 0
        %v4039 = vsel %vm635, %v3984, 0
        %v4042 = vsel %vm635, %v3989, 0
        %4044 = vmatprep.subr.mxu0 0.0
        %4045 = vmatpush1.msra.mxu0 %v3992
        %4046 = vmatprep.subr.mxu0 0.0
        %4047 = vmatpush1.msra.mxu0 %v3993
        %4048 = vmatprep.subr.mxu0 0.0
        %4049 = vmatpush1.msra.mxu0 %v3994
        %4050 = vmatprep.subr.mxu0 0.0
        %4051 = vmatpush1.msra.mxu0 %v3995
        %4052 = vmatprep.subr.mxu0 0.0
        %4053 = vmatpush1.msra.mxu0 0.0
        %4054 = vmatprep.subr.mxu0 0.0
        %4055 = vmatpush1.msra.mxu0 0.0
        %4056 = vmatprep.subr.mxu0 0.0
        %4057 = vmatpush1.msra.mxu0 0.0
        %4058 = vmatprep.subr.mxu0 0.0
        %4059 = vmatpush1.msra.mxu0 0.0
        %4060 = vmatprep.subr.mxu0 0.0
        %4061 = vmatpush1.msra.mxu0 0.0
        %4062 = vmatprep.subr.mxu0 0.0
        %4063 = vmatpush1.msra.mxu0 0.0
        %4064 = vmatprep.subr.mxu0 0.0
        %4065 = vmatpush1.msra.mxu0 0.0
        %4066 = vmatprep.subr.mxu0 0.0
        %4067 = vmatpush1.msra.mxu0 0.0
        %4068 = vmatprep.subr.mxu0 0.0
        %4069 = vmatpush1.msra.mxu0 0.0
        %4070 = vmatprep.subr.mxu0 0.0
        %4071 = vmatpush1.msra.mxu0 0.0
        %4072 = vmatprep.subr.mxu0 0.0
        %4073 = vmatpush1.msra.mxu0 0.0
        %4074 = vmatprep.subr.mxu0 0.0
        %4075 = vmatpush1.msra.mxu0 0.0
        %4076 = vmatprep.subr.mxu0 0.0
        %4077 = vmatpush1.msra.mxu0 0.0
        %4078 = vmatprep.subr.mxu0 0.0
        %4079 = vmatpush1.msra.mxu0 0.0
        %4080 = vmatprep.subr.mxu0 0.0
        %4081 = vmatpush1.msra.mxu0 0.0
        %4082 = vmatprep.subr.mxu0 0.0
        %4083 = vmatpush1.msra.mxu0 0.0
        %4084 = vmatprep.subr.mxu0 0.0
        %4085 = vmatpush1.msra.mxu0 0.0
        %4086 = vmatprep.subr.mxu0 0.0
        %4087 = vmatpush1.msra.mxu0 0.0
        %4088 = vmatprep.subr.mxu0 0.0
        %4089 = vmatpush1.msra.mxu0 0.0
        %4090 = vmatprep.subr.mxu0 0.0
        %4091 = vmatpush1.msra.mxu0 0.0
        %4092 = vmatprep.subr.mxu0 0.0
        %4093 = vmatpush1.msra.mxu0 0.0
        %4094 = vmatprep.subr.mxu0 0.0
        %4095 = vmatpush1.msra.mxu0 0.0
        %4096 = vmatprep.subr.mxu0 0.0
        %4097 = vmatpush1.msra.mxu0 0.0
        %4098 = vmatprep.subr.mxu0 0.0
        %4099 = vmatpush1.msra.mxu0 0.0
        %4100 = vmatprep.subr.mxu0 0.0
        %4101 = vmatpush1.msra.mxu0 0.0
        %4102 = vmatprep.subr.mxu0 0.0
        %4103 = vmatpush1.msra.mxu0 0.0
        %4104 = vmatprep.subr.mxu0 0.0
        %4105 = vmatpush1.msra.mxu0 0.0
        %4106 = vmatprep.subr.mxu0 0.0
        %4107 = vmatpush1.msra.mxu0 0.0
        %4108 = vmatprep.mubr.f32.mxu0 0.0
        %4109 = vmatmul.mubr.f32.gmra.mrb[0].mxu0 %v3997
        %v4110 = vpop.f32.mrb[0].mxu0
        %v4111 = vadd.f32 0.0, %v4110
        %v4112 = vpop.f32.mrb[0].mxu0
        %4113 = vmatprep.mubr.f32.mxu0 0.0
        %4114 = vmatmul.mubr.f32.gmra.mrb[0].mxu0 %v4000
        %v4115 = vpop.f32.mrb[0].mxu0
        %v4116 = vadd.f32 0.0, %v4115
        %v4117 = vpop.f32.mrb[0].mxu0
        %4118 = vmatprep.mubr.f32.mxu0 0.0
        %4119 = vmatmul.mubr.f32.gmra.mrb[0].mxu0 %v4003
        %v4120 = vpop.f32.mrb[0].mxu0
        %v4121 = vadd.f32 0.0, %v4120
        %v4122 = vpop.f32.mrb[0].mxu0
        %4123 = vmatprep.mubr.f32.mxu0 0.0
        %4124 = vmatmul.mubr.f32.gmra.mrb[0].mxu0 %v4006
        %v4125 = vpop.f32.mrb[0].mxu0
        %v4126 = vadd.f32 0.0, %v4125
        %v4127 = vpop.f32.mrb[0].mxu0
        %4128 = vmatprep.mubr.f32.mxu0 0.0
        %4129 = vmatmul.mubr.f32.gmra.mrb[0].mxu0 %v4009
        %v4130 = vpop.f32.mrb[0].mxu0
        %v4131 = vadd.f32 0.0, %v4130
        %v4132 = vpop.f32.mrb[0].mxu0
        %4133 = vmatprep.mubr.f32.mxu0 0.0
        %4134 = vmatmul.mubr.f32.gmra.mrb[0].mxu0 %v4012
        %v4135 = vpop.f32.mrb[0].mxu0
        %v4136 = vadd.f32 0.0, %v4135
        %v4137 = vpop.f32.mrb[0].mxu0
        %4138 = vmatprep.mubr.f32.mxu0 0.0
        %4139 = vmatmul.mubr.f32.gmra.mrb[0].mxu0 %v4015
        %v4140 = vpop.f32.mrb[0].mxu0
        %v4141 = vadd.f32 0.0, %v4140
        %v4142 = vpop.f32.mrb[0].mxu0
        %4143 = vmatprep.mubr.f32.mxu0 0.0
        %4144 = vmatmul.mubr.f32.gmra.mrb[0].mxu0 %v4018
        %v4145 = vpop.f32.mrb[0].mxu0
        %v4146 = vadd.f32 0.0, %v4145
        %v4147 = vpop.f32.mrb[0].mxu0
        %4148 = vmatprep.mubr.f32.mxu0 0.0
        %4149 = vmatmul.mubr.f32.gmra.mrb[0].mxu0 %v4021
        %v4150 = vpop.f32.mrb[0].mxu0
        %v4151 = vadd.f32 0.0, %v4150
        %v4152 = vpop.f32.mrb[0].mxu0
        %4153 = vmatprep.mubr.f32.mxu0 0.0
        %4154 = vmatmul.mubr.f32.gmra.mrb[0].mxu0 %v4024
        %v4155 = vpop.f32.mrb[0].mxu0
        %v4156 = vadd.f32 0.0, %v4155
        %v4157 = vpop.f32.mrb[0].mxu0
        %4158 = vmatprep.mubr.f32.mxu0 0.0
        %4159 = vmatmul.mubr.f32.gmra.mrb[0].mxu0 %v4027
        %v4160 = vpop.f32.mrb[0].mxu0
        %v4161 = vadd.f32 0.0, %v4160
        %v4162 = vpop.f32.mrb[0].mxu0
        %4163 = vmatprep.mubr.f32.mxu0 0.0
        %4164 = vmatmul.mubr.f32.gmra.mrb[0].mxu0 %v4030
        %v4165 = vpop.f32.mrb[0].mxu0
        %v4166 = vadd.f32 0.0, %v4165
        %v4167 = vpop.f32.mrb[0].mxu0
        %4168 = vmatprep.mubr.f32.mxu0 0.0
        %4169 = vmatmul.mubr.f32.gmra.mrb[0].mxu0 %v4033
        %v4170 = vpop.f32.mrb[0].mxu0
        %v4171 = vadd.f32 0.0, %v4170
        %v4172 = vpop.f32.mrb[0].mxu0
        %4173 = vmatprep.mubr.f32.mxu0 0.0
        %4174 = vmatmul.mubr.f32.gmra.mrb[0].mxu0 %v4036
        %v4175 = vpop.f32.mrb[0].mxu0
        %v4176 = vadd.f32 0.0, %v4175
        %v4177 = vpop.f32.mrb[0].mxu0
        %4178 = vmatprep.mubr.f32.mxu0 0.0
        %4179 = vmatmul.mubr.f32.gmra.mrb[0].mxu0 %v4039
        %v4180 = vpop.f32.mrb[0].mxu0
        %v4181 = vadd.f32 0.0, %v4180
        %v4182 = vpop.f32.mrb[0].mxu0
        %4183 = vmatprep.mubr.f32.mxu0 0.0
        %4184 = vmatmul.mubr.f32.gmra.mrb[0].mxu0 %v4042
        %v4185 = vpop.f32.mrb[0].mxu0
        %v4186 = vadd.f32 0.0, %v4185
        %v4187 = vpop.f32.mrb[0].mxu0
        %4188 = vdwg.mxu0
        %v4189 = vld [vmem:[%s8] sm:$0xff]
        %v4190 = vld [vmem:[%s8 + $0x8] sm:$0xff]
        %v4191 = vld [vmem:[%s8 + $0x10] sm:$0xff]
        %v4192 = vld [vmem:[%s8 + $0x18] sm:$0xff]
        %v4193 = vld [vmem:[%s8 + $0x20] sm:$0xff]
        %v4194 = vld [vmem:[%s8 + $0x28] sm:$0xff]
        %v4195 = vld [vmem:[%s8 + $0x30] sm:$0xff]
        %v4196 = vld [vmem:[%s8 + $0x38] sm:$0xff]
        %v4198 = vsel %vm635, %v4111, 0
        %v4201 = vsel %vm635, %v4116, 0
        %v4204 = vsel %vm635, %v4121, 0
        %v4207 = vsel %vm635, %v4126, 0
        %v4210 = vsel %vm635, %v4131, 0
        %v4213 = vsel %vm635, %v4136, 0
        %v4216 = vsel %vm635, %v4141, 0
        %v4219 = vsel %vm635, %v4146, 0
        %v4222 = vsel %vm635, %v4151, 0
        %v4225 = vsel %vm635, %v4156, 0
        %v4228 = vsel %vm635, %v4161, 0
        %v4231 = vsel %vm635, %v4166, 0
        %v4234 = vsel %vm635, %v4171, 0
        %v4237 = vsel %vm635, %v4176, 0
        %v4240 = vsel %vm635, %v4181, 0
        %v4243 = vsel %vm635, %v4186, 0
        %4245 = vmatprep.subr.mxu0 0.0
        %4246 = vmatpush1.msra.mxu0 %v4193
        %4247 = vmatprep.subr.mxu0 0.0
        %4248 = vmatpush1.msra.mxu0 %v4194
        %4249 = vmatprep.subr.mxu0 0.0
        %4250 = vmatpush1.msra.mxu0 %v4195
        %4251 = vmatprep.subr.mxu0 0.0
        %4252 = vmatpush1.msra.mxu0 %v4196
        %4253 = vmatprep.subr.mxu0 0.0
        %4254 = vmatpush1.msra.mxu0 0.0
        %4255 = vmatprep.subr.mxu0 0.0
        %4256 = vmatpush1.msra.mxu0 0.0
        %4257 = vmatprep.subr.mxu0 0.0
        %4258 = vmatpush1.msra.mxu0 0.0
        %4259 = vmatprep.subr.mxu0 0.0
        %4260 = vmatpush1.msra.mxu0 0.0
        %4261 = vmatprep.subr.mxu0 0.0
        %4262 = vmatpush1.msra.mxu0 0.0
        %4263 = vmatprep.subr.mxu0 0.0
        %4264 = vmatpush1.msra.mxu0 0.0
        %4265 = vmatprep.subr.mxu0 0.0
        %4266 = vmatpush1.msra.mxu0 0.0
        %4267 = vmatprep.subr.mxu0 0.0
        %4268 = vmatpush1.msra.mxu0 0.0
        %4269 = vmatprep.subr.mxu0 0.0
        %4270 = vmatpush1.msra.mxu0 0.0
        %4271 = vmatprep.subr.mxu0 0.0
        %4272 = vmatpush1.msra.mxu0 0.0
        %4273 = vmatprep.subr.mxu0 0.0
        %4274 = vmatpush1.msra.mxu0 0.0
        %4275 = vmatprep.subr.mxu0 0.0
        %4276 = vmatpush1.msra.mxu0 0.0
        %4277 = vmatprep.subr.mxu0 0.0
        %4278 = vmatpush1.msra.mxu0 0.0
        %4279 = vmatprep.subr.mxu0 0.0
        %4280 = vmatpush1.msra.mxu0 0.0
        %4281 = vmatprep.subr.mxu0 0.0
        %4282 = vmatpush1.msra.mxu0 0.0
        %4283 = vmatprep.subr.mxu0 0.0
        %4284 = vmatpush1.msra.mxu0 0.0
        %4285 = vmatprep.subr.mxu0 0.0
        %4286 = vmatpush1.msra.mxu0 0.0
        %4287 = vmatprep.subr.mxu0 0.0
        %4288 = vmatpush1.msra.mxu0 0.0
        %4289 = vmatprep.subr.mxu0 0.0
        %4290 = vmatpush1.msra.mxu0 0.0
        %4291 = vmatprep.subr.mxu0 0.0
        %4292 = vmatpush1.msra.mxu0 0.0
        %4293 = vmatprep.subr.mxu0 0.0
        %4294 = vmatpush1.msra.mxu0 0.0
        %4295 = vmatprep.subr.mxu0 0.0
        %4296 = vmatpush1.msra.mxu0 0.0
        %4297 = vmatprep.subr.mxu0 0.0
        %4298 = vmatpush1.msra.mxu0 0.0
        %4299 = vmatprep.subr.mxu0 0.0
        %4300 = vmatpush1.msra.mxu0 0.0
        %4301 = vmatprep.subr.mxu0 0.0
        %4302 = vmatpush1.msra.mxu0 0.0
        %4303 = vmatprep.subr.mxu0 0.0
        %4304 = vmatpush1.msra.mxu0 0.0
        %4305 = vmatprep.subr.mxu0 0.0
        %4306 = vmatpush1.msra.mxu0 0.0
        %4307 = vmatprep.subr.mxu0 0.0
        %4308 = vmatpush1.msra.mxu0 0.0
        %4309 = vmatprep.mubr.f32.mxu0 0.0
        %4310 = vmatmul.mubr.f32.gmra.mrb[0].mxu0 %v4198
        %v4311 = vpop.f32.mrb[0].mxu0
        %v4312 = vadd.f32 0.0, %v4311
        %v4313 = vpop.f32.mrb[0].mxu0
        %4314 = vmatprep.mubr.f32.mxu0 0.0
        %4315 = vmatmul.mubr.f32.gmra.mrb[0].mxu0 %v4201
        %v4316 = vpop.f32.mrb[0].mxu0
        %v4317 = vadd.f32 0.0, %v4316
        %v4318 = vpop.f32.mrb[0].mxu0
        %4319 = vmatprep.mubr.f32.mxu0 0.0
        %4320 = vmatmul.mubr.f32.gmra.mrb[0].mxu0 %v4204
        %v4321 = vpop.f32.mrb[0].mxu0
        %v4322 = vadd.f32 0.0, %v4321
        %v4323 = vpop.f32.mrb[0].mxu0
        %4324 = vmatprep.mubr.f32.mxu0 0.0
        %4325 = vmatmul.mubr.f32.gmra.mrb[0].mxu0 %v4207
        %v4326 = vpop.f32.mrb[0].mxu0
        %v4327 = vadd.f32 0.0, %v4326
        %v4328 = vpop.f32.mrb[0].mxu0
        %4329 = vmatprep.mubr.f32.mxu0 0.0
        %4330 = vmatmul.mubr.f32.gmra.mrb[0].mxu0 %v4210
        %v4331 = vpop.f32.mrb[0].mxu0
        %v4332 = vadd.f32 0.0, %v4331
        %v4333 = vpop.f32.mrb[0].mxu0
        %4334 = vmatprep.mubr.f32.mxu0 0.0
        %4335 = vmatmul.mubr.f32.gmra.mrb[0].mxu0 %v4213
        %v4336 = vpop.f32.mrb[0].mxu0
        %v4337 = vadd.f32 0.0, %v4336
        %v4338 = vpop.f32.mrb[0].mxu0
        %4339 = vmatprep.mubr.f32.mxu0 0.0
        %4340 = vmatmul.mubr.f32.gmra.mrb[0].mxu0 %v4216
        %v4341 = vpop.f32.mrb[0].mxu0
        %v4342 = vadd.f32 0.0, %v4341
        %v4343 = vpop.f32.mrb[0].mxu0
        %4344 = vmatprep.mubr.f32.mxu0 0.0
        %4345 = vmatmul.mubr.f32.gmra.mrb[0].mxu0 %v4219
        %v4346 = vpop.f32.mrb[0].mxu0
        %v4347 = vadd.f32 0.0, %v4346
        %v4348 = vpop.f32.mrb[0].mxu0
        %4349 = vmatprep.mubr.f32.mxu0 0.0
        %4350 = vmatmul.mubr.f32.gmra.mrb[0].mxu0 %v4222
        %v4351 = vpop.f32.mrb[0].mxu0
        %v4352 = vadd.f32 0.0, %v4351
        %v4353 = vpop.f32.mrb[0].mxu0
        %4354 = vmatprep.mubr.f32.mxu0 0.0
        %4355 = vmatmul.mubr.f32.gmra.mrb[0].mxu0 %v4225
        %v4356 = vpop.f32.mrb[0].mxu0
        %v4357 = vadd.f32 0.0, %v4356
        %v4358 = vpop.f32.mrb[0].mxu0
        %4359 = vmatprep.mubr.f32.mxu0 0.0
        %4360 = vmatmul.mubr.f32.gmra.mrb[0].mxu0 %v4228
        %v4361 = vpop.f32.mrb[0].mxu0
        %v4362 = vadd.f32 0.0, %v4361
        %v4363 = vpop.f32.mrb[0].mxu0
        %4364 = vmatprep.mubr.f32.mxu0 0.0
        %4365 = vmatmul.mubr.f32.gmra.mrb[0].mxu0 %v4231
        %v4366 = vpop.f32.mrb[0].mxu0
        %v4367 = vadd.f32 0.0, %v4366
        %v4368 = vpop.f32.mrb[0].mxu0
        %4369 = vmatprep.mubr.f32.mxu0 0.0
        %4370 = vmatmul.mubr.f32.gmra.mrb[0].mxu0 %v4234
        %v4371 = vpop.f32.mrb[0].mxu0
        %v4372 = vadd.f32 0.0, %v4371
        %v4373 = vpop.f32.mrb[0].mxu0
        %4374 = vmatprep.mubr.f32.mxu0 0.0
        %4375 = vmatmul.mubr.f32.gmra.mrb[0].mxu0 %v4237
        %v4376 = vpop.f32.mrb[0].mxu0
        %v4377 = vadd.f32 0.0, %v4376
        %v4378 = vpop.f32.mrb[0].mxu0
        %4379 = vmatprep.mubr.f32.mxu0 0.0
        %4380 = vmatmul.mubr.f32.gmra.mrb[0].mxu0 %v4240
        %v4381 = vpop.f32.mrb[0].mxu0
        %v4382 = vadd.f32 0.0, %v4381
        %v4383 = vpop.f32.mrb[0].mxu0
        %4384 = vmatprep.mubr.f32.mxu0 0.0
        %4385 = vmatmul.mubr.f32.gmra.mrb[0].mxu0 %v4243
        %v4386 = vpop.f32.mrb[0].mxu0
        %v4387 = vadd.f32 0.0, %v4386
        %v4388 = vpop.f32.mrb[0].mxu0
        %4389 = vdwg.mxu0
        %v4391 = vsel %vm635, %v3171, 0
        %v4394 = vsel %vm635, %v3172, 0
        %v4397 = vsel %vm635, %v3173, 0
        %v4400 = vsel %vm635, %v3174, 0
        %v4403 = vsel %vm635, %v3175, 0
        %v4406 = vsel %vm635, %v3176, 0
        %v4409 = vsel %vm635, %v3177, 0
        %v4412 = vsel %vm635, %v3178, 0
        %v4415 = vsel %vm635, %v3179, 0
        %v4418 = vsel %vm635, %v3180, 0
        %v4421 = vsel %vm635, %v3181, 0
        %v4424 = vsel %vm635, %v3182, 0
        %v4427 = vsel %vm635, %v3183, 0
        %v4430 = vsel %vm635, %v3184, 0
        %v4433 = vsel %vm635, %v3185, 0
        %v4436 = vsel %vm635, %v3186, 0
        %4438 = vmatprep.subr.mxu0 0.0
        %4439 = vmatpush1.msra.mxu0 %v4189
        %4440 = vmatprep.subr.mxu0 0.0
        %4441 = vmatpush1.msra.mxu0 %v4190
        %4442 = vmatprep.subr.mxu0 0.0
        %4443 = vmatpush1.msra.mxu0 %v4191
        %4444 = vmatprep.subr.mxu0 0.0
        %4445 = vmatpush1.msra.mxu0 %v4192
        %4446 = vmatprep.subr.mxu0 0.0
        %4447 = vmatpush1.msra.mxu0 0.0
        %4448 = vmatprep.subr.mxu0 0.0
        %4449 = vmatpush1.msra.mxu0 0.0
        %4450 = vmatprep.subr.mxu0 0.0
        %4451 = vmatpush1.msra.mxu0 0.0
        %4452 = vmatprep.subr.mxu0 0.0
        %4453 = vmatpush1.msra.mxu0 0.0
        %4454 = vmatprep.subr.mxu0 0.0
        %4455 = vmatpush1.msra.mxu0 0.0
        %4456 = vmatprep.subr.mxu0 0.0
        %4457 = vmatpush1.msra.mxu0 0.0
        %4458 = vmatprep.subr.mxu0 0.0
        %4459 = vmatpush1.msra.mxu0 0.0
        %4460 = vmatprep.subr.mxu0 0.0
        %4461 = vmatpush1.msra.mxu0 0.0
        %4462 = vmatprep.subr.mxu0 0.0
        %4463 = vmatpush1.msra.mxu0 0.0
        %4464 = vmatprep.subr.mxu0 0.0
        %4465 = vmatpush1.msra.mxu0 0.0
        %4466 = vmatprep.subr.mxu0 0.0
        %4467 = vmatpush1.msra.mxu0 0.0
        %4468 = vmatprep.subr.mxu0 0.0
        %4469 = vmatpush1.msra.mxu0 0.0
        %4470 = vmatprep.subr.mxu0 0.0
        %4471 = vmatpush1.msra.mxu0 0.0
        %4472 = vmatprep.subr.mxu0 0.0
        %4473 = vmatpush1.msra.mxu0 0.0
        %4474 = vmatprep.subr.mxu0 0.0
        %4475 = vmatpush1.msra.mxu0 0.0
        %4476 = vmatprep.subr.mxu0 0.0
        %4477 = vmatpush1.msra.mxu0 0.0
        %4478 = vmatprep.subr.mxu0 0.0
        %4479 = vmatpush1.msra.mxu0 0.0
        %4480 = vmatprep.subr.mxu0 0.0
        %4481 = vmatpush1.msra.mxu0 0.0
        %4482 = vmatprep.subr.mxu0 0.0
        %4483 = vmatpush1.msra.mxu0 0.0
        %4484 = vmatprep.subr.mxu0 0.0
        %4485 = vmatpush1.msra.mxu0 0.0
        %4486 = vmatprep.subr.mxu0 0.0
        %4487 = vmatpush1.msra.mxu0 0.0
        %4488 = vmatprep.subr.mxu0 0.0
        %4489 = vmatpush1.msra.mxu0 0.0
        %4490 = vmatprep.subr.mxu0 0.0
        %4491 = vmatpush1.msra.mxu0 0.0
        %4492 = vmatprep.subr.mxu0 0.0
        %4493 = vmatpush1.msra.mxu0 0.0
        %4494 = vmatprep.subr.mxu0 0.0
        %4495 = vmatpush1.msra.mxu0 0.0
        %4496 = vmatprep.subr.mxu0 0.0
        %4497 = vmatpush1.msra.mxu0 0.0
        %4498 = vmatprep.subr.mxu0 0.0
        %4499 = vmatpush1.msra.mxu0 0.0
        %4500 = vmatprep.subr.mxu0 0.0
        %4501 = vmatpush1.msra.mxu0 0.0
        %4502 = vmatprep.mubr.f32.mxu0 0.0
        %4503 = vmatmul.mubr.f32.gmra.mrb[0].mxu0 %v4391
        %v4504 = vpop.f32.mrb[0].mxu0
        %v4505 = vadd.f32 %v4312, %v4504
        %v4506 = vpop.f32.mrb[0].mxu0
        %4507 = vmatprep.mubr.f32.mxu0 0.0
        %4508 = vmatmul.mubr.f32.gmra.mrb[0].mxu0 %v4394
        %v4509 = vpop.f32.mrb[0].mxu0
        %v4510 = vadd.f32 %v4317, %v4509
        %v4511 = vpop.f32.mrb[0].mxu0
        %4512 = vmatprep.mubr.f32.mxu0 0.0
        %4513 = vmatmul.mubr.f32.gmra.mrb[0].mxu0 %v4397
        %v4514 = vpop.f32.mrb[0].mxu0
        %v4515 = vadd.f32 %v4322, %v4514
        %v4516 = vpop.f32.mrb[0].mxu0
        %4517 = vmatprep.mubr.f32.mxu0 0.0
        %4518 = vmatmul.mubr.f32.gmra.mrb[0].mxu0 %v4400
        %v4519 = vpop.f32.mrb[0].mxu0
        %v4520 = vadd.f32 %v4327, %v4519
        %v4521 = vpop.f32.mrb[0].mxu0
        %4522 = vmatprep.mubr.f32.mxu0 0.0
        %4523 = vmatmul.mubr.f32.gmra.mrb[0].mxu0 %v4403
        %v4524 = vpop.f32.mrb[0].mxu0
        %v4525 = vadd.f32 %v4332, %v4524
        %v4526 = vpop.f32.mrb[0].mxu0
        %4527 = vmatprep.mubr.f32.mxu0 0.0
        %4528 = vmatmul.mubr.f32.gmra.mrb[0].mxu0 %v4406
        %v4529 = vpop.f32.mrb[0].mxu0
        %v4530 = vadd.f32 %v4337, %v4529
        %v4531 = vpop.f32.mrb[0].mxu0
        %4532 = vmatprep.mubr.f32.mxu0 0.0
        %4533 = vmatmul.mubr.f32.gmra.mrb[0].mxu0 %v4409
        %v4534 = vpop.f32.mrb[0].mxu0
        %v4535 = vadd.f32 %v4342, %v4534
        %v4536 = vpop.f32.mrb[0].mxu0
        %4537 = vmatprep.mubr.f32.mxu0 0.0
        %4538 = vmatmul.mubr.f32.gmra.mrb[0].mxu0 %v4412
        %v4539 = vpop.f32.mrb[0].mxu0
        %v4540 = vadd.f32 %v4347, %v4539
        %v4541 = vpop.f32.mrb[0].mxu0
        %4542 = vmatprep.mubr.f32.mxu0 0.0
        %4543 = vmatmul.mubr.f32.gmra.mrb[0].mxu0 %v4415
        %v4544 = vpop.f32.mrb[0].mxu0
        %v4545 = vadd.f32 %v4352, %v4544
        %v4546 = vpop.f32.mrb[0].mxu0
        %4547 = vmatprep.mubr.f32.mxu0 0.0
        %4548 = vmatmul.mubr.f32.gmra.mrb[0].mxu0 %v4418
        %v4549 = vpop.f32.mrb[0].mxu0
        %v4550 = vadd.f32 %v4357, %v4549
        %v4551 = vpop.f32.mrb[0].mxu0
        %4552 = vmatprep.mubr.f32.mxu0 0.0
        %4553 = vmatmul.mubr.f32.gmra.mrb[0].mxu0 %v4421
        %v4554 = vpop.f32.mrb[0].mxu0
        %v4555 = vadd.f32 %v4362, %v4554
        %v4556 = vpop.f32.mrb[0].mxu0
        %4557 = vmatprep.mubr.f32.mxu0 0.0
        %4558 = vmatmul.mubr.f32.gmra.mrb[0].mxu0 %v4424
        %v4559 = vpop.f32.mrb[0].mxu0
        %v4560 = vadd.f32 %v4367, %v4559
        %v4561 = vpop.f32.mrb[0].mxu0
        %4562 = vmatprep.mubr.f32.mxu0 0.0
        %4563 = vmatmul.mubr.f32.gmra.mrb[0].mxu0 %v4427
        %v4564 = vpop.f32.mrb[0].mxu0
        %v4565 = vadd.f32 %v4372, %v4564
        %v4566 = vpop.f32.mrb[0].mxu0
        %4567 = vmatprep.mubr.f32.mxu0 0.0
        %4568 = vmatmul.mubr.f32.gmra.mrb[0].mxu0 %v4430
        %v4569 = vpop.f32.mrb[0].mxu0
        %v4570 = vadd.f32 %v4377, %v4569
        %v4571 = vpop.f32.mrb[0].mxu0
        %4572 = vmatprep.mubr.f32.mxu0 0.0
        %4573 = vmatmul.mubr.f32.gmra.mrb[0].mxu0 %v4433
        %v4574 = vpop.f32.mrb[0].mxu0
        %v4575 = vadd.f32 %v4382, %v4574
        %v4576 = vpop.f32.mrb[0].mxu0
        %4577 = vmatprep.mubr.f32.mxu0 0.0
        %4578 = vmatmul.mubr.f32.gmra.mrb[0].mxu0 %v4436
        %v4579 = vpop.f32.mrb[0].mxu0
        %v4580 = vadd.f32 %v4387, %v4579
        %v4581 = vpop.f32.mrb[0].mxu0
        %4582 = vdwg.mxu0
        %v4583 = vld [vmem:[%s9] sm:$0x1]
        %v4585 = vlaneseq
        %v4586 = vshrl.u32 %v4585, 7
        %v4587 = vsub.s32 0, %v4586
        %v4588 = vrot.slane %v4583, %v4587
        %v4590 = vadd.f32 %v4505, %v4588
        %v4591 = vadd.f32 %v4510, %v4588
        %v4592 = vadd.f32 %v4515, %v4588
        %v4593 = vadd.f32 %v4520, %v4588
        %v4594 = vadd.f32 %v4525, %v4588
        %v4595 = vadd.f32 %v4530, %v4588
        %v4596 = vadd.f32 %v4535, %v4588
        %v4597 = vadd.f32 %v4540, %v4588
        %v4598 = vadd.f32 %v4545, %v4588
        %v4599 = vadd.f32 %v4550, %v4588
        %v4600 = vadd.f32 %v4555, %v4588
        %v4601 = vadd.f32 %v4560, %v4588
        %v4602 = vadd.f32 %v4565, %v4588
        %v4603 = vadd.f32 %v4570, %v4588
        %v4604 = vadd.f32 %v4575, %v4588
        %v4605 = vadd.f32 %v4580, %v4588
        %v4606 = vxor.u32 %v4590, 2147483648
        %v4607 = vxor.u32 %v4591, 2147483648
        %v4608 = vxor.u32 %v4592, 2147483648
        %v4609 = vxor.u32 %v4593, 2147483648
        %v4610 = vxor.u32 %v4594, 2147483648
        %v4611 = vxor.u32 %v4595, 2147483648
        %v4612 = vxor.u32 %v4596, 2147483648
        %v4613 = vxor.u32 %v4597, 2147483648
        %v4614 = vxor.u32 %v4598, 2147483648
        %v4615 = vxor.u32 %v4599, 2147483648
        %v4616 = vxor.u32 %v4600, 2147483648
        %v4617 = vxor.u32 %v4601, 2147483648
        %v4618 = vxor.u32 %v4602, 2147483648
        %v4619 = vxor.u32 %v4603, 2147483648
        %v4620 = vxor.u32 %v4604, 2147483648
        %v4621 = vxor.u32 %v4605, 2147483648
        %v4622 = vmul.f32 %v4606, 1.442695
        %v4623 = vpow.pop %v4622
        %v4624 = vmul.f32 %v4607, 1.442695
        %v4625 = vpow.pop %v4624
        %v4626 = vmul.f32 %v4608, 1.442695
        %v4627 = vpow.pop %v4626
        %v4628 = vmul.f32 %v4609, 1.442695
        %v4629 = vpow.pop %v4628
        %v4630 = vmul.f32 %v4610, 1.442695
        %v4631 = vpow.pop %v4630
        %v4632 = vmul.f32 %v4611, 1.442695
        %v4633 = vpow.pop %v4632
        %v4634 = vmul.f32 %v4612, 1.442695
        %v4635 = vpow.pop %v4634
        %v4636 = vmul.f32 %v4613, 1.442695
        %v4637 = vpow.pop %v4636
        %v4638 = vmul.f32 %v4614, 1.442695
        %v4639 = vpow.pop %v4638
        %v4640 = vmul.f32 %v4615, 1.442695
        %v4641 = vpow.pop %v4640
        %v4642 = vmul.f32 %v4616, 1.442695
        %v4643 = vpow.pop %v4642
        %v4644 = vmul.f32 %v4617, 1.442695
        %v4645 = vpow.pop %v4644
        %v4646 = vmul.f32 %v4618, 1.442695
        %v4647 = vpow.pop %v4646
        %v4648 = vmul.f32 %v4619, 1.442695
        %v4649 = vpow.pop %v4648
        %v4650 = vmul.f32 %v4620, 1.442695
        %v4651 = vpow.pop %v4650
        %v4652 = vmul.f32 %v4621, 1.442695
        %v4653 = vpow.pop %v4652
        %v4654 = vadd.f32 %v4623, 1.0
        %v4655 = vadd.f32 %v4625, 1.0
        %v4656 = vadd.f32 %v4627, 1.0
        %v4657 = vadd.f32 %v4629, 1.0
        %v4658 = vadd.f32 %v4631, 1.0
        %v4659 = vadd.f32 %v4633, 1.0
        %v4660 = vadd.f32 %v4635, 1.0
        %v4661 = vadd.f32 %v4637, 1.0
        %v4662 = vadd.f32 %v4639, 1.0
        %v4663 = vadd.f32 %v4641, 1.0
        %v4664 = vadd.f32 %v4643, 1.0
        %v4665 = vadd.f32 %v4645, 1.0
        %v4666 = vadd.f32 %v4647, 1.0
        %v4667 = vadd.f32 %v4649, 1.0
        %v4668 = vadd.f32 %v4651, 1.0
        %v4669 = vadd.f32 %v4653, 1.0
        %v4670 = vrcp.pop %v4654
        %v4671 = vmul.f32 1.0, %v4670
        %v4672 = vrcp.pop %v4655
        %v4673 = vmul.f32 1.0, %v4672
        %v4674 = vrcp.pop %v4656
        %v4675 = vmul.f32 1.0, %v4674
        %v4676 = vrcp.pop %v4657
        %v4677 = vmul.f32 1.0, %v4676
        %v4678 = vrcp.pop %v4658
        %v4679 = vmul.f32 1.0, %v4678
        %v4680 = vrcp.pop %v4659
        %v4681 = vmul.f32 1.0, %v4680
        %v4682 = vrcp.pop %v4660
        %v4683 = vmul.f32 1.0, %v4682
        %v4684 = vrcp.pop %v4661
        %v4685 = vmul.f32 1.0, %v4684
        %v4686 = vrcp.pop %v4662
        %v4687 = vmul.f32 1.0, %v4686
        %v4688 = vrcp.pop %v4663
        %v4689 = vmul.f32 1.0, %v4688
        %v4690 = vrcp.pop %v4664
        %v4691 = vmul.f32 1.0, %v4690
        %v4692 = vrcp.pop %v4665
        %v4693 = vmul.f32 1.0, %v4692
        %v4694 = vrcp.pop %v4666
        %v4695 = vmul.f32 1.0, %v4694
        %v4696 = vrcp.pop %v4667
        %v4697 = vmul.f32 1.0, %v4696
        %v4698 = vrcp.pop %v4668
        %v4699 = vmul.f32 1.0, %v4698
        %v4700 = vrcp.pop %v4669
        %v4701 = vmul.f32 1.0, %v4700
        %v4702 = vmul.f32 %v4671, %v3171
        %v4703 = vmul.f32 %v4673, %v3172
        %v4704 = vmul.f32 %v4675, %v3173
        %v4705 = vmul.f32 %v4677, %v3174
        %v4706 = vmul.f32 %v4679, %v3175
        %v4707 = vmul.f32 %v4681, %v3176
        %v4708 = vmul.f32 %v4683, %v3177
        %v4709 = vmul.f32 %v4685, %v3178
        %v4710 = vmul.f32 %v4687, %v3179
        %v4711 = vmul.f32 %v4689, %v3180
        %v4712 = vmul.f32 %v4691, %v3181
        %v4713 = vmul.f32 %v4693, %v3182
        %v4714 = vmul.f32 %v4695, %v3183
        %v4715 = vmul.f32 %v4697, %v3184
        %v4716 = vmul.f32 %v4699, %v3185
        %v4717 = vmul.f32 %v4701, %v3186
        %v4718 = vsub.f32 1.0, %v4671
        %v4719 = vsub.f32 1.0, %v4673
        %v4720 = vsub.f32 1.0, %v4675
        %v4721 = vsub.f32 1.0, %v4677
        %v4722 = vsub.f32 1.0, %v4679
        %v4723 = vsub.f32 1.0, %v4681
        %v4724 = vsub.f32 1.0, %v4683
        %v4725 = vsub.f32 1.0, %v4685
        %v4726 = vsub.f32 1.0, %v4687
        %v4727 = vsub.f32 1.0, %v4689
        %v4728 = vsub.f32 1.0, %v4691
        %v4729 = vsub.f32 1.0, %v4693
        %v4730 = vsub.f32 1.0, %v4695
        %v4731 = vsub.f32 1.0, %v4697
        %v4732 = vsub.f32 1.0, %v4699
        %v4733 = vsub.f32 1.0, %v4701
        %v4734 = vmul.f32 %v4718, %v4111
        %v4735 = vmul.f32 %v4719, %v4116
        %v4736 = vmul.f32 %v4720, %v4121
        %v4737 = vmul.f32 %v4721, %v4126
        %v4738 = vmul.f32 %v4722, %v4131
        %v4739 = vmul.f32 %v4723, %v4136
        %v4740 = vmul.f32 %v4724, %v4141
        %v4741 = vmul.f32 %v4725, %v4146
        %v4742 = vmul.f32 %v4726, %v4151
        %v4743 = vmul.f32 %v4727, %v4156
        %v4744 = vmul.f32 %v4728, %v4161
        %v4745 = vmul.f32 %v4729, %v4166
        %v4746 = vmul.f32 %v4730, %v4171
        %v4747 = vmul.f32 %v4731, %v4176
        %v4748 = vmul.f32 %v4732, %v4181
        %v4749 = vmul.f32 %v4733, %v4186
        %v4750 = vadd.f32 %v4702, %v4734
        %v4751 = vadd.f32 %v4703, %v4735
        %v4752 = vadd.f32 %v4704, %v4736
        %v4753 = vadd.f32 %v4705, %v4737
        %v4754 = vadd.f32 %v4706, %v4738
        %v4755 = vadd.f32 %v4707, %v4739
        %v4756 = vadd.f32 %v4708, %v4740
        %v4757 = vadd.f32 %v4709, %v4741
        %v4758 = vadd.f32 %v4710, %v4742
        %v4759 = vadd.f32 %v4711, %v4743
        %v4760 = vadd.f32 %v4712, %v4744
        %v4761 = vadd.f32 %v4713, %v4745
        %v4762 = vadd.f32 %v4714, %v4746
        %v4763 = vadd.f32 %v4715, %v4747
        %v4764 = vadd.f32 %v4716, %v4748
        %v4765 = vadd.f32 %v4717, %v4749
        %vm4766 = vcmp.ge.f32.partialorder %v4750, 0.0
        %vm4767 = vcmp.ge.f32.partialorder %v4751, 0.0
        %vm4768 = vcmp.ge.f32.partialorder %v4752, 0.0
        %vm4769 = vcmp.ge.f32.partialorder %v4753, 0.0
        %vm4770 = vcmp.ge.f32.partialorder %v4754, 0.0
        %vm4771 = vcmp.ge.f32.partialorder %v4755, 0.0
        %vm4772 = vcmp.ge.f32.partialorder %v4756, 0.0
        %vm4773 = vcmp.ge.f32.partialorder %v4757, 0.0
        %vm4774 = vcmp.ge.f32.partialorder %v4758, 0.0
        %vm4775 = vcmp.ge.f32.partialorder %v4759, 0.0
        %vm4776 = vcmp.ge.f32.partialorder %v4760, 0.0
        %vm4777 = vcmp.ge.f32.partialorder %v4761, 0.0
        %vm4778 = vcmp.ge.f32.partialorder %v4762, 0.0
        %vm4779 = vcmp.ge.f32.partialorder %v4763, 0.0
        %vm4780 = vcmp.ge.f32.partialorder %v4764, 0.0
        %vm4781 = vcmp.ge.f32.partialorder %v4765, 0.0
        %v4782 = vmul.f32 %v4750, 0.01
        %v4783 = vmul.f32 %v4751, 0.01
        %v4784 = vmul.f32 %v4752, 0.01
        %v4785 = vmul.f32 %v4753, 0.01
        %v4786 = vmul.f32 %v4754, 0.01
        %v4787 = vmul.f32 %v4755, 0.01
        %v4788 = vmul.f32 %v4756, 0.01
        %v4789 = vmul.f32 %v4757, 0.01
        %v4790 = vmul.f32 %v4758, 0.01
        %v4791 = vmul.f32 %v4759, 0.01
        %v4792 = vmul.f32 %v4760, 0.01
        %v4793 = vmul.f32 %v4761, 0.01
        %v4794 = vmul.f32 %v4762, 0.01
        %v4795 = vmul.f32 %v4763, 0.01
        %v4796 = vmul.f32 %v4764, 0.01
        %v4797 = vmul.f32 %v4765, 0.01
        %v4798 = vsel %vm4766, %v4750, %v4782
        %v4799 = vsel %vm4767, %v4751, %v4783
        %v4800 = vsel %vm4768, %v4752, %v4784
        %v4801 = vsel %vm4769, %v4753, %v4785
        %v4802 = vsel %vm4770, %v4754, %v4786
        %v4803 = vsel %vm4771, %v4755, %v4787
        %v4804 = vsel %vm4772, %v4756, %v4788
        %v4805 = vsel %vm4773, %v4757, %v4789
        %v4806 = vsel %vm4774, %v4758, %v4790
        %v4807 = vsel %vm4775, %v4759, %v4791
        %v4808 = vsel %vm4776, %v4760, %v4792
        %v4809 = vsel %vm4777, %v4761, %v4793
        %v4810 = vsel %vm4778, %v4762, %v4794
        %v4811 = vsel %vm4779, %v4763, %v4795
        %v4812 = vsel %vm4780, %v4764, %v4796
        %v4813 = vsel %vm4781, %v4765, %v4797
        %4814 = vxpose.xlu0.b32.start [1/16] %v1693, 128
        %4815 = vxpose.xlu0.b32.cont [2/16] %v1694, 128
        %4816 = vxpose.xlu0.b32.cont [3/16] 0.0, 128
        %4817 = vxpose.xlu0.b32.cont [4/16] 0.0, 128
        %4818 = vxpose.xlu0.b32.cont [5/16] 0.0, 128
        %4819 = vxpose.xlu0.b32.cont [6/16] 0.0, 128
        %4820 = vxpose.xlu0.b32.cont [7/16] 0.0, 128
        %4821 = vxpose.xlu0.b32.cont [8/16] 0.0, 128
        %4822 = vxpose.xlu0.b32.cont [9/16] 0.0, 128
        %4823 = vxpose.xlu0.b32.cont [10/16] 0.0, 128
        %4824 = vxpose.xlu0.b32.cont [11/16] 0.0, 128
        %4825 = vxpose.xlu0.b32.cont [12/16] 0.0, 128
        %4826 = vxpose.xlu0.b32.cont [13/16] 0.0, 128
        %4827 = vxpose.xlu0.b32.cont [14/16] 0.0, 128
        %4828 = vxpose.xlu0.b32.cont [15/16] 0.0, 128
        %4829 = vxpose.xlu0.b32.end [16/16] 0.0, 128
        %v4830 = vpop.trf.xlu0
        %v4831 = vpop.trf.xlu0
        %v4832 = vpop.trf.xlu0
        %v4833 = vpop.trf.xlu0
        %v4834 = vpop.trf.xlu0
        %v4835 = vpop.trf.xlu0
        %v4836 = vpop.trf.xlu0
        %v4837 = vpop.trf.xlu0
        %v4838 = vpop.trf.xlu0
        %v4839 = vpop.trf.xlu0
        %v4840 = vpop.trf.xlu0
        %v4841 = vpop.trf.xlu0
        %v4842 = vpop.trf.xlu0
        %v4843 = vpop.trf.xlu0
        %v4844 = vpop.trf.xlu0
        %v4845 = vpop.trf.xlu0
        %v4847 = vsel %vm1709, %v4830, 0
        %4849 = vmatprep.subr.mxu0 0.0
        %4850 = vmatpush1.msra.mxu0 %v4798
        %4851 = vmatprep.subr.mxu0 0.0
        %4852 = vmatpush1.msra.mxu0 %v4799
        %4853 = vmatprep.subr.mxu0 0.0
        %4854 = vmatpush1.msra.mxu0 0.0
        %4855 = vmatprep.subr.mxu0 0.0
        %4856 = vmatpush1.msra.mxu0 0.0
        %4857 = vmatprep.subr.mxu0 0.0
        %4858 = vmatpush1.msra.mxu0 0.0
        %4859 = vmatprep.subr.mxu0 0.0
        %4860 = vmatpush1.msra.mxu0 0.0
        %4861 = vmatprep.subr.mxu0 0.0
        %4862 = vmatpush1.msra.mxu0 0.0
        %4863 = vmatprep.subr.mxu0 0.0
        %4864 = vmatpush1.msra.mxu0 0.0
        %4865 = vmatprep.subr.mxu0 0.0
        %4866 = vmatpush1.msra.mxu0 0.0
        %4867 = vmatprep.subr.mxu0 0.0
        %4868 = vmatpush1.msra.mxu0 0.0
        %4869 = vmatprep.subr.mxu0 0.0
        %4870 = vmatpush1.msra.mxu0 0.0
        %4871 = vmatprep.subr.mxu0 0.0
        %4872 = vmatpush1.msra.mxu0 0.0
        %4873 = vmatprep.subr.mxu0 0.0
        %4874 = vmatpush1.msra.mxu0 0.0
        %4875 = vmatprep.subr.mxu0 0.0
        %4876 = vmatpush1.msra.mxu0 0.0
        %4877 = vmatprep.subr.mxu0 0.0
        %4878 = vmatpush1.msra.mxu0 0.0
        %4879 = vmatprep.subr.mxu0 0.0
        %4880 = vmatpush1.msra.mxu0 0.0
        %4881 = vmatprep.subr.mxu0 0.0
        %4882 = vmatpush1.msra.mxu0 0.0
        %4883 = vmatprep.subr.mxu0 0.0
        %4884 = vmatpush1.msra.mxu0 0.0
        %4885 = vmatprep.subr.mxu0 0.0
        %4886 = vmatpush1.msra.mxu0 0.0
        %4887 = vmatprep.subr.mxu0 0.0
        %4888 = vmatpush1.msra.mxu0 0.0
        %4889 = vmatprep.subr.mxu0 0.0
        %4890 = vmatpush1.msra.mxu0 0.0
        %4891 = vmatprep.subr.mxu0 0.0
        %4892 = vmatpush1.msra.mxu0 0.0
        %4893 = vmatprep.subr.mxu0 0.0
        %4894 = vmatpush1.msra.mxu0 0.0
        %4895 = vmatprep.subr.mxu0 0.0
        %4896 = vmatpush1.msra.mxu0 0.0
        %4897 = vmatprep.subr.mxu0 0.0
        %4898 = vmatpush1.msra.mxu0 0.0
        %4899 = vmatprep.subr.mxu0 0.0
        %4900 = vmatpush1.msra.mxu0 0.0
        %4901 = vmatprep.subr.mxu0 0.0
        %4902 = vmatpush1.msra.mxu0 0.0
        %4903 = vmatprep.subr.mxu0 0.0
        %4904 = vmatpush1.msra.mxu0 0.0
        %4905 = vmatprep.subr.mxu0 0.0
        %4906 = vmatpush1.msra.mxu0 0.0
        %4907 = vmatprep.subr.mxu0 0.0
        %4908 = vmatpush1.msra.mxu0 0.0
        %4909 = vmatprep.subr.mxu0 0.0
        %4910 = vmatpush1.msra.mxu0 0.0
        %4911 = vmatprep.subr.mxu0 0.0
        %4912 = vmatpush1.msra.mxu0 0.0
        %4913 = vmatprep.mubr.f32.mxu0 0.0
        %4914 = vmatmul.mubr.f32.gmra.mrb[0].mxu0 %v4847
        %v4915 = vpop.f32.mrb[0].mxu0
        %v4916 = vadd.f32 0.0, %v4915
        %v4917 = vpop.f32.mrb[0].mxu0
        %4918 = vdwg.mxu0
        %4919 = vxpose.xlu0.b32.start [1/16] %v1695, 128
        %4920 = vxpose.xlu0.b32.cont [2/16] %v1696, 128
        %4921 = vxpose.xlu0.b32.cont [3/16] 0.0, 128
        %4922 = vxpose.xlu0.b32.cont [4/16] 0.0, 128
        %4923 = vxpose.xlu0.b32.cont [5/16] 0.0, 128
        %4924 = vxpose.xlu0.b32.cont [6/16] 0.0, 128
        %4925 = vxpose.xlu0.b32.cont [7/16] 0.0, 128
        %4926 = vxpose.xlu0.b32.cont [8/16] 0.0, 128
        %4927 = vxpose.xlu0.b32.cont [9/16] 0.0, 128
        %4928 = vxpose.xlu0.b32.cont [10/16] 0.0, 128
        %4929 = vxpose.xlu0.b32.cont [11/16] 0.0, 128
        %4930 = vxpose.xlu0.b32.cont [12/16] 0.0, 128
        %4931 = vxpose.xlu0.b32.cont [13/16] 0.0, 128
        %4932 = vxpose.xlu0.b32.cont [14/16] 0.0, 128
        %4933 = vxpose.xlu0.b32.cont [15/16] 0.0, 128
        %4934 = vxpose.xlu0.b32.end [16/16] 0.0, 128
        %v4935 = vpop.trf.xlu0
        %v4936 = vpop.trf.xlu0
        %v4937 = vpop.trf.xlu0
        %v4938 = vpop.trf.xlu0
        %v4939 = vpop.trf.xlu0
        %v4940 = vpop.trf.xlu0
        %v4941 = vpop.trf.xlu0
        %v4942 = vpop.trf.xlu0
        %v4943 = vpop.trf.xlu0
        %v4944 = vpop.trf.xlu0
        %v4945 = vpop.trf.xlu0
        %v4946 = vpop.trf.xlu0
        %v4947 = vpop.trf.xlu0
        %v4948 = vpop.trf.xlu0
        %v4949 = vpop.trf.xlu0
        %v4950 = vpop.trf.xlu0
        %v4952 = vsel %vm1709, %v4935, 0
        %4954 = vmatprep.subr.mxu0 0.0
        %4955 = vmatpush1.msra.mxu0 %v4800
        %4956 = vmatprep.subr.mxu0 0.0
        %4957 = vmatpush1.msra.mxu0 %v4801
        %4958 = vmatprep.subr.mxu0 0.0
        %4959 = vmatpush1.msra.mxu0 0.0
        %4960 = vmatprep.subr.mxu0 0.0
        %4961 = vmatpush1.msra.mxu0 0.0
        %4962 = vmatprep.subr.mxu0 0.0
        %4963 = vmatpush1.msra.mxu0 0.0
        %4964 = vmatprep.subr.mxu0 0.0
        %4965 = vmatpush1.msra.mxu0 0.0
        %4966 = vmatprep.subr.mxu0 0.0
        %4967 = vmatpush1.msra.mxu0 0.0
        %4968 = vmatprep.subr.mxu0 0.0
        %4969 = vmatpush1.msra.mxu0 0.0
        %4970 = vmatprep.subr.mxu0 0.0
        %4971 = vmatpush1.msra.mxu0 0.0
        %4972 = vmatprep.subr.mxu0 0.0
        %4973 = vmatpush1.msra.mxu0 0.0
        %4974 = vmatprep.subr.mxu0 0.0
        %4975 = vmatpush1.msra.mxu0 0.0
        %4976 = vmatprep.subr.mxu0 0.0
        %4977 = vmatpush1.msra.mxu0 0.0
        %4978 = vmatprep.subr.mxu0 0.0
        %4979 = vmatpush1.msra.mxu0 0.0
        %4980 = vmatprep.subr.mxu0 0.0
        %4981 = vmatpush1.msra.mxu0 0.0
        %4982 = vmatprep.subr.mxu0 0.0
        %4983 = vmatpush1.msra.mxu0 0.0
        %4984 = vmatprep.subr.mxu0 0.0
        %4985 = vmatpush1.msra.mxu0 0.0
        %4986 = vmatprep.subr.mxu0 0.0
        %4987 = vmatpush1.msra.mxu0 0.0
        %4988 = vmatprep.subr.mxu0 0.0
        %4989 = vmatpush1.msra.mxu0 0.0
        %4990 = vmatprep.subr.mxu0 0.0
        %4991 = vmatpush1.msra.mxu0 0.0
        %4992 = vmatprep.subr.mxu0 0.0
        %4993 = vmatpush1.msra.mxu0 0.0
        %4994 = vmatprep.subr.mxu0 0.0
        %4995 = vmatpush1.msra.mxu0 0.0
        %4996 = vmatprep.subr.mxu0 0.0
        %4997 = vmatpush1.msra.mxu0 0.0
        %4998 = vmatprep.subr.mxu0 0.0
        %4999 = vmatpush1.msra.mxu0 0.0
        %5000 = vmatprep.subr.mxu0 0.0
        %5001 = vmatpush1.msra.mxu0 0.0
        %5002 = vmatprep.subr.mxu0 0.0
        %5003 = vmatpush1.msra.mxu0 0.0
        %5004 = vmatprep.subr.mxu0 0.0
        %5005 = vmatpush1.msra.mxu0 0.0
        %5006 = vmatprep.subr.mxu0 0.0
        %5007 = vmatpush1.msra.mxu0 0.0
        %5008 = vmatprep.subr.mxu0 0.0
        %5009 = vmatpush1.msra.mxu0 0.0
        %5010 = vmatprep.subr.mxu0 0.0
        %5011 = vmatpush1.msra.mxu0 0.0
        %5012 = vmatprep.subr.mxu0 0.0
        %5013 = vmatpush1.msra.mxu0 0.0
        %5014 = vmatprep.subr.mxu0 0.0
        %5015 = vmatpush1.msra.mxu0 0.0
        %5016 = vmatprep.subr.mxu0 0.0
        %5017 = vmatpush1.msra.mxu0 0.0
        %5018 = vmatprep.mubr.f32.mxu0 0.0
        %5019 = vmatmul.mubr.f32.gmra.mrb[0].mxu0 %v4952
        %v5020 = vpop.f32.mrb[0].mxu0
        %v5021 = vadd.f32 0.0, %v5020
        %v5022 = vpop.f32.mrb[0].mxu0
        %5023 = vdwg.mxu0
        %5024 = vxpose.xlu0.b32.start [1/16] %v1697, 128
        %5025 = vxpose.xlu0.b32.cont [2/16] %v1698, 128
        %5026 = vxpose.xlu0.b32.cont [3/16] 0.0, 128
        %5027 = vxpose.xlu0.b32.cont [4/16] 0.0, 128
        %5028 = vxpose.xlu0.b32.cont [5/16] 0.0, 128
        %5029 = vxpose.xlu0.b32.cont [6/16] 0.0, 128
        %5030 = vxpose.xlu0.b32.cont [7/16] 0.0, 128
        %5031 = vxpose.xlu0.b32.cont [8/16] 0.0, 128
        %5032 = vxpose.xlu0.b32.cont [9/16] 0.0, 128
        %5033 = vxpose.xlu0.b32.cont [10/16] 0.0, 128
        %5034 = vxpose.xlu0.b32.cont [11/16] 0.0, 128
        %5035 = vxpose.xlu0.b32.cont [12/16] 0.0, 128
        %5036 = vxpose.xlu0.b32.cont [13/16] 0.0, 128
        %5037 = vxpose.xlu0.b32.cont [14/16] 0.0, 128
        %5038 = vxpose.xlu0.b32.cont [15/16] 0.0, 128
        %5039 = vxpose.xlu0.b32.end [16/16] 0.0, 128
        %v5040 = vpop.trf.xlu0
        %v5041 = vpop.trf.xlu0
        %v5042 = vpop.trf.xlu0
        %v5043 = vpop.trf.xlu0
        %v5044 = vpop.trf.xlu0
        %v5045 = vpop.trf.xlu0
        %v5046 = vpop.trf.xlu0
        %v5047 = vpop.trf.xlu0
        %v5048 = vpop.trf.xlu0
        %v5049 = vpop.trf.xlu0
        %v5050 = vpop.trf.xlu0
        %v5051 = vpop.trf.xlu0
        %v5052 = vpop.trf.xlu0
        %v5053 = vpop.trf.xlu0
        %v5054 = vpop.trf.xlu0
        %v5055 = vpop.trf.xlu0
        %v5057 = vsel %vm1709, %v5040, 0
        %5059 = vmatprep.subr.mxu0 0.0
        %5060 = vmatpush1.msra.mxu0 %v4802
        %5061 = vmatprep.subr.mxu0 0.0
        %5062 = vmatpush1.msra.mxu0 %v4803
        %5063 = vmatprep.subr.mxu0 0.0
        %5064 = vmatpush1.msra.mxu0 0.0
        %5065 = vmatprep.subr.mxu0 0.0
        %5066 = vmatpush1.msra.mxu0 0.0
        %5067 = vmatprep.subr.mxu0 0.0
        %5068 = vmatpush1.msra.mxu0 0.0
        %5069 = vmatprep.subr.mxu0 0.0
        %5070 = vmatpush1.msra.mxu0 0.0
        %5071 = vmatprep.subr.mxu0 0.0
        %5072 = vmatpush1.msra.mxu0 0.0
        %5073 = vmatprep.subr.mxu0 0.0
        %5074 = vmatpush1.msra.mxu0 0.0
        %5075 = vmatprep.subr.mxu0 0.0
        %5076 = vmatpush1.msra.mxu0 0.0
        %5077 = vmatprep.subr.mxu0 0.0
        %5078 = vmatpush1.msra.mxu0 0.0
        %5079 = vmatprep.subr.mxu0 0.0
        %5080 = vmatpush1.msra.mxu0 0.0
        %5081 = vmatprep.subr.mxu0 0.0
        %5082 = vmatpush1.msra.mxu0 0.0
        %5083 = vmatprep.subr.mxu0 0.0
        %5084 = vmatpush1.msra.mxu0 0.0
        %5085 = vmatprep.subr.mxu0 0.0
        %5086 = vmatpush1.msra.mxu0 0.0
        %5087 = vmatprep.subr.mxu0 0.0
        %5088 = vmatpush1.msra.mxu0 0.0
        %5089 = vmatprep.subr.mxu0 0.0
        %5090 = vmatpush1.msra.mxu0 0.0
        %5091 = vmatprep.subr.mxu0 0.0
        %5092 = vmatpush1.msra.mxu0 0.0
        %5093 = vmatprep.subr.mxu0 0.0
        %5094 = vmatpush1.msra.mxu0 0.0
        %5095 = vmatprep.subr.mxu0 0.0
        %5096 = vmatpush1.msra.mxu0 0.0
        %5097 = vmatprep.subr.mxu0 0.0
        %5098 = vmatpush1.msra.mxu0 0.0
        %5099 = vmatprep.subr.mxu0 0.0
        %5100 = vmatpush1.msra.mxu0 0.0
        %5101 = vmatprep.subr.mxu0 0.0
        %5102 = vmatpush1.msra.mxu0 0.0
        %5103 = vmatprep.subr.mxu0 0.0
        %5104 = vmatpush1.msra.mxu0 0.0
        %5105 = vmatprep.subr.mxu0 0.0
        %5106 = vmatpush1.msra.mxu0 0.0
        %5107 = vmatprep.subr.mxu0 0.0
        %5108 = vmatpush1.msra.mxu0 0.0
        %5109 = vmatprep.subr.mxu0 0.0
        %5110 = vmatpush1.msra.mxu0 0.0
        %5111 = vmatprep.subr.mxu0 0.0
        %5112 = vmatpush1.msra.mxu0 0.0
        %5113 = vmatprep.subr.mxu0 0.0
        %5114 = vmatpush1.msra.mxu0 0.0
        %5115 = vmatprep.subr.mxu0 0.0
        %5116 = vmatpush1.msra.mxu0 0.0
        %5117 = vmatprep.subr.mxu0 0.0
        %5118 = vmatpush1.msra.mxu0 0.0
        %5119 = vmatprep.subr.mxu0 0.0
        %5120 = vmatpush1.msra.mxu0 0.0
        %5121 = vmatprep.subr.mxu0 0.0
        %5122 = vmatpush1.msra.mxu0 0.0
        %5123 = vmatprep.mubr.f32.mxu0 0.0
        %5124 = vmatmul.mubr.f32.gmra.mrb[0].mxu0 %v5057
        %v5125 = vpop.f32.mrb[0].mxu0
        %v5126 = vadd.f32 0.0, %v5125
        %v5127 = vpop.f32.mrb[0].mxu0
        %5128 = vdwg.mxu0
        %5129 = vxpose.xlu0.b32.start [1/16] %v1699, 128
        %5130 = vxpose.xlu0.b32.cont [2/16] %v1700, 128
        %5131 = vxpose.xlu0.b32.cont [3/16] 0.0, 128
        %5132 = vxpose.xlu0.b32.cont [4/16] 0.0, 128
        %5133 = vxpose.xlu0.b32.cont [5/16] 0.0, 128
        %5134 = vxpose.xlu0.b32.cont [6/16] 0.0, 128
        %5135 = vxpose.xlu0.b32.cont [7/16] 0.0, 128
        %5136 = vxpose.xlu0.b32.cont [8/16] 0.0, 128
        %5137 = vxpose.xlu0.b32.cont [9/16] 0.0, 128
        %5138 = vxpose.xlu0.b32.cont [10/16] 0.0, 128
        %5139 = vxpose.xlu0.b32.cont [11/16] 0.0, 128
        %5140 = vxpose.xlu0.b32.cont [12/16] 0.0, 128
        %5141 = vxpose.xlu0.b32.cont [13/16] 0.0, 128
        %5142 = vxpose.xlu0.b32.cont [14/16] 0.0, 128
        %5143 = vxpose.xlu0.b32.cont [15/16] 0.0, 128
        %5144 = vxpose.xlu0.b32.end [16/16] 0.0, 128
        %v5145 = vpop.trf.xlu0
        %v5146 = vpop.trf.xlu0
        %v5147 = vpop.trf.xlu0
        %v5148 = vpop.trf.xlu0
        %v5149 = vpop.trf.xlu0
        %v5150 = vpop.trf.xlu0
        %v5151 = vpop.trf.xlu0
        %v5152 = vpop.trf.xlu0
        %v5153 = vpop.trf.xlu0
        %v5154 = vpop.trf.xlu0
        %v5155 = vpop.trf.xlu0
        %v5156 = vpop.trf.xlu0
        %v5157 = vpop.trf.xlu0
        %v5158 = vpop.trf.xlu0
        %v5159 = vpop.trf.xlu0
        %v5160 = vpop.trf.xlu0
        %v5162 = vsel %vm1709, %v5145, 0
        %5164 = vmatprep.subr.mxu0 0.0
        %5165 = vmatpush1.msra.mxu0 %v4804
        %5166 = vmatprep.subr.mxu0 0.0
        %5167 = vmatpush1.msra.mxu0 %v4805
        %5168 = vmatprep.subr.mxu0 0.0
        %5169 = vmatpush1.msra.mxu0 0.0
        %5170 = vmatprep.subr.mxu0 0.0
        %5171 = vmatpush1.msra.mxu0 0.0
        %5172 = vmatprep.subr.mxu0 0.0
        %5173 = vmatpush1.msra.mxu0 0.0
        %5174 = vmatprep.subr.mxu0 0.0
        %5175 = vmatpush1.msra.mxu0 0.0
        %5176 = vmatprep.subr.mxu0 0.0
        %5177 = vmatpush1.msra.mxu0 0.0
        %5178 = vmatprep.subr.mxu0 0.0
        %5179 = vmatpush1.msra.mxu0 0.0
        %5180 = vmatprep.subr.mxu0 0.0
        %5181 = vmatpush1.msra.mxu0 0.0
        %5182 = vmatprep.subr.mxu0 0.0
        %5183 = vmatpush1.msra.mxu0 0.0
        %5184 = vmatprep.subr.mxu0 0.0
        %5185 = vmatpush1.msra.mxu0 0.0
        %5186 = vmatprep.subr.mxu0 0.0
        %5187 = vmatpush1.msra.mxu0 0.0
        %5188 = vmatprep.subr.mxu0 0.0
        %5189 = vmatpush1.msra.mxu0 0.0
        %5190 = vmatprep.subr.mxu0 0.0
        %5191 = vmatpush1.msra.mxu0 0.0
        %5192 = vmatprep.subr.mxu0 0.0
        %5193 = vmatpush1.msra.mxu0 0.0
        %5194 = vmatprep.subr.mxu0 0.0
        %5195 = vmatpush1.msra.mxu0 0.0
        %5196 = vmatprep.subr.mxu0 0.0
        %5197 = vmatpush1.msra.mxu0 0.0
        %5198 = vmatprep.subr.mxu0 0.0
        %5199 = vmatpush1.msra.mxu0 0.0
        %5200 = vmatprep.subr.mxu0 0.0
        %5201 = vmatpush1.msra.mxu0 0.0
        %5202 = vmatprep.subr.mxu0 0.0
        %5203 = vmatpush1.msra.mxu0 0.0
        %5204 = vmatprep.subr.mxu0 0.0
        %5205 = vmatpush1.msra.mxu0 0.0
        %5206 = vmatprep.subr.mxu0 0.0
        %5207 = vmatpush1.msra.mxu0 0.0
        %5208 = vmatprep.subr.mxu0 0.0
        %5209 = vmatpush1.msra.mxu0 0.0
        %5210 = vmatprep.subr.mxu0 0.0
        %5211 = vmatpush1.msra.mxu0 0.0
        %5212 = vmatprep.subr.mxu0 0.0
        %5213 = vmatpush1.msra.mxu0 0.0
        %5214 = vmatprep.subr.mxu0 0.0
        %5215 = vmatpush1.msra.mxu0 0.0
        %5216 = vmatprep.subr.mxu0 0.0
        %5217 = vmatpush1.msra.mxu0 0.0
        %5218 = vmatprep.subr.mxu0 0.0
        %5219 = vmatpush1.msra.mxu0 0.0
        %5220 = vmatprep.subr.mxu0 0.0
        %5221 = vmatpush1.msra.mxu0 0.0
        %5222 = vmatprep.subr.mxu0 0.0
        %5223 = vmatpush1.msra.mxu0 0.0
        %5224 = vmatprep.subr.mxu0 0.0
        %5225 = vmatpush1.msra.mxu0 0.0
        %5226 = vmatprep.subr.mxu0 0.0
        %5227 = vmatpush1.msra.mxu0 0.0
        %5228 = vmatprep.mubr.f32.mxu0 0.0
        %5229 = vmatmul.mubr.f32.gmra.mrb[0].mxu0 %v5162
        %v5230 = vpop.f32.mrb[0].mxu0
        %v5231 = vadd.f32 0.0, %v5230
        %v5232 = vpop.f32.mrb[0].mxu0
        %5233 = vdwg.mxu0
        %5234 = vxpose.xlu0.b32.start [1/16] %v1701, 128
        %5235 = vxpose.xlu0.b32.cont [2/16] %v1702, 128
        %5236 = vxpose.xlu0.b32.cont [3/16] 0.0, 128
        %5237 = vxpose.xlu0.b32.cont [4/16] 0.0, 128
        %5238 = vxpose.xlu0.b32.cont [5/16] 0.0, 128
        %5239 = vxpose.xlu0.b32.cont [6/16] 0.0, 128
        %5240 = vxpose.xlu0.b32.cont [7/16] 0.0, 128
        %5241 = vxpose.xlu0.b32.cont [8/16] 0.0, 128
        %5242 = vxpose.xlu0.b32.cont [9/16] 0.0, 128
        %5243 = vxpose.xlu0.b32.cont [10/16] 0.0, 128
        %5244 = vxpose.xlu0.b32.cont [11/16] 0.0, 128
        %5245 = vxpose.xlu0.b32.cont [12/16] 0.0, 128
        %5246 = vxpose.xlu0.b32.cont [13/16] 0.0, 128
        %5247 = vxpose.xlu0.b32.cont [14/16] 0.0, 128
        %5248 = vxpose.xlu0.b32.cont [15/16] 0.0, 128
        %5249 = vxpose.xlu0.b32.end [16/16] 0.0, 128
        %v5250 = vpop.trf.xlu0
        %v5251 = vpop.trf.xlu0
        %v5252 = vpop.trf.xlu0
        %v5253 = vpop.trf.xlu0
        %v5254 = vpop.trf.xlu0
        %v5255 = vpop.trf.xlu0
        %v5256 = vpop.trf.xlu0
        %v5257 = vpop.trf.xlu0
        %v5258 = vpop.trf.xlu0
        %v5259 = vpop.trf.xlu0
        %v5260 = vpop.trf.xlu0
        %v5261 = vpop.trf.xlu0
        %v5262 = vpop.trf.xlu0
        %v5263 = vpop.trf.xlu0
        %v5264 = vpop.trf.xlu0
        %v5265 = vpop.trf.xlu0
        %v5267 = vsel %vm1709, %v5250, 0
        %5269 = vmatprep.subr.mxu0 0.0
        %5270 = vmatpush1.msra.mxu0 %v4806
        %5271 = vmatprep.subr.mxu0 0.0
        %5272 = vmatpush1.msra.mxu0 %v4807
        %5273 = vmatprep.subr.mxu0 0.0
        %5274 = vmatpush1.msra.mxu0 0.0
        %5275 = vmatprep.subr.mxu0 0.0
        %5276 = vmatpush1.msra.mxu0 0.0
        %5277 = vmatprep.subr.mxu0 0.0
        %5278 = vmatpush1.msra.mxu0 0.0
        %5279 = vmatprep.subr.mxu0 0.0
        %5280 = vmatpush1.msra.mxu0 0.0
        %5281 = vmatprep.subr.mxu0 0.0
        %5282 = vmatpush1.msra.mxu0 0.0
        %5283 = vmatprep.subr.mxu0 0.0
        %5284 = vmatpush1.msra.mxu0 0.0
        %5285 = vmatprep.subr.mxu0 0.0
        %5286 = vmatpush1.msra.mxu0 0.0
        %5287 = vmatprep.subr.mxu0 0.0
        %5288 = vmatpush1.msra.mxu0 0.0
        %5289 = vmatprep.subr.mxu0 0.0
        %5290 = vmatpush1.msra.mxu0 0.0
        %5291 = vmatprep.subr.mxu0 0.0
        %5292 = vmatpush1.msra.mxu0 0.0
        %5293 = vmatprep.subr.mxu0 0.0
        %5294 = vmatpush1.msra.mxu0 0.0
        %5295 = vmatprep.subr.mxu0 0.0
        %5296 = vmatpush1.msra.mxu0 0.0
        %5297 = vmatprep.subr.mxu0 0.0
        %5298 = vmatpush1.msra.mxu0 0.0
        %5299 = vmatprep.subr.mxu0 0.0
        %5300 = vmatpush1.msra.mxu0 0.0
        %5301 = vmatprep.subr.mxu0 0.0
        %5302 = vmatpush1.msra.mxu0 0.0
        %5303 = vmatprep.subr.mxu0 0.0
        %5304 = vmatpush1.msra.mxu0 0.0
        %5305 = vmatprep.subr.mxu0 0.0
        %5306 = vmatpush1.msra.mxu0 0.0
        %5307 = vmatprep.subr.mxu0 0.0
        %5308 = vmatpush1.msra.mxu0 0.0
        %5309 = vmatprep.subr.mxu0 0.0
        %5310 = vmatpush1.msra.mxu0 0.0
        %5311 = vmatprep.subr.mxu0 0.0
        %5312 = vmatpush1.msra.mxu0 0.0
        %5313 = vmatprep.subr.mxu0 0.0
        %5314 = vmatpush1.msra.mxu0 0.0
        %5315 = vmatprep.subr.mxu0 0.0
        %5316 = vmatpush1.msra.mxu0 0.0
        %5317 = vmatprep.subr.mxu0 0.0
        %5318 = vmatpush1.msra.mxu0 0.0
        %5319 = vmatprep.subr.mxu0 0.0
        %5320 = vmatpush1.msra.mxu0 0.0
        %5321 = vmatprep.subr.mxu0 0.0
        %5322 = vmatpush1.msra.mxu0 0.0
        %5323 = vmatprep.subr.mxu0 0.0
        %5324 = vmatpush1.msra.mxu0 0.0
        %5325 = vmatprep.subr.mxu0 0.0
        %5326 = vmatpush1.msra.mxu0 0.0
        %5327 = vmatprep.subr.mxu0 0.0
        %5328 = vmatpush1.msra.mxu0 0.0
        %5329 = vmatprep.subr.mxu0 0.0
        %5330 = vmatpush1.msra.mxu0 0.0
        %5331 = vmatprep.subr.mxu0 0.0
        %5332 = vmatpush1.msra.mxu0 0.0
        %5333 = vmatprep.mubr.f32.mxu0 0.0
        %5334 = vmatmul.mubr.f32.gmra.mrb[0].mxu0 %v5267
        %v5335 = vpop.f32.mrb[0].mxu0
        %v5336 = vadd.f32 0.0, %v5335
        %v5337 = vpop.f32.mrb[0].mxu0
        %5338 = vdwg.mxu0
        %5339 = vxpose.xlu0.b32.start [1/16] %v1703, 128
        %5340 = vxpose.xlu0.b32.cont [2/16] %v1704, 128
        %5341 = vxpose.xlu0.b32.cont [3/16] 0.0, 128
        %5342 = vxpose.xlu0.b32.cont [4/16] 0.0, 128
        %5343 = vxpose.xlu0.b32.cont [5/16] 0.0, 128
        %5344 = vxpose.xlu0.b32.cont [6/16] 0.0, 128
        %5345 = vxpose.xlu0.b32.cont [7/16] 0.0, 128
        %5346 = vxpose.xlu0.b32.cont [8/16] 0.0, 128
        %5347 = vxpose.xlu0.b32.cont [9/16] 0.0, 128
        %5348 = vxpose.xlu0.b32.cont [10/16] 0.0, 128
        %5349 = vxpose.xlu0.b32.cont [11/16] 0.0, 128
        %5350 = vxpose.xlu0.b32.cont [12/16] 0.0, 128
        %5351 = vxpose.xlu0.b32.cont [13/16] 0.0, 128
        %5352 = vxpose.xlu0.b32.cont [14/16] 0.0, 128
        %5353 = vxpose.xlu0.b32.cont [15/16] 0.0, 128
        %5354 = vxpose.xlu0.b32.end [16/16] 0.0, 128
        %v5355 = vpop.trf.xlu0
        %v5356 = vpop.trf.xlu0
        %v5357 = vpop.trf.xlu0
        %v5358 = vpop.trf.xlu0
        %v5359 = vpop.trf.xlu0
        %v5360 = vpop.trf.xlu0
        %v5361 = vpop.trf.xlu0
        %v5362 = vpop.trf.xlu0
        %v5363 = vpop.trf.xlu0
        %v5364 = vpop.trf.xlu0
        %v5365 = vpop.trf.xlu0
        %v5366 = vpop.trf.xlu0
        %v5367 = vpop.trf.xlu0
        %v5368 = vpop.trf.xlu0
        %v5369 = vpop.trf.xlu0
        %v5370 = vpop.trf.xlu0
        %v5372 = vsel %vm1709, %v5355, 0
        %5374 = vmatprep.subr.mxu0 0.0
        %5375 = vmatpush1.msra.mxu0 %v4808
        %5376 = vmatprep.subr.mxu0 0.0
        %5377 = vmatpush1.msra.mxu0 %v4809
        %5378 = vmatprep.subr.mxu0 0.0
        %5379 = vmatpush1.msra.mxu0 0.0
        %5380 = vmatprep.subr.mxu0 0.0
        %5381 = vmatpush1.msra.mxu0 0.0
        %5382 = vmatprep.subr.mxu0 0.0
        %5383 = vmatpush1.msra.mxu0 0.0
        %5384 = vmatprep.subr.mxu0 0.0
        %5385 = vmatpush1.msra.mxu0 0.0
        %5386 = vmatprep.subr.mxu0 0.0
        %5387 = vmatpush1.msra.mxu0 0.0
        %5388 = vmatprep.subr.mxu0 0.0
        %5389 = vmatpush1.msra.mxu0 0.0
        %5390 = vmatprep.subr.mxu0 0.0
        %5391 = vmatpush1.msra.mxu0 0.0
        %5392 = vmatprep.subr.mxu0 0.0
        %5393 = vmatpush1.msra.mxu0 0.0
        %5394 = vmatprep.subr.mxu0 0.0
        %5395 = vmatpush1.msra.mxu0 0.0
        %5396 = vmatprep.subr.mxu0 0.0
        %5397 = vmatpush1.msra.mxu0 0.0
        %5398 = vmatprep.subr.mxu0 0.0
        %5399 = vmatpush1.msra.mxu0 0.0
        %5400 = vmatprep.subr.mxu0 0.0
        %5401 = vmatpush1.msra.mxu0 0.0
        %5402 = vmatprep.subr.mxu0 0.0
        %5403 = vmatpush1.msra.mxu0 0.0
        %5404 = vmatprep.subr.mxu0 0.0
        %5405 = vmatpush1.msra.mxu0 0.0
        %5406 = vmatprep.subr.mxu0 0.0
        %5407 = vmatpush1.msra.mxu0 0.0
        %5408 = vmatprep.subr.mxu0 0.0
        %5409 = vmatpush1.msra.mxu0 0.0
        %5410 = vmatprep.subr.mxu0 0.0
        %5411 = vmatpush1.msra.mxu0 0.0
        %5412 = vmatprep.subr.mxu0 0.0
        %5413 = vmatpush1.msra.mxu0 0.0
        %5414 = vmatprep.subr.mxu0 0.0
        %5415 = vmatpush1.msra.mxu0 0.0
        %5416 = vmatprep.subr.mxu0 0.0
        %5417 = vmatpush1.msra.mxu0 0.0
        %5418 = vmatprep.subr.mxu0 0.0
        %5419 = vmatpush1.msra.mxu0 0.0
        %5420 = vmatprep.subr.mxu0 0.0
        %5421 = vmatpush1.msra.mxu0 0.0
        %5422 = vmatprep.subr.mxu0 0.0
        %5423 = vmatpush1.msra.mxu0 0.0
        %5424 = vmatprep.subr.mxu0 0.0
        %5425 = vmatpush1.msra.mxu0 0.0
        %5426 = vmatprep.subr.mxu0 0.0
        %5427 = vmatpush1.msra.mxu0 0.0
        %5428 = vmatprep.subr.mxu0 0.0
        %5429 = vmatpush1.msra.mxu0 0.0
        %5430 = vmatprep.subr.mxu0 0.0
        %5431 = vmatpush1.msra.mxu0 0.0
        %5432 = vmatprep.subr.mxu0 0.0
        %5433 = vmatpush1.msra.mxu0 0.0
        %5434 = vmatprep.subr.mxu0 0.0
        %5435 = vmatpush1.msra.mxu0 0.0
        %5436 = vmatprep.subr.mxu0 0.0
        %5437 = vmatpush1.msra.mxu0 0.0
        %5438 = vmatprep.mubr.f32.mxu0 0.0
        %5439 = vmatmul.mubr.f32.gmra.mrb[0].mxu0 %v5372
        %v5440 = vpop.f32.mrb[0].mxu0
        %v5441 = vadd.f32 0.0, %v5440
        %v5442 = vpop.f32.mrb[0].mxu0
        %5443 = vdwg.mxu0
        %5444 = vxpose.xlu0.b32.start [1/16] %v1705, 128
        %5445 = vxpose.xlu0.b32.cont [2/16] %v1706, 128
        %5446 = vxpose.xlu0.b32.cont [3/16] 0.0, 128
        %5447 = vxpose.xlu0.b32.cont [4/16] 0.0, 128
        %5448 = vxpose.xlu0.b32.cont [5/16] 0.0, 128
        %5449 = vxpose.xlu0.b32.cont [6/16] 0.0, 128
        %5450 = vxpose.xlu0.b32.cont [7/16] 0.0, 128
        %5451 = vxpose.xlu0.b32.cont [8/16] 0.0, 128
        %5452 = vxpose.xlu0.b32.cont [9/16] 0.0, 128
        %5453 = vxpose.xlu0.b32.cont [10/16] 0.0, 128
        %5454 = vxpose.xlu0.b32.cont [11/16] 0.0, 128
        %5455 = vxpose.xlu0.b32.cont [12/16] 0.0, 128
        %5456 = vxpose.xlu0.b32.cont [13/16] 0.0, 128
        %5457 = vxpose.xlu0.b32.cont [14/16] 0.0, 128
        %5458 = vxpose.xlu0.b32.cont [15/16] 0.0, 128
        %5459 = vxpose.xlu0.b32.end [16/16] 0.0, 128
        %v5460 = vpop.trf.xlu0
        %v5461 = vpop.trf.xlu0
        %v5462 = vpop.trf.xlu0
        %v5463 = vpop.trf.xlu0
        %v5464 = vpop.trf.xlu0
        %v5465 = vpop.trf.xlu0
        %v5466 = vpop.trf.xlu0
        %v5467 = vpop.trf.xlu0
        %v5468 = vpop.trf.xlu0
        %v5469 = vpop.trf.xlu0
        %v5470 = vpop.trf.xlu0
        %v5471 = vpop.trf.xlu0
        %v5472 = vpop.trf.xlu0
        %v5473 = vpop.trf.xlu0
        %v5474 = vpop.trf.xlu0
        %v5475 = vpop.trf.xlu0
        %v5477 = vsel %vm1709, %v5460, 0
        %5479 = vmatprep.subr.mxu0 0.0
        %5480 = vmatpush1.msra.mxu0 %v4810
        %5481 = vmatprep.subr.mxu0 0.0
        %5482 = vmatpush1.msra.mxu0 %v4811
        %5483 = vmatprep.subr.mxu0 0.0
        %5484 = vmatpush1.msra.mxu0 0.0
        %5485 = vmatprep.subr.mxu0 0.0
        %5486 = vmatpush1.msra.mxu0 0.0
        %5487 = vmatprep.subr.mxu0 0.0
        %5488 = vmatpush1.msra.mxu0 0.0
        %5489 = vmatprep.subr.mxu0 0.0
        %5490 = vmatpush1.msra.mxu0 0.0
        %5491 = vmatprep.subr.mxu0 0.0
        %5492 = vmatpush1.msra.mxu0 0.0
        %5493 = vmatprep.subr.mxu0 0.0
        %5494 = vmatpush1.msra.mxu0 0.0
        %5495 = vmatprep.subr.mxu0 0.0
        %5496 = vmatpush1.msra.mxu0 0.0
        %5497 = vmatprep.subr.mxu0 0.0
        %5498 = vmatpush1.msra.mxu0 0.0
        %5499 = vmatprep.subr.mxu0 0.0
        %5500 = vmatpush1.msra.mxu0 0.0
        %5501 = vmatprep.subr.mxu0 0.0
        %5502 = vmatpush1.msra.mxu0 0.0
        %5503 = vmatprep.subr.mxu0 0.0
        %5504 = vmatpush1.msra.mxu0 0.0
        %5505 = vmatprep.subr.mxu0 0.0
        %5506 = vmatpush1.msra.mxu0 0.0
        %5507 = vmatprep.subr.mxu0 0.0
        %5508 = vmatpush1.msra.mxu0 0.0
        %5509 = vmatprep.subr.mxu0 0.0
        %5510 = vmatpush1.msra.mxu0 0.0
        %5511 = vmatprep.subr.mxu0 0.0
        %5512 = vmatpush1.msra.mxu0 0.0
        %5513 = vmatprep.subr.mxu0 0.0
        %5514 = vmatpush1.msra.mxu0 0.0
        %5515 = vmatprep.subr.mxu0 0.0
        %5516 = vmatpush1.msra.mxu0 0.0
        %5517 = vmatprep.subr.mxu0 0.0
        %5518 = vmatpush1.msra.mxu0 0.0
        %5519 = vmatprep.subr.mxu0 0.0
        %5520 = vmatpush1.msra.mxu0 0.0
        %5521 = vmatprep.subr.mxu0 0.0
        %5522 = vmatpush1.msra.mxu0 0.0
        %5523 = vmatprep.subr.mxu0 0.0
        %5524 = vmatpush1.msra.mxu0 0.0
        %5525 = vmatprep.subr.mxu0 0.0
        %5526 = vmatpush1.msra.mxu0 0.0
        %5527 = vmatprep.subr.mxu0 0.0
        %5528 = vmatpush1.msra.mxu0 0.0
        %5529 = vmatprep.subr.mxu0 0.0
        %5530 = vmatpush1.msra.mxu0 0.0
        %5531 = vmatprep.subr.mxu0 0.0
        %5532 = vmatpush1.msra.mxu0 0.0
        %5533 = vmatprep.subr.mxu0 0.0
        %5534 = vmatpush1.msra.mxu0 0.0
        %5535 = vmatprep.subr.mxu0 0.0
        %5536 = vmatpush1.msra.mxu0 0.0
        %5537 = vmatprep.subr.mxu0 0.0
        %5538 = vmatpush1.msra.mxu0 0.0
        %5539 = vmatprep.subr.mxu0 0.0
        %5540 = vmatpush1.msra.mxu0 0.0
        %5541 = vmatprep.subr.mxu0 0.0
        %5542 = vmatpush1.msra.mxu0 0.0
        %5543 = vmatprep.mubr.f32.mxu0 0.0
        %5544 = vmatmul.mubr.f32.gmra.mrb[0].mxu0 %v5477
        %v5545 = vpop.f32.mrb[0].mxu0
        %v5546 = vadd.f32 0.0, %v5545
        %v5547 = vpop.f32.mrb[0].mxu0
        %5548 = vdwg.mxu0
        %5549 = vxpose.xlu0.b32.start [1/16] %v1707, 128
        %5550 = vxpose.xlu0.b32.cont [2/16] %v1708, 128
        %5551 = vxpose.xlu0.b32.cont [3/16] 0.0, 128
        %5552 = vxpose.xlu0.b32.cont [4/16] 0.0, 128
        %5553 = vxpose.xlu0.b32.cont [5/16] 0.0, 128
        %5554 = vxpose.xlu0.b32.cont [6/16] 0.0, 128
        %5555 = vxpose.xlu0.b32.cont [7/16] 0.0, 128
        %5556 = vxpose.xlu0.b32.cont [8/16] 0.0, 128
        %5557 = vxpose.xlu0.b32.cont [9/16] 0.0, 128
        %5558 = vxpose.xlu0.b32.cont [10/16] 0.0, 128
        %5559 = vxpose.xlu0.b32.cont [11/16] 0.0, 128
        %5560 = vxpose.xlu0.b32.cont [12/16] 0.0, 128
        %5561 = vxpose.xlu0.b32.cont [13/16] 0.0, 128
        %5562 = vxpose.xlu0.b32.cont [14/16] 0.0, 128
        %5563 = vxpose.xlu0.b32.cont [15/16] 0.0, 128
        %5564 = vxpose.xlu0.b32.end [16/16] 0.0, 128
        %v5565 = vpop.trf.xlu0
        %v5566 = vpop.trf.xlu0
        %v5567 = vpop.trf.xlu0
        %v5568 = vpop.trf.xlu0
        %v5569 = vpop.trf.xlu0
        %v5570 = vpop.trf.xlu0
        %v5571 = vpop.trf.xlu0
        %v5572 = vpop.trf.xlu0
        %v5573 = vpop.trf.xlu0
        %v5574 = vpop.trf.xlu0
        %v5575 = vpop.trf.xlu0
        %v5576 = vpop.trf.xlu0
        %v5577 = vpop.trf.xlu0
        %v5578 = vpop.trf.xlu0
        %v5579 = vpop.trf.xlu0
        %v5580 = vpop.trf.xlu0
        %v5582 = vsel %vm1709, %v5565, 0
        %5584 = vmatprep.subr.mxu0 0.0
        %5585 = vmatpush1.msra.mxu0 %v4812
        %5586 = vmatprep.subr.mxu0 0.0
        %5587 = vmatpush1.msra.mxu0 %v4813
        %5588 = vmatprep.subr.mxu0 0.0
        %5589 = vmatpush1.msra.mxu0 0.0
        %5590 = vmatprep.subr.mxu0 0.0
        %5591 = vmatpush1.msra.mxu0 0.0
        %5592 = vmatprep.subr.mxu0 0.0
        %5593 = vmatpush1.msra.mxu0 0.0
        %5594 = vmatprep.subr.mxu0 0.0
        %5595 = vmatpush1.msra.mxu0 0.0
        %5596 = vmatprep.subr.mxu0 0.0
        %5597 = vmatpush1.msra.mxu0 0.0
        %5598 = vmatprep.subr.mxu0 0.0
        %5599 = vmatpush1.msra.mxu0 0.0
        %5600 = vmatprep.subr.mxu0 0.0
        %5601 = vmatpush1.msra.mxu0 0.0
        %5602 = vmatprep.subr.mxu0 0.0
        %5603 = vmatpush1.msra.mxu0 0.0
        %5604 = vmatprep.subr.mxu0 0.0
        %5605 = vmatpush1.msra.mxu0 0.0
        %5606 = vmatprep.subr.mxu0 0.0
        %5607 = vmatpush1.msra.mxu0 0.0
        %5608 = vmatprep.subr.mxu0 0.0
        %5609 = vmatpush1.msra.mxu0 0.0
        %5610 = vmatprep.subr.mxu0 0.0
        %5611 = vmatpush1.msra.mxu0 0.0
        %5612 = vmatprep.subr.mxu0 0.0
        %5613 = vmatpush1.msra.mxu0 0.0
        %5614 = vmatprep.subr.mxu0 0.0
        %5615 = vmatpush1.msra.mxu0 0.0
        %5616 = vmatprep.subr.mxu0 0.0
        %5617 = vmatpush1.msra.mxu0 0.0
        %5618 = vmatprep.subr.mxu0 0.0
        %5619 = vmatpush1.msra.mxu0 0.0
        %5620 = vmatprep.subr.mxu0 0.0
        %5621 = vmatpush1.msra.mxu0 0.0
        %5622 = vmatprep.subr.mxu0 0.0
        %5623 = vmatpush1.msra.mxu0 0.0
        %5624 = vmatprep.subr.mxu0 0.0
        %5625 = vmatpush1.msra.mxu0 0.0
        %5626 = vmatprep.subr.mxu0 0.0
        %5627 = vmatpush1.msra.mxu0 0.0
        %5628 = vmatprep.subr.mxu0 0.0
        %5629 = vmatpush1.msra.mxu0 0.0
        %5630 = vmatprep.subr.mxu0 0.0
        %5631 = vmatpush1.msra.mxu0 0.0
        %5632 = vmatprep.subr.mxu0 0.0
        %5633 = vmatpush1.msra.mxu0 0.0
        %5634 = vmatprep.subr.mxu0 0.0
        %5635 = vmatpush1.msra.mxu0 0.0
        %5636 = vmatprep.subr.mxu0 0.0
        %5637 = vmatpush1.msra.mxu0 0.0
        %5638 = vmatprep.subr.mxu0 0.0
        %5639 = vmatpush1.msra.mxu0 0.0
        %5640 = vmatprep.subr.mxu0 0.0
        %5641 = vmatpush1.msra.mxu0 0.0
        %5642 = vmatprep.subr.mxu0 0.0
        %5643 = vmatpush1.msra.mxu0 0.0
        %5644 = vmatprep.subr.mxu0 0.0
        %5645 = vmatpush1.msra.mxu0 0.0
        %5646 = vmatprep.subr.mxu0 0.0
        %5647 = vmatpush1.msra.mxu0 0.0
        %5648 = vmatprep.mubr.f32.mxu0 0.0
        %5649 = vmatmul.mubr.f32.gmra.mrb[0].mxu0 %v5582
        %v5650 = vpop.f32.mrb[0].mxu0
        %v5651 = vadd.f32 0.0, %v5650
        %v5652 = vpop.f32.mrb[0].mxu0
        %5653 = vdwg.mxu0
        %v5654 = vld [vmem:[#allocation7] sm:$0xff]
        %v5655 = vld [vmem:[#allocation7 + $0x8] sm:$0xff]
        %v5656 = vld [vmem:[#allocation7 + $0x10] sm:$0xff]
        %v5657 = vld [vmem:[#allocation7 + $0x18] sm:$0xff]
        %v5659 = vsel %vm635, %v4916, 0
        %v5662 = vsel %vm635, %v5021, 0
        %v5665 = vsel %vm635, %v5126, 0
        %v5668 = vsel %vm635, %v5231, 0
        %v5671 = vsel %vm635, %v5336, 0
        %v5674 = vsel %vm635, %v5441, 0
        %v5677 = vsel %vm635, %v5546, 0
        %v5680 = vsel %vm635, %v5651, 0
        %5682 = vmatprep.subr.mxu0 0.0
        %5683 = vmatpush1.msra.mxu0 %v5654
        %5684 = vmatprep.subr.mxu0 0.0
        %5685 = vmatpush1.msra.mxu0 %v5655
        %5686 = vmatprep.subr.mxu0 0.0
        %5687 = vmatpush1.msra.mxu0 %v5656
        %5688 = vmatprep.subr.mxu0 0.0
        %5689 = vmatpush1.msra.mxu0 %v5657
        %5690 = vmatprep.subr.mxu0 0.0
        %5691 = vmatpush1.msra.mxu0 0.0
        %5692 = vmatprep.subr.mxu0 0.0
        %5693 = vmatpush1.msra.mxu0 0.0
        %5694 = vmatprep.subr.mxu0 0.0
        %5695 = vmatpush1.msra.mxu0 0.0
        %5696 = vmatprep.subr.mxu0 0.0
        %5697 = vmatpush1.msra.mxu0 0.0
        %5698 = vmatprep.subr.mxu0 0.0
        %5699 = vmatpush1.msra.mxu0 0.0
        %5700 = vmatprep.subr.mxu0 0.0
        %5701 = vmatpush1.msra.mxu0 0.0
        %5702 = vmatprep.subr.mxu0 0.0
        %5703 = vmatpush1.msra.mxu0 0.0
        %5704 = vmatprep.subr.mxu0 0.0
        %5705 = vmatpush1.msra.mxu0 0.0
        %5706 = vmatprep.subr.mxu0 0.0
        %5707 = vmatpush1.msra.mxu0 0.0
        %5708 = vmatprep.subr.mxu0 0.0
        %5709 = vmatpush1.msra.mxu0 0.0
        %5710 = vmatprep.subr.mxu0 0.0
        %5711 = vmatpush1.msra.mxu0 0.0
        %5712 = vmatprep.subr.mxu0 0.0
        %5713 = vmatpush1.msra.mxu0 0.0
        %5714 = vmatprep.subr.mxu0 0.0
        %5715 = vmatpush1.msra.mxu0 0.0
        %5716 = vmatprep.subr.mxu0 0.0
        %5717 = vmatpush1.msra.mxu0 0.0
        %5718 = vmatprep.subr.mxu0 0.0
        %5719 = vmatpush1.msra.mxu0 0.0
        %5720 = vmatprep.subr.mxu0 0.0
        %5721 = vmatpush1.msra.mxu0 0.0
        %5722 = vmatprep.subr.mxu0 0.0
        %5723 = vmatpush1.msra.mxu0 0.0
        %5724 = vmatprep.subr.mxu0 0.0
        %5725 = vmatpush1.msra.mxu0 0.0
        %5726 = vmatprep.subr.mxu0 0.0
        %5727 = vmatpush1.msra.mxu0 0.0
        %5728 = vmatprep.subr.mxu0 0.0
        %5729 = vmatpush1.msra.mxu0 0.0
        %5730 = vmatprep.subr.mxu0 0.0
        %5731 = vmatpush1.msra.mxu0 0.0
        %5732 = vmatprep.subr.mxu0 0.0
        %5733 = vmatpush1.msra.mxu0 0.0
        %5734 = vmatprep.subr.mxu0 0.0
        %5735 = vmatpush1.msra.mxu0 0.0
        %5736 = vmatprep.subr.mxu0 0.0
        %5737 = vmatpush1.msra.mxu0 0.0
        %5738 = vmatprep.subr.mxu0 0.0
        %5739 = vmatpush1.msra.mxu0 0.0
        %5740 = vmatprep.subr.mxu0 0.0
        %5741 = vmatpush1.msra.mxu0 0.0
        %5742 = vmatprep.subr.mxu0 0.0
        %5743 = vmatpush1.msra.mxu0 0.0
        %5744 = vmatprep.subr.mxu0 0.0
        %5745 = vmatpush1.msra.mxu0 0.0
        %5746 = vmatprep.mubr.f32.mxu0 0.0
        %5747 = vmatmul.mubr.f32.gmra.mrb[0].mxu0 %v5659
        %v5748 = vpop.f32.mrb[0].mxu0
        %v5749 = vadd.f32 0.0, %v5748
        %v5750 = vpop.f32.mrb[0].mxu0
        %5751 = vmatprep.mubr.f32.mxu0 0.0
        %5752 = vmatmul.mubr.f32.gmra.mrb[0].mxu0 %v5662
        %v5753 = vpop.f32.mrb[0].mxu0
        %v5754 = vadd.f32 0.0, %v5753
        %v5755 = vpop.f32.mrb[0].mxu0
        %5756 = vmatprep.mubr.f32.mxu0 0.0
        %5757 = vmatmul.mubr.f32.gmra.mrb[0].mxu0 %v5665
        %v5758 = vpop.f32.mrb[0].mxu0
        %v5759 = vadd.f32 0.0, %v5758
        %v5760 = vpop.f32.mrb[0].mxu0
        %5761 = vmatprep.mubr.f32.mxu0 0.0
        %5762 = vmatmul.mubr.f32.gmra.mrb[0].mxu0 %v5668
        %v5763 = vpop.f32.mrb[0].mxu0
        %v5764 = vadd.f32 0.0, %v5763
        %v5765 = vpop.f32.mrb[0].mxu0
        %5766 = vmatprep.mubr.f32.mxu0 0.0
        %5767 = vmatmul.mubr.f32.gmra.mrb[0].mxu0 %v5671
        %v5768 = vpop.f32.mrb[0].mxu0
        %v5769 = vadd.f32 0.0, %v5768
        %v5770 = vpop.f32.mrb[0].mxu0
        %5771 = vmatprep.mubr.f32.mxu0 0.0
        %5772 = vmatmul.mubr.f32.gmra.mrb[0].mxu0 %v5674
        %v5773 = vpop.f32.mrb[0].mxu0
        %v5774 = vadd.f32 0.0, %v5773
        %v5775 = vpop.f32.mrb[0].mxu0
        %5776 = vmatprep.mubr.f32.mxu0 0.0
        %5777 = vmatmul.mubr.f32.gmra.mrb[0].mxu0 %v5677
        %v5778 = vpop.f32.mrb[0].mxu0
        %v5779 = vadd.f32 0.0, %v5778
        %v5780 = vpop.f32.mrb[0].mxu0
        %5781 = vmatprep.mubr.f32.mxu0 0.0
        %5782 = vmatmul.mubr.f32.gmra.mrb[0].mxu0 %v5680
        %v5783 = vpop.f32.mrb[0].mxu0
        %v5784 = vadd.f32 0.0, %v5783
        %v5785 = vpop.f32.mrb[0].mxu0
        %5786 = vdwg.mxu0
        %v5787 = vld [vmem:[%s10] sm:$0xff]
        %v5788 = vld [vmem:[%s10 + $0x8] sm:$0xff]
        %v5789 = vld [vmem:[%s10 + $0x10] sm:$0xff]
        %v5790 = vld [vmem:[%s10 + $0x18] sm:$0xff]
        %v5791 = vld [vmem:[%s10 + $0x20] sm:$0xff]
        %v5792 = vld [vmem:[%s10 + $0x28] sm:$0xff]
        %v5793 = vld [vmem:[%s10 + $0x30] sm:$0xff]
        %v5794 = vld [vmem:[%s10 + $0x38] sm:$0xff]
        %v5796 = vsel %vm635, %v5749, 0
        %v5799 = vsel %vm635, %v5754, 0
        %v5802 = vsel %vm635, %v5759, 0
        %v5805 = vsel %vm635, %v5764, 0
        %v5808 = vsel %vm635, %v5769, 0
        %v5811 = vsel %vm635, %v5774, 0
        %v5814 = vsel %vm635, %v5779, 0
        %v5817 = vsel %vm635, %v5784, 0
        %5819 = vmatprep.subr.mxu0 0.0
        %5820 = vmatpush1.msra.mxu0 %v5791
        %5821 = vmatprep.subr.mxu0 0.0
        %5822 = vmatpush1.msra.mxu0 %v5792
        %5823 = vmatprep.subr.mxu0 0.0
        %5824 = vmatpush1.msra.mxu0 %v5793
        %5825 = vmatprep.subr.mxu0 0.0
        %5826 = vmatpush1.msra.mxu0 %v5794
        %5827 = vmatprep.subr.mxu0 0.0
        %5828 = vmatpush1.msra.mxu0 0.0
        %5829 = vmatprep.subr.mxu0 0.0
        %5830 = vmatpush1.msra.mxu0 0.0
        %5831 = vmatprep.subr.mxu0 0.0
        %5832 = vmatpush1.msra.mxu0 0.0
        %5833 = vmatprep.subr.mxu0 0.0
        %5834 = vmatpush1.msra.mxu0 0.0
        %5835 = vmatprep.subr.mxu0 0.0
        %5836 = vmatpush1.msra.mxu0 0.0
        %5837 = vmatprep.subr.mxu0 0.0
        %5838 = vmatpush1.msra.mxu0 0.0
        %5839 = vmatprep.subr.mxu0 0.0
        %5840 = vmatpush1.msra.mxu0 0.0
        %5841 = vmatprep.subr.mxu0 0.0
        %5842 = vmatpush1.msra.mxu0 0.0
        %5843 = vmatprep.subr.mxu0 0.0
        %5844 = vmatpush1.msra.mxu0 0.0
        %5845 = vmatprep.subr.mxu0 0.0
        %5846 = vmatpush1.msra.mxu0 0.0
        %5847 = vmatprep.subr.mxu0 0.0
        %5848 = vmatpush1.msra.mxu0 0.0
        %5849 = vmatprep.subr.mxu0 0.0
        %5850 = vmatpush1.msra.mxu0 0.0
        %5851 = vmatprep.subr.mxu0 0.0
        %5852 = vmatpush1.msra.mxu0 0.0
        %5853 = vmatprep.subr.mxu0 0.0
        %5854 = vmatpush1.msra.mxu0 0.0
        %5855 = vmatprep.subr.mxu0 0.0
        %5856 = vmatpush1.msra.mxu0 0.0
        %5857 = vmatprep.subr.mxu0 0.0
        %5858 = vmatpush1.msra.mxu0 0.0
        %5859 = vmatprep.subr.mxu0 0.0
        %5860 = vmatpush1.msra.mxu0 0.0
        %5861 = vmatprep.subr.mxu0 0.0
        %5862 = vmatpush1.msra.mxu0 0.0
        %5863 = vmatprep.subr.mxu0 0.0
        %5864 = vmatpush1.msra.mxu0 0.0
        %5865 = vmatprep.subr.mxu0 0.0
        %5866 = vmatpush1.msra.mxu0 0.0
        %5867 = vmatprep.subr.mxu0 0.0
        %5868 = vmatpush1.msra.mxu0 0.0
        %5869 = vmatprep.subr.mxu0 0.0
        %5870 = vmatpush1.msra.mxu0 0.0
        %5871 = vmatprep.subr.mxu0 0.0
        %5872 = vmatpush1.msra.mxu0 0.0
        %5873 = vmatprep.subr.mxu0 0.0
        %5874 = vmatpush1.msra.mxu0 0.0
        %5875 = vmatprep.subr.mxu0 0.0
        %5876 = vmatpush1.msra.mxu0 0.0
        %5877 = vmatprep.subr.mxu0 0.0
        %5878 = vmatpush1.msra.mxu0 0.0
        %5879 = vmatprep.subr.mxu0 0.0
        %5880 = vmatpush1.msra.mxu0 0.0
        %5881 = vmatprep.subr.mxu0 0.0
        %5882 = vmatpush1.msra.mxu0 0.0
        %5883 = vmatprep.mubr.f32.mxu0 0.0
        %5884 = vmatmul.mubr.f32.gmra.mrb[0].mxu0 %v5796
        %v5885 = vpop.f32.mrb[0].mxu0
        %v5886 = vadd.f32 0.0, %v5885
        %v5887 = vpop.f32.mrb[0].mxu0
        %5888 = vmatprep.mubr.f32.mxu0 0.0
        %5889 = vmatmul.mubr.f32.gmra.mrb[0].mxu0 %v5799
        %v5890 = vpop.f32.mrb[0].mxu0
        %v5891 = vadd.f32 0.0, %v5890
        %v5892 = vpop.f32.mrb[0].mxu0
        %5893 = vmatprep.mubr.f32.mxu0 0.0
        %5894 = vmatmul.mubr.f32.gmra.mrb[0].mxu0 %v5802
        %v5895 = vpop.f32.mrb[0].mxu0
        %v5896 = vadd.f32 0.0, %v5895
        %v5897 = vpop.f32.mrb[0].mxu0
        %5898 = vmatprep.mubr.f32.mxu0 0.0
        %5899 = vmatmul.mubr.f32.gmra.mrb[0].mxu0 %v5805
        %v5900 = vpop.f32.mrb[0].mxu0
        %v5901 = vadd.f32 0.0, %v5900
        %v5902 = vpop.f32.mrb[0].mxu0
        %5903 = vmatprep.mubr.f32.mxu0 0.0
        %5904 = vmatmul.mubr.f32.gmra.mrb[0].mxu0 %v5808
        %v5905 = vpop.f32.mrb[0].mxu0
        %v5906 = vadd.f32 0.0, %v5905
        %v5907 = vpop.f32.mrb[0].mxu0
        %5908 = vmatprep.mubr.f32.mxu0 0.0
        %5909 = vmatmul.mubr.f32.gmra.mrb[0].mxu0 %v5811
        %v5910 = vpop.f32.mrb[0].mxu0
        %v5911 = vadd.f32 0.0, %v5910
        %v5912 = vpop.f32.mrb[0].mxu0
        %5913 = vmatprep.mubr.f32.mxu0 0.0
        %5914 = vmatmul.mubr.f32.gmra.mrb[0].mxu0 %v5814
        %v5915 = vpop.f32.mrb[0].mxu0
        %v5916 = vadd.f32 0.0, %v5915
        %v5917 = vpop.f32.mrb[0].mxu0
        %5918 = vmatprep.mubr.f32.mxu0 0.0
        %5919 = vmatmul.mubr.f32.gmra.mrb[0].mxu0 %v5817
        %v5920 = vpop.f32.mrb[0].mxu0
        %v5921 = vadd.f32 0.0, %v5920
        %v5922 = vpop.f32.mrb[0].mxu0
        %5923 = vdwg.mxu0
        %v5925 = vsel %vm635, %v3336, 0
        %v5928 = vsel %vm635, %v3337, 0
        %v5931 = vsel %vm635, %v3338, 0
        %v5934 = vsel %vm635, %v3339, 0
        %v5937 = vsel %vm635, %v3340, 0
        %v5940 = vsel %vm635, %v3341, 0
        %v5943 = vsel %vm635, %v3342, 0
        %v5946 = vsel %vm635, %v3343, 0
        %5948 = vmatprep.subr.mxu0 0.0
        %5949 = vmatpush1.msra.mxu0 %v5787
        %5950 = vmatprep.subr.mxu0 0.0
        %5951 = vmatpush1.msra.mxu0 %v5788
        %5952 = vmatprep.subr.mxu0 0.0
        %5953 = vmatpush1.msra.mxu0 %v5789
        %5954 = vmatprep.subr.mxu0 0.0
        %5955 = vmatpush1.msra.mxu0 %v5790
        %5956 = vmatprep.subr.mxu0 0.0
        %5957 = vmatpush1.msra.mxu0 0.0
        %5958 = vmatprep.subr.mxu0 0.0
        %5959 = vmatpush1.msra.mxu0 0.0
        %5960 = vmatprep.subr.mxu0 0.0
        %5961 = vmatpush1.msra.mxu0 0.0
        %5962 = vmatprep.subr.mxu0 0.0
        %5963 = vmatpush1.msra.mxu0 0.0
        %5964 = vmatprep.subr.mxu0 0.0
        %5965 = vmatpush1.msra.mxu0 0.0
        %5966 = vmatprep.subr.mxu0 0.0
        %5967 = vmatpush1.msra.mxu0 0.0
        %5968 = vmatprep.subr.mxu0 0.0
        %5969 = vmatpush1.msra.mxu0 0.0
        %5970 = vmatprep.subr.mxu0 0.0
        %5971 = vmatpush1.msra.mxu0 0.0
        %5972 = vmatprep.subr.mxu0 0.0
        %5973 = vmatpush1.msra.mxu0 0.0
        %5974 = vmatprep.subr.mxu0 0.0
        %5975 = vmatpush1.msra.mxu0 0.0
        %5976 = vmatprep.subr.mxu0 0.0
        %5977 = vmatpush1.msra.mxu0 0.0
        %5978 = vmatprep.subr.mxu0 0.0
        %5979 = vmatpush1.msra.mxu0 0.0
        %5980 = vmatprep.subr.mxu0 0.0
        %5981 = vmatpush1.msra.mxu0 0.0
        %5982 = vmatprep.subr.mxu0 0.0
        %5983 = vmatpush1.msra.mxu0 0.0
        %5984 = vmatprep.subr.mxu0 0.0
        %5985 = vmatpush1.msra.mxu0 0.0
        %5986 = vmatprep.subr.mxu0 0.0
        %5987 = vmatpush1.msra.mxu0 0.0
        %5988 = vmatprep.subr.mxu0 0.0
        %5989 = vmatpush1.msra.mxu0 0.0
        %5990 = vmatprep.subr.mxu0 0.0
        %5991 = vmatpush1.msra.mxu0 0.0
        %5992 = vmatprep.subr.mxu0 0.0
        %5993 = vmatpush1.msra.mxu0 0.0
        %5994 = vmatprep.subr.mxu0 0.0
        %5995 = vmatpush1.msra.mxu0 0.0
        %5996 = vmatprep.subr.mxu0 0.0
        %5997 = vmatpush1.msra.mxu0 0.0
        %5998 = vmatprep.subr.mxu0 0.0
        %5999 = vmatpush1.msra.mxu0 0.0
        %6000 = vmatprep.subr.mxu0 0.0
        %6001 = vmatpush1.msra.mxu0 0.0
        %6002 = vmatprep.subr.mxu0 0.0
        %6003 = vmatpush1.msra.mxu0 0.0
        %6004 = vmatprep.subr.mxu0 0.0
        %6005 = vmatpush1.msra.mxu0 0.0
        %6006 = vmatprep.subr.mxu0 0.0
        %6007 = vmatpush1.msra.mxu0 0.0
        %6008 = vmatprep.subr.mxu0 0.0
        %6009 = vmatpush1.msra.mxu0 0.0
        %6010 = vmatprep.subr.mxu0 0.0
        %6011 = vmatpush1.msra.mxu0 0.0
        %6012 = vmatprep.mubr.f32.mxu0 0.0
        %6013 = vmatmul.mubr.f32.gmra.mrb[0].mxu0 %v5925
        %v6014 = vpop.f32.mrb[0].mxu0
        %v6015 = vadd.f32 %v5886, %v6014
        %v6016 = vpop.f32.mrb[0].mxu0
        %6017 = vmatprep.mubr.f32.mxu0 0.0
        %6018 = vmatmul.mubr.f32.gmra.mrb[0].mxu0 %v5928
        %v6019 = vpop.f32.mrb[0].mxu0
        %v6020 = vadd.f32 %v5891, %v6019
        %v6021 = vpop.f32.mrb[0].mxu0
        %6022 = vmatprep.mubr.f32.mxu0 0.0
        %6023 = vmatmul.mubr.f32.gmra.mrb[0].mxu0 %v5931
        %v6024 = vpop.f32.mrb[0].mxu0
        %v6025 = vadd.f32 %v5896, %v6024
        %v6026 = vpop.f32.mrb[0].mxu0
        %6027 = vmatprep.mubr.f32.mxu0 0.0
        %6028 = vmatmul.mubr.f32.gmra.mrb[0].mxu0 %v5934
        %v6029 = vpop.f32.mrb[0].mxu0
        %v6030 = vadd.f32 %v5901, %v6029
        %v6031 = vpop.f32.mrb[0].mxu0
        %6032 = vmatprep.mubr.f32.mxu0 0.0
        %6033 = vmatmul.mubr.f32.gmra.mrb[0].mxu0 %v5937
        %v6034 = vpop.f32.mrb[0].mxu0
        %v6035 = vadd.f32 %v5906, %v6034
        %v6036 = vpop.f32.mrb[0].mxu0
        %6037 = vmatprep.mubr.f32.mxu0 0.0
        %6038 = vmatmul.mubr.f32.gmra.mrb[0].mxu0 %v5940
        %v6039 = vpop.f32.mrb[0].mxu0
        %v6040 = vadd.f32 %v5911, %v6039
        %v6041 = vpop.f32.mrb[0].mxu0
        %6042 = vmatprep.mubr.f32.mxu0 0.0
        %6043 = vmatmul.mubr.f32.gmra.mrb[0].mxu0 %v5943
        %v6044 = vpop.f32.mrb[0].mxu0
        %v6045 = vadd.f32 %v5916, %v6044
        %v6046 = vpop.f32.mrb[0].mxu0
        %6047 = vmatprep.mubr.f32.mxu0 0.0
        %6048 = vmatmul.mubr.f32.gmra.mrb[0].mxu0 %v5946
        %v6049 = vpop.f32.mrb[0].mxu0
        %v6050 = vadd.f32 %v5921, %v6049
        %v6051 = vpop.f32.mrb[0].mxu0
        %6052 = vdwg.mxu0
        %v6053 = vld [vmem:[%s11] sm:$0x1]
        %v6055 = vlaneseq
        %v6056 = vshrl.u32 %v6055, 7
        %v6057 = vsub.s32 0, %v6056
        %v6058 = vrot.slane %v6053, %v6057
        %v6060 = vadd.f32 %v6015, %v6058
        %v6061 = vadd.f32 %v6020, %v6058
        %v6062 = vadd.f32 %v6025, %v6058
        %v6063 = vadd.f32 %v6030, %v6058
        %v6064 = vadd.f32 %v6035, %v6058
        %v6065 = vadd.f32 %v6040, %v6058
        %v6066 = vadd.f32 %v6045, %v6058
        %v6067 = vadd.f32 %v6050, %v6058
        %v6068 = vxor.u32 %v6060, 2147483648
        %v6069 = vxor.u32 %v6061, 2147483648
        %v6070 = vxor.u32 %v6062, 2147483648
        %v6071 = vxor.u32 %v6063, 2147483648
        %v6072 = vxor.u32 %v6064, 2147483648
        %v6073 = vxor.u32 %v6065, 2147483648
        %v6074 = vxor.u32 %v6066, 2147483648
        %v6075 = vxor.u32 %v6067, 2147483648
        %v6076 = vmul.f32 %v6068, 1.442695
        %v6077 = vpow.pop %v6076
        %v6078 = vmul.f32 %v6069, 1.442695
        %v6079 = vpow.pop %v6078
        %v6080 = vmul.f32 %v6070, 1.442695
        %v6081 = vpow.pop %v6080
        %v6082 = vmul.f32 %v6071, 1.442695
        %v6083 = vpow.pop %v6082
        %v6084 = vmul.f32 %v6072, 1.442695
        %v6085 = vpow.pop %v6084
        %v6086 = vmul.f32 %v6073, 1.442695
        %v6087 = vpow.pop %v6086
        %v6088 = vmul.f32 %v6074, 1.442695
        %v6089 = vpow.pop %v6088
        %v6090 = vmul.f32 %v6075, 1.442695
        %v6091 = vpow.pop %v6090
        %v6092 = vadd.f32 %v6077, 1.0
        %v6093 = vadd.f32 %v6079, 1.0
        %v6094 = vadd.f32 %v6081, 1.0
        %v6095 = vadd.f32 %v6083, 1.0
        %v6096 = vadd.f32 %v6085, 1.0
        %v6097 = vadd.f32 %v6087, 1.0
        %v6098 = vadd.f32 %v6089, 1.0
        %v6099 = vadd.f32 %v6091, 1.0
        %v6100 = vrcp.pop %v6092
        %v6101 = vmul.f32 1.0, %v6100
        %v6102 = vrcp.pop %v6093
        %v6103 = vmul.f32 1.0, %v6102
        %v6104 = vrcp.pop %v6094
        %v6105 = vmul.f32 1.0, %v6104
        %v6106 = vrcp.pop %v6095
        %v6107 = vmul.f32 1.0, %v6106
        %v6108 = vrcp.pop %v6096
        %v6109 = vmul.f32 1.0, %v6108
        %v6110 = vrcp.pop %v6097
        %v6111 = vmul.f32 1.0, %v6110
        %v6112 = vrcp.pop %v6098
        %v6113 = vmul.f32 1.0, %v6112
        %v6114 = vrcp.pop %v6099
        %v6115 = vmul.f32 1.0, %v6114
        %v6116 = vmul.f32 %v6101, %v3336
        %v6117 = vmul.f32 %v6103, %v3337
        %v6118 = vmul.f32 %v6105, %v3338
        %v6119 = vmul.f32 %v6107, %v3339
        %v6120 = vmul.f32 %v6109, %v3340
        %v6121 = vmul.f32 %v6111, %v3341
        %v6122 = vmul.f32 %v6113, %v3342
        %v6123 = vmul.f32 %v6115, %v3343
        %v6124 = vsub.f32 1.0, %v6101
        %v6125 = vsub.f32 1.0, %v6103
        %v6126 = vsub.f32 1.0, %v6105
        %v6127 = vsub.f32 1.0, %v6107
        %v6128 = vsub.f32 1.0, %v6109
        %v6129 = vsub.f32 1.0, %v6111
        %v6130 = vsub.f32 1.0, %v6113
        %v6131 = vsub.f32 1.0, %v6115
        %v6132 = vmul.f32 %v6124, %v5749
        %v6133 = vmul.f32 %v6125, %v5754
        %v6134 = vmul.f32 %v6126, %v5759
        %v6135 = vmul.f32 %v6127, %v5764
        %v6136 = vmul.f32 %v6128, %v5769
        %v6137 = vmul.f32 %v6129, %v5774
        %v6138 = vmul.f32 %v6130, %v5779
        %v6139 = vmul.f32 %v6131, %v5784
        %v6140 = vadd.f32 %v6116, %v6132
        %v6141 = vadd.f32 %v6117, %v6133
        %v6142 = vadd.f32 %v6118, %v6134
        %v6143 = vadd.f32 %v6119, %v6135
        %v6144 = vadd.f32 %v6120, %v6136
        %v6145 = vadd.f32 %v6121, %v6137
        %v6146 = vadd.f32 %v6122, %v6138
        %v6147 = vadd.f32 %v6123, %v6139
        %vm6148 = vcmp.ge.f32.partialorder %v6140, 0.0
        %vm6149 = vcmp.ge.f32.partialorder %v6141, 0.0
        %vm6150 = vcmp.ge.f32.partialorder %v6142, 0.0
        %vm6151 = vcmp.ge.f32.partialorder %v6143, 0.0
        %vm6152 = vcmp.ge.f32.partialorder %v6144, 0.0
        %vm6153 = vcmp.ge.f32.partialorder %v6145, 0.0
        %vm6154 = vcmp.ge.f32.partialorder %v6146, 0.0
        %vm6155 = vcmp.ge.f32.partialorder %v6147, 0.0
        %v6156 = vmul.f32 %v6140, 0.01
        %v6157 = vmul.f32 %v6141, 0.01
        %v6158 = vmul.f32 %v6142, 0.01
        %v6159 = vmul.f32 %v6143, 0.01
        %v6160 = vmul.f32 %v6144, 0.01
        %v6161 = vmul.f32 %v6145, 0.01
        %v6162 = vmul.f32 %v6146, 0.01
        %v6163 = vmul.f32 %v6147, 0.01
        %v6164 = vsel %vm6148, %v6140, %v6156
        %v6165 = vsel %vm6149, %v6141, %v6157
        %v6166 = vsel %vm6150, %v6142, %v6158
        %v6167 = vsel %vm6151, %v6143, %v6159
        %v6168 = vsel %vm6152, %v6144, %v6160
        %v6169 = vsel %vm6153, %v6145, %v6161
        %v6170 = vsel %vm6154, %v6146, %v6162
        %v6171 = vsel %vm6155, %v6147, %v6163
        %6172 = vst.msk [vmem:[%s557] sm:$0xff] %vm635, %v4798
        %6173 = vst.msk [vmem:[%s557 + $0x8] sm:$0xff] %vm635, %v4799
        %6174 = vst.msk [vmem:[%s557 + $0x10] sm:$0xff] %vm635, %v4800
        %6175 = vst.msk [vmem:[%s557 + $0x18] sm:$0xff] %vm635, %v4801
        %6176 = vst.msk [vmem:[%s557 + $0x20] sm:$0xff] %vm635, %v4802
        %6177 = vst.msk [vmem:[%s557 + $0x28] sm:$0xff] %vm635, %v4803
        %6178 = vst.msk [vmem:[%s557 + $0x30] sm:$0xff] %vm635, %v4804
        %6179 = vst.msk [vmem:[%s557 + $0x38] sm:$0xff] %vm635, %v4805
        %6180 = vst.msk [vmem:[%s557 + $0x40] sm:$0xff] %vm635, %v4806
        %6181 = vst.msk [vmem:[%s557 + $0x48] sm:$0xff] %vm635, %v4807
        %6182 = vst.msk [vmem:[%s557 + $0x50] sm:$0xff] %vm635, %v4808
        %6183 = vst.msk [vmem:[%s557 + $0x58] sm:$0xff] %vm635, %v4809
        %6184 = vst.msk [vmem:[%s557 + $0x60] sm:$0xff] %vm635, %v4810
        %6185 = vst.msk [vmem:[%s557 + $0x68] sm:$0xff] %vm635, %v4811
        %6186 = vst.msk [vmem:[%s557 + $0x70] sm:$0xff] %vm635, %v4812
        %6187 = vst.msk [vmem:[%s557 + $0x78] sm:$0xff] %vm635, %v4813
        %6188 = vst.msk [vmem:[%s564] sm:$0xff] %vm635, %v6164
        %6189 = vst.msk [vmem:[%s564 + $0x8] sm:$0xff] %vm635, %v6165
        %6190 = vst.msk [vmem:[%s564 + $0x10] sm:$0xff] %vm635, %v6166
        %6191 = vst.msk [vmem:[%s564 + $0x18] sm:$0xff] %vm635, %v6167
        %6192 = vst.msk [vmem:[%s564 + $0x20] sm:$0xff] %vm635, %v6168
        %6193 = vst.msk [vmem:[%s564 + $0x28] sm:$0xff] %vm635, %v6169
        %6194 = vst.msk [vmem:[%s564 + $0x30] sm:$0xff] %vm635, %v6170
        %6195 = vst.msk [vmem:[%s564 + $0x38] sm:$0xff] %vm635, %v6171
        %s6196 = sand.u32 %s316, 1
        %s6197 = scalar_lea.sflag [#allocation4], %s6196
        %s6198 = sand.u32 %s316, 1
        %s6199 = smul.addr %s6198, 128
        %s6200 = scalar_lea.vmem [#allocation10], %s6199
        %s6201 = sand.u32 %s342, 1
        %s6202 = scalar_lea.sflag [#allocation12], %s6201
        %s6203 = sand.u32 %s342, 1
        %s6204 = smul.addr %s6203, 64
        %s6205 = scalar_lea.vmem [#allocation11], %s6204
        // Predicated region
        $region85: #{graph_convolution.1} parent=67 // pred_check
          %p6206 = pneg %p326
        $region86: #{graph_convolution.1} parent=67 // pred_check_branch
          %6208 = sbr.rel (%p6206) target = $region88
        $region87: #{graph_convolution.1} parent=67 // pred_region
          %s6209 = smul.u32 16, %s36
          %s6211 = ssub.s32 2048, 2048
          %6212 = vsyncadd %s6197, %s6211
          %s6213 = smul.addr %s6209, 128
          %s6214 = scalar_lea.hbm %s12, %s6213
          %s6215 = sshll.u32 %s6200, 4
          %s6216 = int_to_ptr.vmem [resolvable:$true] %s6215
          %6221 = dma.vmem_to_hbm [thread:$0]  %s6216, 2048, %s6214, %s6197, 128, 128, 8
        $region88: #{graph_convolution.1} parent=67 // pred_fallthru
          _
        // Predicated region
        $region89: #{graph_convolution.1} parent=67 // pred_check
          %p6222 = pneg %p352
        $region90: #{graph_convolution.1} parent=67 // pred_check_branch
          %6224 = sbr.rel (%p6222) target = $region92
        $region91: #{graph_convolution.1} parent=67 // pred_region
          %s6225 = smul.u32 8, %s36
          %s6227 = ssub.s32 1024, 1024
          %6228 = vsyncadd %s6202, %s6227
          %s6229 = smul.addr %s6225, 128
          %s6230 = scalar_lea.hbm %s13, %s6229
          %s6231 = sshll.u32 %s6205, 4
          %s6232 = int_to_ptr.vmem [resolvable:$true] %s6231
          %6237 = dma.vmem_to_hbm [thread:$0]  %s6232, 1024, %s6230, %s6202, 128, 128, 8
        $region92: #{graph_convolution.1} parent=67 // pred_fallthru
          _
      $region68: #{graph_convolution.1} parent=5 // pred_fallthru
        _
      %p6238 = scmp.le.s32.totalorder 2, %s31
      // Predicated region
      $region93: #{graph_convolution.1} parent=5 // pred_check
        %p6239 = pneg %p6238
      $region94: #{graph_convolution.1} parent=5 // pred_check_branch
        %6241 = sbr.rel (%p6239) target = $region96
      $region95: #{graph_convolution.1} parent=5 // pred_region
        %s6242 = ssub.s32 %s31, 2
        // Predicated region
        $region97: #{graph_convolution.1} parent=95 // pred_check
          %p6243 = pneg %p332
        $region98: #{graph_convolution.1} parent=95 // pred_check_branch
          %6245 = sbr.rel (%p6243) target = $region100
        $region99: #{graph_convolution.1} parent=95 // pred_region
          %s6246 = sand.u32 %s317, 1
          %s6247 = scalar_lea.sflag [#allocation4], %s6246
          %s6248 = sand.u32 %s317, 1
          %s6249 = smul.addr %s6248, 128
          %s6250 = scalar_lea.vmem [#allocation10], %s6249
          %6251 = dma.done %s6247, 2048
        $region100: #{graph_convolution.1} parent=95 // pred_fallthru
          _
        // Predicated region
        $region101: #{graph_convolution.1} parent=95 // pred_check
          %p6252 = pneg %p358
        $region102: #{graph_convolution.1} parent=95 // pred_check_branch
          %6254 = sbr.rel (%p6252) target = $region104
        $region103: #{graph_convolution.1} parent=95 // pred_region
          %s6255 = sand.u32 %s343, 1
          %s6256 = scalar_lea.sflag [#allocation12], %s6255
          %s6257 = sand.u32 %s343, 1
          %s6258 = smul.addr %s6257, 64
          %s6259 = scalar_lea.vmem [#allocation11], %s6258
          %6260 = dma.done %s6256, 1024
        $region104: #{graph_convolution.1} parent=95 // pred_fallthru
          _
      $region96: #{graph_convolution.1} parent=5 // pred_fallthru
        _
    $region6: #{graph_convolution.1} parent=1 // loop_footer
      %s35 = sadd.s32 1, %s31
    $region7: #{graph_convolution.1} parent=1 // loop_footer_branch
      %30 = sbr.rel target = $region3
    $region8: #{graph_convolution.1} parent=1 // loop_exit
      _
    %6261 = vsyncpa [#allocation3], 1
    %s6262 = scalar_lea.sflag [#allocation3], 1
    %6263 = vsyncpa %s6262, 1
    %6264 = vsyncpa [#allocation6], 1
    %6265 = vsyncpa [#allocation9], 1
    %6266 = vsyncpa [#allocation4], 1
    %s6267 = scalar_lea.sflag [#allocation4], 1
    %6268 = vsyncpa %s6267, 1
    %6269 = vsyncpa [#allocation12], 1
    %s6270 = scalar_lea.sflag [#allocation12], 1
    %6271 = vsyncpa %s6270, 1

</llo_original>
